<compile_context>
chip_gen: v7x
topology: tpu7x:2x2x1
jax: 0.10.0
libtpu: 0.0.40
codegen_flags: <defaults>
</compile_context>

<pallas_src>
import functools

import jax
import jax.numpy as jnp
from jax.experimental import pallas as pl
from jax.experimental.pallas import tpu as pltpu


def _round_up(x, m):
    return ((x + m - 1) // m) * m


def _pick_tm(m, cap=512):
    """Row-tile size: full array when tiny; otherwise >=2 blocks (v7x megacore),
    rows a multiple of 16 (bf16 sublane packing), capped for VMEM headroom."""
    if m <= 16:
        return m                       # block == full dim -> always legal
    half = -(-m // 2)
    return min(cap, _round_up(half, 16))


# --------------------------------------------------------------------------
# Pallas kernels
# --------------------------------------------------------------------------

def _conv_bn_relu_pool_kernel(p00_ref, p01_ref, p10_ref, p11_ref,
                              w_ref, s_ref, b_ref, o_ref):
    """Fused conv-as-GEMM + folded BatchNorm (eval) + ReLU + MaxPool2d(2,2).

    p{dy}{dx}_ref : (tm, K) bf16 im2col patches of the conv position landing in
                    pool-window slot (dy, dx) of each pooled output row.
    w_ref         : (K, C) bf16 conv weight.   s_ref/b_ref: (1, C) f32 BN fold.
    o_ref         : (tm, C) bf16 pooled activation.
    """
    w = w_ref[...]
    s = s_ref[...]
    b = b_ref[...]

    def branch(p_ref):
        acc = jnp.dot(p_ref[...], w, preferred_element_type=jnp.float32)
        return jnp.maximum(acc * s + b, 0.0)

    pooled = jnp.maximum(jnp.maximum(branch(p00_ref), branch(p01_ref)),
                         jnp.maximum(branch(p10_ref), branch(p11_ref)))
    o_ref[...] = pooled.astype(o_ref.dtype)


def _gap_linear_kernel(x_ref, w_ref, b_ref, o_ref):
    """AvgPool2d(2, stride=1) over the 2x2 map + Linear(C -> 10).

    x_ref: (tn, 4*C) bf16 — the 4 pooled positions of each image, lane-dense.
    """
    x = x_ref[...].astype(jnp.float32)
    c = w_ref.shape[0]
    gap = (x[:, 0:c] + x[:, c:2 * c] + x[:, 2 * c:3 * c] + x[:, 3 * c:4 * c]) * 0.25
    o_ref[...] = jnp.dot(gap, w_ref[...],
                         preferred_element_type=jnp.float32) + b_ref[...]


# --------------------------------------------------------------------------
# Wrappers (glue is plain JAX; all heavy math runs inside the kernels above)
# --------------------------------------------------------------------------

def _pooled_im2col(x, kh, kw, stride, pad):
    """x: (N,H,W,C) -> four patch matrices, one per 2x2-maxpool offset (dy,dx).

    Patch matrix dy*2+dx has shape (N*PH*PW, kh*kw*C); its row (n,ph,pw) is the
    im2col patch of conv output position (2*ph+dy, 2*pw+dx).  Conv rows/cols the
    floor-mode maxpool would discard are never materialized.  Column order is
    (i, j, c), matching the (kh, kw, cin, cout) weight flatten.
    """
    n, h, w, c = x.shape
    xp = jnp.pad(x, ((0, 0), (pad, pad), (pad, pad), (0, 0)))
    oh = (h + 2 * pad - kh) // stride + 1
    ow = (w + 2 * pad - kw) // stride + 1
    ph, pw = oh // 2, ow // 2
    step = 2 * stride
    patches = []
    for dy in range(2):
        for dx in range(2):
            cols = []
            for i in range(kh):
                for j in range(kw):
                    r0 = dy * stride + i
                    c0 = dx * stride + j
                    cols.append(xp[:, r0:r0 + step * ph:step,
                                      c0:c0 + step * pw:step, :])
            p = jnp.concatenate(cols, axis=-1)           # (N, PH, PW, kh*kw*C)
            patches.append(p.reshape(n * ph * pw, kh * kw * c))
    return patches, ph, pw


def conv_bn_relu_pool(x, w, scale, bias, kh, kw, stride, pad):
    """One fused layer.  x: (N,H,W,Cin) bf16 -> ((N*PH*PW, Cout) bf16, PH, PW)."""
    patches, ph, pw = _pooled_im2col(x, kh, kw, stride, pad)
    m, k = patches[0].shape
    cout = w.shape[1]
    tm = _pick_tm(m)
    out = pl.pallas_call(
        _conv_bn_relu_pool_kernel,
        out_shape=jax.ShapeDtypeStruct((m, cout), jnp.bfloat16),
        grid=(pl.cdiv(m, tm),),
        in_specs=[pl.BlockSpec((tm, k), lambda i: (i, 0))] * 4 + [
            pl.BlockSpec((k, cout), lambda i: (0, 0)),
            pl.BlockSpec((1, cout), lambda i: (0, 0)),
            pl.BlockSpec((1, cout), lambda i: (0, 0)),
        ],
        out_specs=pl.BlockSpec((tm, cout), lambda i: (i, 0)),
        compiler_params=pltpu.CompilerParams(dimension_semantics=("parallel",)),
    )(*patches,
      w.astype(jnp.bfloat16),
      scale.reshape(1, cout).astype(jnp.float32),
      bias.reshape(1, cout).astype(jnp.float32))
    return out, ph, pw


def gap_linear(pooled3, w_lin, b_lin, n):
    """pooled3: (N*2*2, 128) bf16, rows ordered (n, ph, pw) -> logits (N, 10)."""
    c, cout = w_lin.shape
    x = pooled3.reshape(n, 4 * c)                        # free, contiguous reshape
    tn = n if n <= 256 else 256
    return pl.pallas_call(
        _gap_linear_kernel,
        out_shape=jax.ShapeDtypeStruct((n, cout), jnp.float32),
        grid=(pl.cdiv(n, tn),),
        in_specs=[pl.BlockSpec((tn, 4 * c), lambda i: (i, 0)),
                  pl.BlockSpec((c, cout), lambda i: (0, 0)),
                  pl.BlockSpec((1, cout), lambda i: (0, 0))],
        out_specs=pl.BlockSpec((tn, cout), lambda i: (i, 0)),
        compiler_params=pltpu.CompilerParams(dimension_semantics=("parallel",)),
    )(x, w_lin.astype(jnp.float32), b_lin.reshape(1, cout).astype(jnp.float32))


# --------------------------------------------------------------------------
# Parameters (BN in eval mode: running stats + conv bias folded to scale/bias)
# --------------------------------------------------------------------------

def _conv_weight(key, cout, cin, kh, kw):
    bound = 1.0 / jnp.sqrt(jnp.float32(cin * kh * kw))
    w = jax.random.uniform(key, (cout, cin, kh, kw), minval=-bound, maxval=bound,
                           dtype=jnp.float32)
    # reorder to (kh, kw, cin, cout) and flatten -> matches im2col column order
    return jnp.transpose(w, (2, 3, 1, 0)).reshape(kh * kw * cin, cout)


def _bn_params(key, c):
    k1, k2, k3, k4 = jax.random.split(key, 4)
    gamma = 1.0 + 0.1 * jax.random.normal(k1, (c,), dtype=jnp.float32)
    beta = 0.1 * jax.random.normal(k2, (c,), dtype=jnp.float32)
    running_mean = 0.05 * jax.random.normal(k3, (c,), dtype=jnp.float32)
    running_var = 1.0 + 0.1 * jax.random.uniform(k4, (c,), dtype=jnp.float32)
    return gamma, beta, running_mean, running_var


def _fold_bn(conv_bias, gamma, beta, rm, rv, eps=1e-5):
    # y = ((conv + b) - rm) / sqrt(rv+eps) * gamma + beta == conv*scale + eff_bias
    scale = gamma / jnp.sqrt(rv + eps)
    eff_bias = (conv_bias - rm) * scale + beta
    return scale, eff_bias


def init_params(key):
    ks = jax.random.split(key, 10)
    params = {}

    w1 = _conv_weight(ks[0], 32, 3, 5, 5)
    cb1 = 0.01 * jax.random.normal(ks[1], (32,), dtype=jnp.float32)
    s1, b1 = _fold_bn(cb1, *_bn_params(ks[2], 32))
    params.update(w1=w1, s1=s1, b1=b1)

    w2 = _conv_weight(ks[3], 64, 32, 5, 5)
    cb2 = 0.01 * jax.random.normal(ks[4], (64,), dtype=jnp.float32)
    s2, b2 = _fold_bn(cb2, *_bn_params(ks[5], 64))
    params.update(w2=w2, s2=s2, b2=b2)

    w3 = _conv_weight(ks[6], 128, 64, 3, 3)
    cb3 = 0.01 * jax.random.normal(ks[7], (128,), dtype=jnp.float32)
    s3, b3 = _fold_bn(cb3, *_bn_params(ks[8], 128))
    params.update(w3=w3, s3=s3, b3=b3)

    klw, klb = jax.random.split(ks[9])
    bound = 1.0 / jnp.sqrt(jnp.float32(128))
    params["w_lin"] = jax.random.uniform(klw, (128, 10), minval=-bound, maxval=bound,
                                         dtype=jnp.float32)
    params["b_lin"] = jax.random.uniform(klb, (10,), minval=-bound, maxval=bound,
                                         dtype=jnp.float32)
    return params


# --------------------------------------------------------------------------
# Forward pass (mirrors PyTorch forward; softmax is unused there too)
# --------------------------------------------------------------------------

def net3layers_forward(x_nchw, params):
    n = x_nchw.shape[0]
    x = jnp.transpose(x_nchw, (0, 2, 3, 1)).astype(jnp.bfloat16)   # NCHW -> NHWC

    # layer1: Conv(3->32, k5, s1, p1)+BN+ReLU, MaxPool 2x2   -> (N, 15, 15, 32)
    y, ph, pw = conv_bn_relu_pool(x, params["w1"], params["s1"], params["b1"], 5, 5, 1, 1)
    x = y.reshape(n, ph, pw, 32)

    # layer2: Conv(32->64, k5, s1, p1)+BN+ReLU, MaxPool 2x2  -> (N, 6, 6, 64)
    y, ph, pw = conv_bn_relu_pool(x, params["w2"], params["s2"], params["b2"], 5, 5, 1, 1)
    x = y.reshape(n, ph, pw, 64)

    # layer3: Conv(64->128, k3, s2, p2)+BN+ReLU, MaxPool 2x2 -> (N*2*2, 128)
    y, _, _ = conv_bn_relu_pool(x, params["w3"], params["s3"], params["b3"], 3, 3, 2, 2)

    # AvgPool(2, stride=1) -> view(-1, 128) -> Linear(128, 10), fused
    return gap_linear(y, params["w_lin"], params["b_lin"], n)       # (N, 10) f32


if __name__ == "__main__":
    key = jax.random.PRNGKey(0)
    kx, kp = jax.random.split(key)

    N = 2
    x = jax.random.normal(kx, (N, 3, 32, 32), dtype=jnp.float32)   # NCHW, like PyTorch
    params = init_params(kp)

    fwd = jax.jit(functools.partial(net3layers_forward, params=params))
    out = fwd(x)
    jax.block_until_ready(out)

    assert out.shape == (N, 10), out.shape
    assert out.dtype == jnp.float32
    assert bool(jnp.all(jnp.isfinite(out)))
    print("KERNEL_OK")
</pallas_src>

<mosaic_0001>
module attributes {stable_mosaic.version = 11 : i64} {
  func.func @_conv_bn_relu_pool_kernel(%arg0: i32, %arg1: memref<240x75xbf16, #tpu.memory_space<vmem>>, %arg2: memref<240x75xbf16, #tpu.memory_space<vmem>>, %arg3: memref<240x75xbf16, #tpu.memory_space<vmem>>, %arg4: memref<240x75xbf16, #tpu.memory_space<vmem>>, %arg5: memref<75x32xbf16, #tpu.memory_space<vmem>>, %arg6: memref<1x32xf32, #tpu.memory_space<vmem>>, %arg7: memref<1x32xf32, #tpu.memory_space<vmem>>, %arg8: memref<240x32xbf16, #tpu.memory_space<vmem>>) attributes {dimension_semantics = [#tpu.dimension_semantics<parallel>], iteration_bounds = array<i64: 2>, scalar_prefetch = 0 : i64, scratch_operands = 0 : i64, tpu.core_type = #tpu.core_type<tc>, window_params = [{transform_indices = @transform_0, window_bounds = array<i64: 240, 75>}, {transform_indices = @transform_1, window_bounds = array<i64: 240, 75>}, {transform_indices = @transform_2, window_bounds = array<i64: 240, 75>}, {transform_indices = @transform_3, window_bounds = array<i64: 240, 75>}, {pipeline_mode = #tpu.pipeline_mode<synchronous>, transform_indices = @transform_4, window_bounds = array<i64: 75, 32>}, {pipeline_mode = #tpu.pipeline_mode<synchronous>, transform_indices = @transform_5, window_bounds = array<i64: 1, 32>}, {pipeline_mode = #tpu.pipeline_mode<synchronous>, transform_indices = @transform_6, window_bounds = array<i64: 1, 32>}, {transform_indices = @transform_7, window_bounds = array<i64: 240, 32>}]} {
    %c0 = arith.constant 0 : index
    %c0_0 = arith.constant 0 : index
    %0 = vector.load %arg5[%c0, %c0_0] : memref<75x32xbf16, #tpu.memory_space<vmem>>, vector<75x32xbf16>
    %c0_1 = arith.constant 0 : index
    %c0_2 = arith.constant 0 : index
    %1 = vector.load %arg6[%c0_1, %c0_2] : memref<1x32xf32, #tpu.memory_space<vmem>>, vector<1x32xf32>
    %c0_3 = arith.constant 0 : index
    %c0_4 = arith.constant 0 : index
    %2 = vector.load %arg7[%c0_3, %c0_4] : memref<1x32xf32, #tpu.memory_space<vmem>>, vector<1x32xf32>
    %c0_5 = arith.constant 0 : index
    %c0_6 = arith.constant 0 : index
    %3 = vector.load %arg1[%c0_5, %c0_6] : memref<240x75xbf16, #tpu.memory_space<vmem>>, vector<240x75xbf16>
    %cst = arith.constant dense<0.000000e+00> : vector<240x32xf32>
    %4 = tpu.matmul %3, %0, %cst {dimension_numbers = #tpu.dot_dimension_numbers<[1], [0], [0], [1], [0, 0, 1, 1], [], []>} : vector<240x75xbf16>, vector<75x32xbf16>, vector<240x32xf32> -> vector<240x32xf32>
    %5 = vector.broadcast %1 : vector<1x32xf32> to vector<240x32xf32>
    %6 = arith.mulf %4, %5 : vector<240x32xf32>
    %7 = vector.broadcast %2 : vector<1x32xf32> to vector<240x32xf32>
    %8 = arith.addf %6, %7 : vector<240x32xf32>
    %cst_7 = arith.constant 0.000000e+00 : f32
    %9 = vector.broadcast %cst_7 : f32 to vector<240x32xf32>
    %10 = arith.maximumf %8, %9 : vector<240x32xf32>
    %c0_8 = arith.constant 0 : index
    %c0_9 = arith.constant 0 : index
    %11 = vector.load %arg2[%c0_8, %c0_9] : memref<240x75xbf16, #tpu.memory_space<vmem>>, vector<240x75xbf16>
    %cst_10 = arith.constant dense<0.000000e+00> : vector<240x32xf32>
    %12 = tpu.matmul %11, %0, %cst_10 {dimension_numbers = #tpu.dot_dimension_numbers<[1], [0], [0], [1], [0, 0, 1, 1], [], []>} : vector<240x75xbf16>, vector<75x32xbf16>, vector<240x32xf32> -> vector<240x32xf32>
    %13 = vector.broadcast %1 : vector<1x32xf32> to vector<240x32xf32>
    %14 = arith.mulf %12, %13 : vector<240x32xf32>
    %15 = vector.broadcast %2 : vector<1x32xf32> to vector<240x32xf32>
    %16 = arith.addf %14, %15 : vector<240x32xf32>
    %cst_11 = arith.constant 0.000000e+00 : f32
    %17 = vector.broadcast %cst_11 : f32 to vector<240x32xf32>
    %18 = arith.maximumf %16, %17 : vector<240x32xf32>
    %19 = arith.maximumf %10, %18 : vector<240x32xf32>
    %c0_12 = arith.constant 0 : index
    %c0_13 = arith.constant 0 : index
    %20 = vector.load %arg3[%c0_12, %c0_13] : memref<240x75xbf16, #tpu.memory_space<vmem>>, vector<240x75xbf16>
    %cst_14 = arith.constant dense<0.000000e+00> : vector<240x32xf32>
    %21 = tpu.matmul %20, %0, %cst_14 {dimension_numbers = #tpu.dot_dimension_numbers<[1], [0], [0], [1], [0, 0, 1, 1], [], []>} : vector<240x75xbf16>, vector<75x32xbf16>, vector<240x32xf32> -> vector<240x32xf32>
    %22 = vector.broadcast %1 : vector<1x32xf32> to vector<240x32xf32>
    %23 = arith.mulf %21, %22 : vector<240x32xf32>
    %24 = vector.broadcast %2 : vector<1x32xf32> to vector<240x32xf32>
    %25 = arith.addf %23, %24 : vector<240x32xf32>
    %cst_15 = arith.constant 0.000000e+00 : f32
    %26 = vector.broadcast %cst_15 : f32 to vector<240x32xf32>
    %27 = arith.maximumf %25, %26 : vector<240x32xf32>
    %c0_16 = arith.constant 0 : index
    %c0_17 = arith.constant 0 : index
    %28 = vector.load %arg4[%c0_16, %c0_17] : memref<240x75xbf16, #tpu.memory_space<vmem>>, vector<240x75xbf16>
    %cst_18 = arith.constant dense<0.000000e+00> : vector<240x32xf32>
    %29 = tpu.matmul %28, %0, %cst_18 {dimension_numbers = #tpu.dot_dimension_numbers<[1], [0], [0], [1], [0, 0, 1, 1], [], []>} : vector<240x75xbf16>, vector<75x32xbf16>, vector<240x32xf32> -> vector<240x32xf32>
    %30 = vector.broadcast %1 : vector<1x32xf32> to vector<240x32xf32>
    %31 = arith.mulf %29, %30 : vector<240x32xf32>
    %32 = vector.broadcast %2 : vector<1x32xf32> to vector<240x32xf32>
    %33 = arith.addf %31, %32 : vector<240x32xf32>
    %cst_19 = arith.constant 0.000000e+00 : f32
    %34 = vector.broadcast %cst_19 : f32 to vector<240x32xf32>
    %35 = arith.maximumf %33, %34 : vector<240x32xf32>
    %36 = arith.maximumf %27, %35 : vector<240x32xf32>
    %37 = arith.maximumf %19, %36 : vector<240x32xf32>
    %38 = arith.truncf %37 : vector<240x32xf32> to vector<240x32xbf16>
    %c0_20 = arith.constant 0 : index
    %c0_21 = arith.constant 0 : index
    %39 = vector.load %arg8[%c0_20, %c0_21] : memref<240x32xbf16, #tpu.memory_space<vmem>>, vector<240x32xbf16>
    tpu.vector_store %arg8[%c0_20, %c0_21], %38 {strides = array<i32>} : memref<240x32xbf16, #tpu.memory_space<vmem>>, vector<240x32xbf16>,
    return
  }
  func.func @transform_0(%arg0: i32) -> (i32, i32) {
    %c0_i32 = arith.constant 0 : i32
    %c0_i32_0 = arith.constant 0 : i32
    return %arg0, %c0_i32 : i32, i32
  }
  func.func @transform_1(%arg0: i32) -> (i32, i32) {
    %c0_i32 = arith.constant 0 : i32
    %c0_i32_0 = arith.constant 0 : i32
    return %arg0, %c0_i32 : i32, i32
  }
  func.func @transform_2(%arg0: i32) -> (i32, i32) {
    %c0_i32 = arith.constant 0 : i32
    %c0_i32_0 = arith.constant 0 : i32
    return %arg0, %c0_i32 : i32, i32
  }
  func.func @transform_3(%arg0: i32) -> (i32, i32) {
    %c0_i32 = arith.constant 0 : i32
    %c0_i32_0 = arith.constant 0 : i32
    return %arg0, %c0_i32 : i32, i32
  }
  func.func @transform_4(%arg0: i32) -> (i32, i32) {
    %c0_i32 = arith.constant 0 : i32
    %c0_i32_0 = arith.constant 0 : i32
    %c0_i32_1 = arith.constant 0 : i32
    return %c0_i32, %c0_i32_0 : i32, i32
  }
  func.func @transform_5(%arg0: i32) -> (i32, i32) {
    %c0_i32 = arith.constant 0 : i32
    %c0_i32_0 = arith.constant 0 : i32
    %c0_i32_1 = arith.constant 0 : i32
    return %c0_i32, %c0_i32_0 : i32, i32
  }
  func.func @transform_6(%arg0: i32) -> (i32, i32) {
    %c0_i32 = arith.constant 0 : i32
    %c0_i32_0 = arith.constant 0 : i32
    %c0_i32_1 = arith.constant 0 : i32
    return %c0_i32, %c0_i32_0 : i32, i32
  }
  func.func @transform_7(%arg0: i32) -> (i32, i32) {
    %c0_i32 = arith.constant 0 : i32
    %c0_i32_0 = arith.constant 0 : i32
    return %arg0, %c0_i32 : i32, i32
  }
}

module attributes {stable_mosaic.version = 11 : i64} {
  func.func @_conv_bn_relu_pool_kernel(%arg0: i32, %arg1: memref<48x800xbf16, #tpu.memory_space<vmem>>, %arg2: memref<48x800xbf16, #tpu.memory_space<vmem>>, %arg3: memref<48x800xbf16, #tpu.memory_space<vmem>>, %arg4: memref<48x800xbf16, #tpu.memory_space<vmem>>, %arg5: memref<800x64xbf16, #tpu.memory_space<vmem>>, %arg6: memref<1x64xf32, #tpu.memory_space<vmem>>, %arg7: memref<1x64xf32, #tpu.memory_space<vmem>>, %arg8: memref<48x64xbf16, #tpu.memory_space<vmem>>) attributes {dimension_semantics = [#tpu.dimension_semantics<parallel>], iteration_bounds = array<i64: 2>, scalar_prefetch = 0 : i64, scratch_operands = 0 : i64, tpu.core_type = #tpu.core_type<tc>, window_params = [{transform_indices = @transform_0, window_bounds = array<i64: 48, 800>}, {transform_indices = @transform_1, window_bounds = array<i64: 48, 800>}, {transform_indices = @transform_2, window_bounds = array<i64: 48, 800>}, {transform_indices = @transform_3, window_bounds = array<i64: 48, 800>}, {pipeline_mode = #tpu.pipeline_mode<synchronous>, transform_indices = @transform_4, window_bounds = array<i64: 800, 64>}, {pipeline_mode = #tpu.pipeline_mode<synchronous>, transform_indices = @transform_5, window_bounds = array<i64: 1, 64>}, {pipeline_mode = #tpu.pipeline_mode<synchronous>, transform_indices = @transform_6, window_bounds = array<i64: 1, 64>}, {transform_indices = @transform_7, window_bounds = array<i64: 48, 64>}]} {
    %c0 = arith.constant 0 : index
    %c0_0 = arith.constant 0 : index
    %0 = vector.load %arg5[%c0, %c0_0] : memref<800x64xbf16, #tpu.memory_space<vmem>>, vector<800x64xbf16>
    %c0_1 = arith.constant 0 : index
    %c0_2 = arith.constant 0 : index
    %1 = vector.load %arg6[%c0_1, %c0_2] : memref<1x64xf32, #tpu.memory_space<vmem>>, vector<1x64xf32>
    %c0_3 = arith.constant 0 : index
    %c0_4 = arith.constant 0 : index
    %2 = vector.load %arg7[%c0_3, %c0_4] : memref<1x64xf32, #tpu.memory_space<vmem>>, vector<1x64xf32>
    %c0_5 = arith.constant 0 : index
    %c0_6 = arith.constant 0 : index
    %3 = vector.load %arg1[%c0_5, %c0_6] : memref<48x800xbf16, #tpu.memory_space<vmem>>, vector<48x800xbf16>
    %cst = arith.constant dense<0.000000e+00> : vector<48x64xf32>
    %4 = tpu.matmul %3, %0, %cst {dimension_numbers = #tpu.dot_dimension_numbers<[1], [0], [0], [1], [0, 0, 1, 1], [], []>} : vector<48x800xbf16>, vector<800x64xbf16>, vector<48x64xf32> -> vector<48x64xf32>
    %5 = vector.broadcast %1 : vector<1x64xf32> to vector<48x64xf32>
    %6 = arith.mulf %4, %5 : vector<48x64xf32>
    %7 = vector.broadcast %2 : vector<1x64xf32> to vector<48x64xf32>
    %8 = arith.addf %6, %7 : vector<48x64xf32>
    %cst_7 = arith.constant 0.000000e+00 : f32
    %9 = vector.broadcast %cst_7 : f32 to vector<48x64xf32>
    %10 = arith.maximumf %8, %9 : vector<48x64xf32>
    %c0_8 = arith.constant 0 : index
    %c0_9 = arith.constant 0 : index
    %11 = vector.load %arg2[%c0_8, %c0_9] : memref<48x800xbf16, #tpu.memory_space<vmem>>, vector<48x800xbf16>
    %cst_10 = arith.constant dense<0.000000e+00> : vector<48x64xf32>
    %12 = tpu.matmul %11, %0, %cst_10 {dimension_numbers = #tpu.dot_dimension_numbers<[1], [0], [0], [1], [0, 0, 1, 1], [], []>} : vector<48x800xbf16>, vector<800x64xbf16>, vector<48x64xf32> -> vector<48x64xf32>
    %13 = vector.broadcast %1 : vector<1x64xf32> to vector<48x64xf32>
    %14 = arith.mulf %12, %13 : vector<48x64xf32>
    %15 = vector.broadcast %2 : vector<1x64xf32> to vector<48x64xf32>
    %16 = arith.addf %14, %15 : vector<48x64xf32>
    %cst_11 = arith.constant 0.000000e+00 : f32
    %17 = vector.broadcast %cst_11 : f32 to vector<48x64xf32>
    %18 = arith.maximumf %16, %17 : vector<48x64xf32>
    %19 = arith.maximumf %10, %18 : vector<48x64xf32>
    %c0_12 = arith.constant 0 : index
    %c0_13 = arith.constant 0 : index
    %20 = vector.load %arg3[%c0_12, %c0_13] : memref<48x800xbf16, #tpu.memory_space<vmem>>, vector<48x800xbf16>
    %cst_14 = arith.constant dense<0.000000e+00> : vector<48x64xf32>
    %21 = tpu.matmul %20, %0, %cst_14 {dimension_numbers = #tpu.dot_dimension_numbers<[1], [0], [0], [1], [0, 0, 1, 1], [], []>} : vector<48x800xbf16>, vector<800x64xbf16>, vector<48x64xf32> -> vector<48x64xf32>
    %22 = vector.broadcast %1 : vector<1x64xf32> to vector<48x64xf32>
    %23 = arith.mulf %21, %22 : vector<48x64xf32>
    %24 = vector.broadcast %2 : vector<1x64xf32> to vector<48x64xf32>
    %25 = arith.addf %23, %24 : vector<48x64xf32>
    %cst_15 = arith.constant 0.000000e+00 : f32
    %26 = vector.broadcast %cst_15 : f32 to vector<48x64xf32>
    %27 = arith.maximumf %25, %26 : vector<48x64xf32>
    %c0_16 = arith.constant 0 : index
    %c0_17 = arith.constant 0 : index
    %28 = vector.load %arg4[%c0_16, %c0_17] : memref<48x800xbf16, #tpu.memory_space<vmem>>, vector<48x800xbf16>
    %cst_18 = arith.constant dense<0.000000e+00> : vector<48x64xf32>
    %29 = tpu.matmul %28, %0, %cst_18 {dimension_numbers = #tpu.dot_dimension_numbers<[1], [0], [0], [1], [0, 0, 1, 1], [], []>} : vector<48x800xbf16>, vector<800x64xbf16>, vector<48x64xf32> -> vector<48x64xf32>
    %30 = vector.broadcast %1 : vector<1x64xf32> to vector<48x64xf32>
    %31 = arith.mulf %29, %30 : vector<48x64xf32>
    %32 = vector.broadcast %2 : vector<1x64xf32> to vector<48x64xf32>
    %33 = arith.addf %31, %32 : vector<48x64xf32>
    %cst_19 = arith.constant 0.000000e+00 : f32
    %34 = vector.broadcast %cst_19 : f32 to vector<48x64xf32>
    %35 = arith.maximumf %33, %34 : vector<48x64xf32>
    %36 = arith.maximumf %27, %35 : vector<48x64xf32>
    %37 = arith.maximumf %19, %36 : vector<48x64xf32>
    %38 = arith.truncf %37 : vector<48x64xf32> to vector<48x64xbf16>
    %c0_20 = arith.constant 0 : index
    %c0_21 = arith.constant 0 : index
    %39 = vector.load %arg8[%c0_20, %c0_21] : memref<48x64xbf16, #tpu.memory_space<vmem>>, vector<48x64xbf16>
    tpu.vector_store %arg8[%c0_20, %c0_21], %38 {strides = array<i32>} : memref<48x64xbf16, #tpu.memory_space<vmem>>, vector<48x64xbf16>,
    return
  }
  func.func @transform_0(%arg0: i32) -> (i32, i32) {
    %c0_i32 = arith.constant 0 : i32
    %c0_i32_0 = arith.constant 0 : i32
    return %arg0, %c0_i32 : i32, i32
  }
  func.func @transform_1(%arg0: i32) -> (i32, i32) {
    %c0_i32 = arith.constant 0 : i32
    %c0_i32_0 = arith.constant 0 : i32
    return %arg0, %c0_i32 : i32, i32
  }
  func.func @transform_2(%arg0: i32) -> (i32, i32) {
    %c0_i32 = arith.constant 0 : i32
    %c0_i32_0 = arith.constant 0 : i32
    return %arg0, %c0_i32 : i32, i32
  }
  func.func @transform_3(%arg0: i32) -> (i32, i32) {
    %c0_i32 = arith.constant 0 : i32
    %c0_i32_0 = arith.constant 0 : i32
    return %arg0, %c0_i32 : i32, i32
  }
  func.func @transform_4(%arg0: i32) -> (i32, i32) {
    %c0_i32 = arith.constant 0 : i32
    %c0_i32_0 = arith.constant 0 : i32
    %c0_i32_1 = arith.constant 0 : i32
    return %c0_i32, %c0_i32_0 : i32, i32
  }
  func.func @transform_5(%arg0: i32) -> (i32, i32) {
    %c0_i32 = arith.constant 0 : i32
    %c0_i32_0 = arith.constant 0 : i32
    %c0_i32_1 = arith.constant 0 : i32
    return %c0_i32, %c0_i32_0 : i32, i32
  }
  func.func @transform_6(%arg0: i32) -> (i32, i32) {
    %c0_i32 = arith.constant 0 : i32
    %c0_i32_0 = arith.constant 0 : i32
    %c0_i32_1 = arith.constant 0 : i32
    return %c0_i32, %c0_i32_0 : i32, i32
  }
  func.func @transform_7(%arg0: i32) -> (i32, i32) {
    %c0_i32 = arith.constant 0 : i32
    %c0_i32_0 = arith.constant 0 : i32
    return %arg0, %c0_i32 : i32, i32
  }
}

module attributes {stable_mosaic.version = 11 : i64} {
  func.func @_conv_bn_relu_pool_kernel(%arg0: i32, %arg1: memref<8x576xbf16, #tpu.memory_space<vmem>>, %arg2: memref<8x576xbf16, #tpu.memory_space<vmem>>, %arg3: memref<8x576xbf16, #tpu.memory_space<vmem>>, %arg4: memref<8x576xbf16, #tpu.memory_space<vmem>>, %arg5: memref<576x128xbf16, #tpu.memory_space<vmem>>, %arg6: memref<1x128xf32, #tpu.memory_space<vmem>>, %arg7: memref<1x128xf32, #tpu.memory_space<vmem>>, %arg8: memref<8x128xbf16, #tpu.memory_space<vmem>>) attributes {dimension_semantics = [#tpu.dimension_semantics<parallel>], iteration_bounds = array<i64: 1>, scalar_prefetch = 0 : i64, scratch_operands = 0 : i64, tpu.core_type = #tpu.core_type<tc>, window_params = [{transform_indices = @transform_0, window_bounds = array<i64: 8, 576>}, {transform_indices = @transform_1, window_bounds = array<i64: 8, 576>}, {transform_indices = @transform_2, window_bounds = array<i64: 8, 576>}, {transform_indices = @transform_3, window_bounds = array<i64: 8, 576>}, {pipeline_mode = #tpu.pipeline_mode<synchronous>, transform_indices = @transform_4, window_bounds = array<i64: 576, 128>}, {pipeline_mode = #tpu.pipeline_mode<synchronous>, transform_indices = @transform_5, window_bounds = array<i64: 1, 128>}, {pipeline_mode = #tpu.pipeline_mode<synchronous>, transform_indices = @transform_6, window_bounds = array<i64: 1, 128>}, {transform_indices = @transform_7, window_bounds = array<i64: 8, 128>}]} {
    %c0 = arith.constant 0 : index
    %c0_0 = arith.constant 0 : index
    %0 = vector.load %arg5[%c0, %c0_0] : memref<576x128xbf16, #tpu.memory_space<vmem>>, vector<576x128xbf16>
    %c0_1 = arith.constant 0 : index
    %c0_2 = arith.constant 0 : index
    %1 = vector.load %arg6[%c0_1, %c0_2] : memref<1x128xf32, #tpu.memory_space<vmem>>, vector<1x128xf32>
    %c0_3 = arith.constant 0 : index
    %c0_4 = arith.constant 0 : index
    %2 = vector.load %arg7[%c0_3, %c0_4] : memref<1x128xf32, #tpu.memory_space<vmem>>, vector<1x128xf32>
    %c0_5 = arith.constant 0 : index
    %c0_6 = arith.constant 0 : index
    %3 = vector.load %arg1[%c0_5, %c0_6] : memref<8x576xbf16, #tpu.memory_space<vmem>>, vector<8x576xbf16>
    %cst = arith.constant dense<0.000000e+00> : vector<8x128xf32>
    %4 = tpu.matmul %3, %0, %cst {dimension_numbers = #tpu.dot_dimension_numbers<[1], [0], [0], [1], [0, 0, 1, 1], [], []>} : vector<8x576xbf16>, vector<576x128xbf16>, vector<8x128xf32> -> vector<8x128xf32>
    %5 = vector.broadcast %1 : vector<1x128xf32> to vector<8x128xf32>
    %6 = arith.mulf %4, %5 : vector<8x128xf32>
    %7 = vector.broadcast %2 : vector<1x128xf32> to vector<8x128xf32>
    %8 = arith.addf %6, %7 : vector<8x128xf32>
    %cst_7 = arith.constant 0.000000e+00 : f32
    %9 = vector.broadcast %cst_7 : f32 to vector<8x128xf32>
    %10 = arith.maximumf %8, %9 : vector<8x128xf32>
    %c0_8 = arith.constant 0 : index
    %c0_9 = arith.constant 0 : index
    %11 = vector.load %arg2[%c0_8, %c0_9] : memref<8x576xbf16, #tpu.memory_space<vmem>>, vector<8x576xbf16>
    %cst_10 = arith.constant dense<0.000000e+00> : vector<8x128xf32>
    %12 = tpu.matmul %11, %0, %cst_10 {dimension_numbers = #tpu.dot_dimension_numbers<[1], [0], [0], [1], [0, 0, 1, 1], [], []>} : vector<8x576xbf16>, vector<576x128xbf16>, vector<8x128xf32> -> vector<8x128xf32>
    %13 = vector.broadcast %1 : vector<1x128xf32> to vector<8x128xf32>
    %14 = arith.mulf %12, %13 : vector<8x128xf32>
    %15 = vector.broadcast %2 : vector<1x128xf32> to vector<8x128xf32>
    %16 = arith.addf %14, %15 : vector<8x128xf32>
    %cst_11 = arith.constant 0.000000e+00 : f32
    %17 = vector.broadcast %cst_11 : f32 to vector<8x128xf32>
    %18 = arith.maximumf %16, %17 : vector<8x128xf32>
    %19 = arith.maximumf %10, %18 : vector<8x128xf32>
    %c0_12 = arith.constant 0 : index
    %c0_13 = arith.constant 0 : index
    %20 = vector.load %arg3[%c0_12, %c0_13] : memref<8x576xbf16, #tpu.memory_space<vmem>>, vector<8x576xbf16>
    %cst_14 = arith.constant dense<0.000000e+00> : vector<8x128xf32>
    %21 = tpu.matmul %20, %0, %cst_14 {dimension_numbers = #tpu.dot_dimension_numbers<[1], [0], [0], [1], [0, 0, 1, 1], [], []>} : vector<8x576xbf16>, vector<576x128xbf16>, vector<8x128xf32> -> vector<8x128xf32>
    %22 = vector.broadcast %1 : vector<1x128xf32> to vector<8x128xf32>
    %23 = arith.mulf %21, %22 : vector<8x128xf32>
    %24 = vector.broadcast %2 : vector<1x128xf32> to vector<8x128xf32>
    %25 = arith.addf %23, %24 : vector<8x128xf32>
    %cst_15 = arith.constant 0.000000e+00 : f32
    %26 = vector.broadcast %cst_15 : f32 to vector<8x128xf32>
    %27 = arith.maximumf %25, %26 : vector<8x128xf32>
    %c0_16 = arith.constant 0 : index
    %c0_17 = arith.constant 0 : index
    %28 = vector.load %arg4[%c0_16, %c0_17] : memref<8x576xbf16, #tpu.memory_space<vmem>>, vector<8x576xbf16>
    %cst_18 = arith.constant dense<0.000000e+00> : vector<8x128xf32>
    %29 = tpu.matmul %28, %0, %cst_18 {dimension_numbers = #tpu.dot_dimension_numbers<[1], [0], [0], [1], [0, 0, 1, 1], [], []>} : vector<8x576xbf16>, vector<576x128xbf16>, vector<8x128xf32> -> vector<8x128xf32>
    %30 = vector.broadcast %1 : vector<1x128xf32> to vector<8x128xf32>
    %31 = arith.mulf %29, %30 : vector<8x128xf32>
    %32 = vector.broadcast %2 : vector<1x128xf32> to vector<8x128xf32>
    %33 = arith.addf %31, %32 : vector<8x128xf32>
    %cst_19 = arith.constant 0.000000e+00 : f32
    %34 = vector.broadcast %cst_19 : f32 to vector<8x128xf32>
    %35 = arith.maximumf %33, %34 : vector<8x128xf32>
    %36 = arith.maximumf %27, %35 : vector<8x128xf32>
    %37 = arith.maximumf %19, %36 : vector<8x128xf32>
    %38 = arith.truncf %37 : vector<8x128xf32> to vector<8x128xbf16>
    %c0_20 = arith.constant 0 : index
    %c0_21 = arith.constant 0 : index
    %39 = vector.load %arg8[%c0_20, %c0_21] : memref<8x128xbf16, #tpu.memory_space<vmem>>, vector<8x128xbf16>
    tpu.vector_store %arg8[%c0_20, %c0_21], %38 {strides = array<i32>} : memref<8x128xbf16, #tpu.memory_space<vmem>>, vector<8x128xbf16>,
    return
  }
  func.func @transform_0(%arg0: i32) -> (i32, i32) {
    %c0_i32 = arith.constant 0 : i32
    %c0_i32_0 = arith.constant 0 : i32
    return %arg0, %c0_i32 : i32, i32
  }
  func.func @transform_1(%arg0: i32) -> (i32, i32) {
    %c0_i32 = arith.constant 0 : i32
    %c0_i32_0 = arith.constant 0 : i32
    return %arg0, %c0_i32 : i32, i32
  }
  func.func @transform_2(%arg0: i32) -> (i32, i32) {
    %c0_i32 = arith.constant 0 : i32
    %c0_i32_0 = arith.constant 0 : i32
    return %arg0, %c0_i32 : i32, i32
  }
  func.func @transform_3(%arg0: i32) -> (i32, i32) {
    %c0_i32 = arith.constant 0 : i32
    %c0_i32_0 = arith.constant 0 : i32
    return %arg0, %c0_i32 : i32, i32
  }
  func.func @transform_4(%arg0: i32) -> (i32, i32) {
    %c0_i32 = arith.constant 0 : i32
    %c0_i32_0 = arith.constant 0 : i32
    %c0_i32_1 = arith.constant 0 : i32
    return %c0_i32, %c0_i32_0 : i32, i32
  }
  func.func @transform_5(%arg0: i32) -> (i32, i32) {
    %c0_i32 = arith.constant 0 : i32
    %c0_i32_0 = arith.constant 0 : i32
    %c0_i32_1 = arith.constant 0 : i32
    return %c0_i32, %c0_i32_0 : i32, i32
  }
  func.func @transform_6(%arg0: i32) -> (i32, i32) {
    %c0_i32 = arith.constant 0 : i32
    %c0_i32_0 = arith.constant 0 : i32
    %c0_i32_1 = arith.constant 0 : i32
    return %c0_i32, %c0_i32_0 : i32, i32
  }
  func.func @transform_7(%arg0: i32) -> (i32, i32) {
    %c0_i32 = arith.constant 0 : i32
    %c0_i32_0 = arith.constant 0 : i32
    return %arg0, %c0_i32 : i32, i32
  }
}

module attributes {stable_mosaic.version = 11 : i64} {
  func.func @_gap_linear_kernel(%arg0: i32, %arg1: memref<2x512xbf16, #tpu.memory_space<vmem>>, %arg2: memref<128x10xf32, #tpu.memory_space<vmem>>, %arg3: memref<1x10xf32, #tpu.memory_space<vmem>>, %arg4: memref<2x10xf32, #tpu.memory_space<vmem>>) attributes {dimension_semantics = [#tpu.dimension_semantics<parallel>], iteration_bounds = array<i64: 1>, scalar_prefetch = 0 : i64, scratch_operands = 0 : i64, tpu.core_type = #tpu.core_type<tc>, window_params = [{transform_indices = @transform_0, window_bounds = array<i64: 2, 512>}, {pipeline_mode = #tpu.pipeline_mode<synchronous>, transform_indices = @transform_1, window_bounds = array<i64: 128, 10>}, {pipeline_mode = #tpu.pipeline_mode<synchronous>, transform_indices = @transform_2, window_bounds = array<i64: 1, 10>}, {transform_indices = @transform_3, window_bounds = array<i64: 2, 10>}]} {
    %c0 = arith.constant 0 : index
    %c0_0 = arith.constant 0 : index
    %0 = vector.load %arg1[%c0, %c0_0] : memref<2x512xbf16, #tpu.memory_space<vmem>>, vector<2x512xbf16>
    %1 = arith.extf %0 : vector<2x512xbf16> to vector<2x512xf32>
    %2 = vector.extract_strided_slice %1 {offsets = [0, 0], sizes = [2, 128], strides = [1, 1]} : vector<2x512xf32> to vector<2x128xf32>
    %3 = vector.extract_strided_slice %1 {offsets = [0, 128], sizes = [2, 128], strides = [1, 1]} : vector<2x512xf32> to vector<2x128xf32>
    %4 = arith.addf %2, %3 : vector<2x128xf32>
    %5 = vector.extract_strided_slice %1 {offsets = [0, 256], sizes = [2, 128], strides = [1, 1]} : vector<2x512xf32> to vector<2x128xf32>
    %6 = arith.addf %4, %5 : vector<2x128xf32>
    %7 = vector.extract_strided_slice %1 {offsets = [0, 384], sizes = [2, 128], strides = [1, 1]} : vector<2x512xf32> to vector<2x128xf32>
    %8 = arith.addf %6, %7 : vector<2x128xf32>
    %cst = arith.constant 2.500000e-01 : f32
    %9 = vector.broadcast %cst : f32 to vector<2x128xf32>
    %10 = arith.mulf %8, %9 : vector<2x128xf32>
    %c0_1 = arith.constant 0 : index
    %c0_2 = arith.constant 0 : index
    %11 = vector.load %arg2[%c0_1, %c0_2] : memref<128x10xf32, #tpu.memory_space<vmem>>, vector<128x10xf32>
    %cst_3 = arith.constant dense<0.000000e+00> : vector<2x10xf32>
    %12 = tpu.matmul %10, %11, %cst_3 {dimension_numbers = #tpu.dot_dimension_numbers<[1], [0], [0], [1], [0, 0, 1, 1], [], []>} : vector<2x128xf32>, vector<128x10xf32>, vector<2x10xf32> -> vector<2x10xf32>
    %c0_4 = arith.constant 0 : index
    %c0_5 = arith.constant 0 : index
    %13 = vector.load %arg3[%c0_4, %c0_5] : memref<1x10xf32, #tpu.memory_space<vmem>>, vector<1x10xf32>
    %14 = vector.broadcast %13 : vector<1x10xf32> to vector<2x10xf32>
    %15 = arith.addf %12, %14 : vector<2x10xf32>
    %c0_6 = arith.constant 0 : index
    %c0_7 = arith.constant 0 : index
    %16 = vector.load %arg4[%c0_6, %c0_7] : memref<2x10xf32, #tpu.memory_space<vmem>>, vector<2x10xf32>
    tpu.vector_store %arg4[%c0_6, %c0_7], %15 {strides = array<i32>} : memref<2x10xf32, #tpu.memory_space<vmem>>, vector<2x10xf32>,
    return
  }
  func.func @transform_0(%arg0: i32) -> (i32, i32) {
    %c0_i32 = arith.constant 0 : i32
    %c0_i32_0 = arith.constant 0 : i32
    return %arg0, %c0_i32 : i32, i32
  }
  func.func @transform_1(%arg0: i32) -> (i32, i32) {
    %c0_i32 = arith.constant 0 : i32
    %c0_i32_0 = arith.constant 0 : i32
    %c0_i32_1 = arith.constant 0 : i32
    return %c0_i32, %c0_i32_0 : i32, i32
  }
  func.func @transform_2(%arg0: i32) -> (i32, i32) {
    %c0_i32 = arith.constant 0 : i32
    %c0_i32_0 = arith.constant 0 : i32
    %c0_i32_1 = arith.constant 0 : i32
    return %c0_i32, %c0_i32_0 : i32, i32
  }
  func.func @transform_3(%arg0: i32) -> (i32, i32) {
    %c0_i32 = arith.constant 0 : i32
    %c0_i32_0 = arith.constant 0 : i32
    return %arg0, %c0_i32 : i32, i32
  }
}

</mosaic_0001>

<llo_original>
// kernel: net3layers_forward.4
$region0: #{net3layers_forward.4}
  #allocation0 [shape = 'u32[]', space=smem, size = 0x4, offset = 0x4, fixed_abs, tag = 'smem constant byte address 0x4 - core index']
  #allocation1 [shape = 'u32[144,128]{1,0:T(1,128)}', space=vmem, size = 0x12000, scoped, tag = 'internal scratch']
  %s0 = inlined_call_operand.vmem [shape: bf16[450,75], index: 0, kind: input, shape index: {}]
  %s1 = inlined_call_operand.vmem [shape: bf16[450,75], index: 1, kind: input, shape index: {}]
  %s2 = inlined_call_operand.vmem [shape: bf16[450,75], index: 2, kind: input, shape index: {}]
  %s3 = inlined_call_operand.vmem [shape: bf16[450,75], index: 3, kind: input, shape index: {}]
  %s4 = inlined_call_operand.vmem [shape: bf16[75,32], index: 4, kind: input, shape index: {}]
  %s5 = inlined_call_operand.vmem [shape: f32[1,32], index: 5, kind: input, shape index: {}]
  %s6 = inlined_call_operand.vmem [shape: f32[1,32], index: 6, kind: input, shape index: {}]
  %s7 = inlined_call_operand.vmem [shape: bf16[450,32], index: 7, kind: output, shape index: {}]
  %s8 = sld [smem:[#allocation0]]
  $region105: #{net3layers_forward.4} parent=0
    _
  %s10 = ssub.s32 1, %s8
  %s11 = scalar_select 0, %s10, %s8
  $region1: #{net3layers_forward.4} parent=0
    #allocation2 [shape = 'u8[122880]{0}', space=vmem, size = 0x1e000, scoped, tag = 'output window, operand 0']
    loop: start=0, step=1, limit=4
    $region2: #{net3layers_forward.4} parent=1 // loop_pre_header
      _
    $region3: #{net3layers_forward.4} parent=1 // loop_header
      %s13 = sphi 0, %s17
      %p14 = scmp.ge.s32.totalorder %s13, 4
      %s23 = sphi 0, %s25
      %s26 = sphi 0, %s23
      %s27 = sphi 0, %s26
      %s43 = sphi 0, %s27
      %s49 = sphi 0, %s51
      %s52 = sphi 0, %s49
      %s53 = sphi 0, %s52
      %s69 = sphi 0, %s53
      %s75 = sphi 0, %s77
      %s78 = sphi 0, %s75
      %s79 = sphi 0, %s78
      %s95 = sphi 0, %s79
      %s101 = sphi 0, %s103
      %s104 = sphi 0, %s101
      %s105 = sphi 0, %s104
      %s121 = sphi 0, %s105
      %s125 = sphi 0, %s125
      %s127 = sphi 0, %s125
      %s128 = sphi 0, %s127
      %s142 = sphi 0, %s128
      %s146 = sphi 0, %s146
      %s148 = sphi 0, %s146
      %s149 = sphi 0, %s148
      %s163 = sphi 0, %s149
      %s167 = sphi 0, %s167
      %s169 = sphi 0, %s167
      %s170 = sphi 0, %s169
      %s184 = sphi 0, %s170
      %s190 = sphi 0, %s192
      %s193 = sphi 0, %s190
      %s194 = sphi 0, %s193
      %s210 = sphi 0, %s194
    $region4: #{net3layers_forward.4} parent=1 // loop_header_branch
      %16 = sbr.rel (%p14) target = $region8
    $region5: #{net3layers_forward.4} parent=1 // loop_body
      %s18 = ssub.s32 %s13, 1
      %s19 = ssub.s32 %s13, 2
      %s20 = sadd.s32 %s13, 1
      %s21 = ssub.s32 %s13, %s20
      %p22 = scmp.eq.s32.totalorder %s21, 0
      %s24 = sadd.s32 %s23, 1
      %s25 = scalar_select %p22, %s23, %s24
      %p28 = pneg %p22
      %p29 = scmp.eq.s32.totalorder %s13, 1
      %p30 = por %p28, %p29
      %p31 = scmp.ne.s32.totalorder %s23, %s26
      %p32 = scmp.eq.s32.totalorder %s13, 0
      %p33 = por %p31, %p32
      %p34 = scmp.ne.s32.totalorder %s23, %s26
      %p35 = scmp.eq.s32.totalorder %s18, 1
      %p36 = por %p34, %p35
      %p37 = scmp.ne.s32.totalorder %s26, %s27
      %p38 = scmp.eq.s32.totalorder %s18, 0
      %p39 = por %p37, %p38
      %p40 = scmp.ne.s32.totalorder %s26, %s27
      %p41 = scmp.eq.s32.totalorder %s19, 1
      %p42 = por %p40, %p41
      %p44 = scmp.ne.s32.totalorder %s27, %s43
      %p45 = scmp.eq.s32.totalorder %s19, 0
      %p46 = por %p44, %p45
      %s47 = ssub.s32 %s13, %s20
      %p48 = scmp.eq.s32.totalorder %s47, 0
      %s50 = sadd.s32 %s49, 1
      %s51 = scalar_select %p48, %s49, %s50
      %p54 = pneg %p48
      %p55 = scmp.eq.s32.totalorder %s13, 1
      %p56 = por %p54, %p55
      %p57 = scmp.ne.s32.totalorder %s49, %s52
      %p58 = scmp.eq.s32.totalorder %s13, 0
      %p59 = por %p57, %p58
      %p60 = scmp.ne.s32.totalorder %s49, %s52
      %p61 = scmp.eq.s32.totalorder %s18, 1
      %p62 = por %p60, %p61
      %p63 = scmp.ne.s32.totalorder %s52, %s53
      %p64 = scmp.eq.s32.totalorder %s18, 0
      %p65 = por %p63, %p64
      %p66 = scmp.ne.s32.totalorder %s52, %s53
      %p67 = scmp.eq.s32.totalorder %s19, 1
      %p68 = por %p66, %p67
      %p70 = scmp.ne.s32.totalorder %s53, %s69
      %p71 = scmp.eq.s32.totalorder %s19, 0
      %p72 = por %p70, %p71
      %s73 = ssub.s32 %s13, %s20
      %p74 = scmp.eq.s32.totalorder %s73, 0
      %s76 = sadd.s32 %s75, 1
      %s77 = scalar_select %p74, %s75, %s76
      %p80 = pneg %p74
      %p81 = scmp.eq.s32.totalorder %s13, 1
      %p82 = por %p80, %p81
      %p83 = scmp.ne.s32.totalorder %s75, %s78
      %p84 = scmp.eq.s32.totalorder %s13, 0
      %p85 = por %p83, %p84
      %p86 = scmp.ne.s32.totalorder %s75, %s78
      %p87 = scmp.eq.s32.totalorder %s18, 1
      %p88 = por %p86, %p87
      %p89 = scmp.ne.s32.totalorder %s78, %s79
      %p90 = scmp.eq.s32.totalorder %s18, 0
      %p91 = por %p89, %p90
      %p92 = scmp.ne.s32.totalorder %s78, %s79
      %p93 = scmp.eq.s32.totalorder %s19, 1
      %p94 = por %p92, %p93
      %p96 = scmp.ne.s32.totalorder %s79, %s95
      %p97 = scmp.eq.s32.totalorder %s19, 0
      %p98 = por %p96, %p97
      %s99 = ssub.s32 %s13, %s20
      %p100 = scmp.eq.s32.totalorder %s99, 0
      %s102 = sadd.s32 %s101, 1
      %s103 = scalar_select %p100, %s101, %s102
      %p106 = pneg %p100
      %p107 = scmp.eq.s32.totalorder %s13, 1
      %p108 = por %p106, %p107
      %p109 = scmp.ne.s32.totalorder %s101, %s104
      %p110 = scmp.eq.s32.totalorder %s13, 0
      %p111 = por %p109, %p110
      %p112 = scmp.ne.s32.totalorder %s101, %s104
      %p113 = scmp.eq.s32.totalorder %s18, 1
      %p114 = por %p112, %p113
      %p115 = scmp.ne.s32.totalorder %s104, %s105
      %p116 = scmp.eq.s32.totalorder %s18, 0
      %p117 = por %p115, %p116
      %p118 = scmp.ne.s32.totalorder %s104, %s105
      %p119 = scmp.eq.s32.totalorder %s19, 1
      %p120 = por %p118, %p119
      %p122 = scmp.ne.s32.totalorder %s105, %s121
      %p123 = scmp.eq.s32.totalorder %s19, 0
      %p124 = por %p122, %p123
      %s126 = sadd.s32 %s125, 1
      %p129 = scmp.eq.s32.totalorder %s13, 1
      %p130 = scmp.ne.s32.totalorder %s125, %s127
      %p131 = scmp.eq.s32.totalorder %s13, 0
      %p132 = por %p130, %p131
      %p133 = scmp.ne.s32.totalorder %s125, %s127
      %p134 = scmp.eq.s32.totalorder %s18, 1
      %p135 = por %p133, %p134
      %p136 = scmp.ne.s32.totalorder %s127, %s128
      %p137 = scmp.eq.s32.totalorder %s18, 0
      %p138 = por %p136, %p137
      %p139 = scmp.ne.s32.totalorder %s127, %s128
      %p140 = scmp.eq.s32.totalorder %s19, 1
      %p141 = por %p139, %p140
      %p143 = scmp.ne.s32.totalorder %s128, %s142
      %p144 = scmp.eq.s32.totalorder %s19, 0
      %p145 = por %p143, %p144
      %s147 = sadd.s32 %s146, 1
      %p150 = scmp.eq.s32.totalorder %s13, 1
      %p151 = scmp.ne.s32.totalorder %s146, %s148
      %p152 = scmp.eq.s32.totalorder %s13, 0
      %p153 = por %p151, %p152
      %p154 = scmp.ne.s32.totalorder %s146, %s148
      %p155 = scmp.eq.s32.totalorder %s18, 1
      %p156 = por %p154, %p155
      %p157 = scmp.ne.s32.totalorder %s148, %s149
      %p158 = scmp.eq.s32.totalorder %s18, 0
      %p159 = por %p157, %p158
      %p160 = scmp.ne.s32.totalorder %s148, %s149
      %p161 = scmp.eq.s32.totalorder %s19, 1
      %p162 = por %p160, %p161
      %p164 = scmp.ne.s32.totalorder %s149, %s163
      %p165 = scmp.eq.s32.totalorder %s19, 0
      %p166 = por %p164, %p165
      %s168 = sadd.s32 %s167, 1
      %p171 = scmp.eq.s32.totalorder %s13, 1
      %p172 = scmp.ne.s32.totalorder %s167, %s169
      %p173 = scmp.eq.s32.totalorder %s13, 0
      %p174 = por %p172, %p173
      %p175 = scmp.ne.s32.totalorder %s167, %s169
      %p176 = scmp.eq.s32.totalorder %s18, 1
      %p177 = por %p175, %p176
      %p178 = scmp.ne.s32.totalorder %s169, %s170
      %p179 = scmp.eq.s32.totalorder %s18, 0
      %p180 = por %p178, %p179
      %p181 = scmp.ne.s32.totalorder %s169, %s170
      %p182 = scmp.eq.s32.totalorder %s19, 1
      %p183 = por %p181, %p182
      %p185 = scmp.ne.s32.totalorder %s170, %s184
      %p186 = scmp.eq.s32.totalorder %s19, 0
      %p187 = por %p185, %p186
      %s188 = ssub.s32 %s13, %s20
      %p189 = scmp.eq.s32.totalorder %s188, 0
      %s191 = sadd.s32 %s190, 1
      %s192 = scalar_select %p189, %s190, %s191
      %p195 = pneg %p189
      %p196 = scmp.eq.s32.totalorder %s13, 1
      %p197 = por %p195, %p196
      %p198 = scmp.ne.s32.totalorder %s190, %s193
      %p199 = scmp.eq.s32.totalorder %s13, 0
      %p200 = por %p198, %p199
      %p201 = scmp.ne.s32.totalorder %s190, %s193
      %p202 = scmp.eq.s32.totalorder %s18, 1
      %p203 = por %p201, %p202
      %p204 = scmp.ne.s32.totalorder %s193, %s194
      %p205 = scmp.eq.s32.totalorder %s18, 0
      %p206 = por %p204, %p205
      %p207 = scmp.ne.s32.totalorder %s193, %s194
      %p208 = scmp.eq.s32.totalorder %s19, 1
      %p209 = por %p207, %p208
      %p211 = scmp.ne.s32.totalorder %s194, %s210
      %p212 = scmp.eq.s32.totalorder %s19, 0
      %p213 = por %p211, %p212
      %p214 = scmp.le.s32.totalorder 1, %s13
      %p215 = scmp.lt.s32.totalorder %s13, 3
      %p216 = pnand %p214, %p215
      %p217 = pneg %p216
      // Predicated region
      $region9: #{net3layers_forward.4} parent=5 // pred_check
        _
      $region10: #{net3layers_forward.4} parent=5 // pred_check_branch
        %219 = sbr.rel (%p216) target = $region12
      $region11: #{net3layers_forward.4} parent=5 // pred_region
        %s220 = ssub.s32 %s13, 1
        // Predicated region
        $region13: #{net3layers_forward.4} parent=11 // pred_check
          %p221 = pneg %p138
        $region14: #{net3layers_forward.4} parent=11 // pred_check_branch
          %223 = sbr.rel (%p221) target = $region16
        $region15: #{net3layers_forward.4} parent=11 // pred_region
          _
        $region16: #{net3layers_forward.4} parent=11 // pred_fallthru
          _
        // Predicated region
        $region17: #{net3layers_forward.4} parent=11 // pred_check
          %p224 = pneg %p159
        $region18: #{net3layers_forward.4} parent=11 // pred_check_branch
          %226 = sbr.rel (%p224) target = $region20
        $region19: #{net3layers_forward.4} parent=11 // pred_region
          _
        $region20: #{net3layers_forward.4} parent=11 // pred_fallthru
          _
        // Predicated region
        $region21: #{net3layers_forward.4} parent=11 // pred_check
          %p227 = pneg %p180
        $region22: #{net3layers_forward.4} parent=11 // pred_check_branch
          %229 = sbr.rel (%p227) target = $region24
        $region23: #{net3layers_forward.4} parent=11 // pred_region
          _
        $region24: #{net3layers_forward.4} parent=11 // pred_fallthru
          _
      $region12: #{net3layers_forward.4} parent=5 // pred_fallthru
        _
      %p230 = scmp.lt.s32.totalorder %s13, 2
      // Predicated region
      $region25: #{net3layers_forward.4} parent=5 // pred_check
        %p231 = pneg %p230
      $region26: #{net3layers_forward.4} parent=5 // pred_check_branch
        %233 = sbr.rel (%p231) target = $region28
      $region27: #{net3layers_forward.4} parent=5 // pred_region
        // Predicated region
        $region29: #{net3layers_forward.4} parent=27 // pred_check
          %p234 = pneg %p33
        $region30: #{net3layers_forward.4} parent=27 // pred_check_branch
          %236 = sbr.rel (%p234) target = $region32
        $region31: #{net3layers_forward.4} parent=27 // pred_region
          %s237 = smul.u32 30, %s13
          %s238 = ssub.s32 57, %s237
          %p239 = scmp.lt.s32.totalorder %s238, 30
          %s240 = scalar_select %p239, %s238, 30
          %s241 = smul.u32 64, %s240
          %p242 = scmp.lt.s32.totalorder %s237, 56
          %s243 = scalar_select %p242, %s237, 56
          %s244 = smul.addr %s243, 4
          %s245 = scalar_lea.vmem %s0, %s244
          %s246 = smul.u32 30, %s13
          %s247 = ssub.s32 57, %s246
          %p248 = scmp.lt.s32.totalorder %s247, 30
          %s249 = scalar_select %p248, %s247, 30
          %s250 = smul.u32 64, %s249
        $region32: #{net3layers_forward.4} parent=27 // pred_fallthru
          _
        // Predicated region
        $region33: #{net3layers_forward.4} parent=27 // pred_check
          %p251 = pneg %p59
        $region34: #{net3layers_forward.4} parent=27 // pred_check_branch
          %253 = sbr.rel (%p251) target = $region36
        $region35: #{net3layers_forward.4} parent=27 // pred_region
          %s254 = smul.u32 30, %s13
          %s255 = ssub.s32 57, %s254
          %p256 = scmp.lt.s32.totalorder %s255, 30
          %s257 = scalar_select %p256, %s255, 30
          %s258 = smul.u32 64, %s257
          %p259 = scmp.lt.s32.totalorder %s254, 56
          %s260 = scalar_select %p259, %s254, 56
          %s261 = smul.addr %s260, 4
          %s262 = scalar_lea.vmem %s1, %s261
          %s263 = smul.u32 30, %s13
          %s264 = ssub.s32 57, %s263
          %p265 = scmp.lt.s32.totalorder %s264, 30
          %s266 = scalar_select %p265, %s264, 30
          %s267 = smul.u32 64, %s266
        $region36: #{net3layers_forward.4} parent=27 // pred_fallthru
          _
        // Predicated region
        $region37: #{net3layers_forward.4} parent=27 // pred_check
          %p268 = pneg %p85
        $region38: #{net3layers_forward.4} parent=27 // pred_check_branch
          %270 = sbr.rel (%p268) target = $region40
        $region39: #{net3layers_forward.4} parent=27 // pred_region
          %s271 = smul.u32 30, %s13
          %s272 = ssub.s32 57, %s271
          %p273 = scmp.lt.s32.totalorder %s272, 30
          %s274 = scalar_select %p273, %s272, 30
          %s275 = smul.u32 64, %s274
          %p276 = scmp.lt.s32.totalorder %s271, 56
          %s277 = scalar_select %p276, %s271, 56
          %s278 = smul.addr %s277, 4
          %s279 = scalar_lea.vmem %s2, %s278
          %s280 = smul.u32 30, %s13
          %s281 = ssub.s32 57, %s280
          %p282 = scmp.lt.s32.totalorder %s281, 30
          %s283 = scalar_select %p282, %s281, 30
          %s284 = smul.u32 64, %s283
        $region40: #{net3layers_forward.4} parent=27 // pred_fallthru
          _
        // Predicated region
        $region41: #{net3layers_forward.4} parent=27 // pred_check
          %p285 = pneg %p111
        $region42: #{net3layers_forward.4} parent=27 // pred_check_branch
          %287 = sbr.rel (%p285) target = $region44
        $region43: #{net3layers_forward.4} parent=27 // pred_region
          %s288 = smul.u32 30, %s13
          %s289 = ssub.s32 57, %s288
          %p290 = scmp.lt.s32.totalorder %s289, 30
          %s291 = scalar_select %p290, %s289, 30
          %s292 = smul.u32 64, %s291
          %p293 = scmp.lt.s32.totalorder %s288, 56
          %s294 = scalar_select %p293, %s288, 56
          %s295 = smul.addr %s294, 4
          %s296 = scalar_lea.vmem %s3, %s295
          %s297 = smul.u32 30, %s13
          %s298 = ssub.s32 57, %s297
          %p299 = scmp.lt.s32.totalorder %s298, 30
          %s300 = scalar_select %p299, %s298, 30
          %s301 = smul.u32 64, %s300
        $region44: #{net3layers_forward.4} parent=27 // pred_fallthru
          _
      $region28: #{net3layers_forward.4} parent=5 // pred_fallthru
        _
      %p302 = scmp.le.s32.totalorder 1, %s13
      %p303 = scmp.lt.s32.totalorder %s13, 3
      %p304 = pnand %p302, %p303
      %p305 = pneg %p304
      // Predicated region
      $region45: #{net3layers_forward.4} parent=5 // pred_check
        _
      $region46: #{net3layers_forward.4} parent=5 // pred_check_branch
        %307 = sbr.rel (%p304) target = $region48
      $region47: #{net3layers_forward.4} parent=5 // pred_region
        %s308 = ssub.s32 %s13, 1
        %s309 = smul.u32 30, %s18
        %s310 = ssub.s32 57, %s309
        %p311 = scmp.lt.s32.totalorder %s310, 30
        %s312 = scalar_select %p311, %s310, 30
        %s313 = smul.u32 64, %s312
        %p314 = scmp.lt.s32.totalorder %s309, 56
        %s315 = scalar_select %p314, %s309, 56
        %s316 = smul.addr %s315, 4
        %s317 = scalar_lea.vmem %s0, %s316
        %p318 = pneg %p39
        %p319 = pneg %p36
        %s320 = smul.u32 30, %s18
        %s321 = ssub.s32 57, %s320
        %p322 = scmp.lt.s32.totalorder %s321, 30
        %s323 = scalar_select %p322, %s321, 30
        %s324 = smul.u32 64, %s323
        %p325 = scmp.lt.s32.totalorder %s320, 56
        %s326 = scalar_select %p325, %s320, 56
        %s327 = smul.addr %s326, 4
        %s328 = scalar_lea.vmem %s1, %s327
        %p329 = pneg %p65
        %p330 = pneg %p62
        %s331 = smul.u32 30, %s18
        %s332 = ssub.s32 57, %s331
        %p333 = scmp.lt.s32.totalorder %s332, 30
        %s334 = scalar_select %p333, %s332, 30
        %s335 = smul.u32 64, %s334
        %p336 = scmp.lt.s32.totalorder %s331, 56
        %s337 = scalar_select %p336, %s331, 56
        %s338 = smul.addr %s337, 4
        %s339 = scalar_lea.vmem %s2, %s338
        %p340 = pneg %p91
        %p341 = pneg %p88
        %s342 = smul.u32 30, %s18
        %s343 = ssub.s32 57, %s342
        %p344 = scmp.lt.s32.totalorder %s343, 30
        %s345 = scalar_select %p344, %s343, 30
        %s346 = smul.u32 64, %s345
        %p347 = scmp.lt.s32.totalorder %s342, 56
        %s348 = scalar_select %p347, %s342, 56
        %s349 = smul.addr %s348, 4
        %s350 = scalar_lea.vmem %s3, %s349
        %p351 = pneg %p117
        %p352 = pneg %p114
        %p353 = pneg %p138
        %p354 = pneg %p135
        %p355 = pneg %p159
        %p356 = pneg %p156
        %p357 = pneg %p180
        %p358 = pneg %p177
        %p359 = pneg %p206
        %p360 = pneg %p203
        %s361 = sand.u32 %s193, 1
        %s362 = sand.u32 %s193, 1
        %s363 = smul.addr %s362, 120
        %s364 = scalar_lea.vmem [#allocation2], %s363
        %s365 = smul.u32 30, %s18
        %s366 = ssub.s32 57, %s365
        %p367 = scmp.lt.s32.totalorder %s366, 30
        %s368 = scalar_select %p367, %s366, 30
        %s369 = smul.u32 64, %s368
        %p370 = scmp.lt.s32.totalorder %s365, 56
        %s371 = scalar_select %p370, %s365, 56
        %s372 = smul.addr %s371, 4
        %s373 = scalar_lea.vmem %s0, %s372
        %s374 = smul.u32 30, %s18
        %s375 = ssub.s32 57, %s374
        %p376 = scmp.lt.s32.totalorder %s375, 30
        %s377 = scalar_select %p376, %s375, 30
        %s378 = smul.u32 64, %s377
        %s379 = smul.u32 30, %s18
        %s380 = ssub.s32 57, %s379
        %p381 = scmp.lt.s32.totalorder %s380, 30
        %s382 = scalar_select %p381, %s380, 30
        %s383 = smul.u32 64, %s382
        %p384 = scmp.lt.s32.totalorder %s379, 56
        %s385 = scalar_select %p384, %s379, 56
        %s386 = smul.addr %s385, 4
        %s387 = scalar_lea.vmem %s1, %s386
        %s388 = smul.u32 30, %s18
        %s389 = ssub.s32 57, %s388
        %p390 = scmp.lt.s32.totalorder %s389, 30
        %s391 = scalar_select %p390, %s389, 30
        %s392 = smul.u32 64, %s391
        %s393 = smul.u32 30, %s18
        %s394 = ssub.s32 57, %s393
        %p395 = scmp.lt.s32.totalorder %s394, 30
        %s396 = scalar_select %p395, %s394, 30
        %s397 = smul.u32 64, %s396
        %p398 = scmp.lt.s32.totalorder %s393, 56
        %s399 = scalar_select %p398, %s393, 56
        %s400 = smul.addr %s399, 4
        %s401 = scalar_lea.vmem %s2, %s400
        %s402 = smul.u32 30, %s18
        %s403 = ssub.s32 57, %s402
        %p404 = scmp.lt.s32.totalorder %s403, 30
        %s405 = scalar_select %p404, %s403, 30
        %s406 = smul.u32 64, %s405
        %s407 = smul.u32 30, %s18
        %s408 = ssub.s32 57, %s407
        %p409 = scmp.lt.s32.totalorder %s408, 30
        %s410 = scalar_select %p409, %s408, 30
        %s411 = smul.u32 64, %s410
        %p412 = scmp.lt.s32.totalorder %s407, 56
        %s413 = scalar_select %p412, %s407, 56
        %s414 = smul.addr %s413, 4
        %s415 = scalar_lea.vmem %s3, %s414
        %s416 = smul.u32 30, %s18
        %s417 = ssub.s32 57, %s416
        %p418 = scmp.lt.s32.totalorder %s417, 30
        %s419 = scalar_select %p418, %s417, 30
        %s420 = smul.u32 64, %s419
        %s421 = smul.u32 30, %s18
        %s422 = ssub.s32 57, %s421
        %p423 = scmp.lt.s32.totalorder %s422, 30
        %s424 = scalar_select %p423, %s422, 30
        %s425 = smul.u32 64, %s424
        %v427 = vld [vmem:[%s4] sm:$0xf]
        %v428 = vld [vmem:[%s4 + $0x4] sm:$0xf]
        %v429 = vld [vmem:[%s4 + $0x8] sm:$0xf]
        %v430 = vld [vmem:[%s4 + $0xc] sm:$0xf]
        %v431 = vld [vmem:[%s4 + $0x10] sm:$0xf]
        %v432 = vld [vmem:[%s4 + $0x14] sm:$0xf]
        %v433 = vld [vmem:[%s4 + $0x18] sm:$0xf]
        %v434 = vld [vmem:[%s4 + $0x1c] sm:$0xf]
        %v435 = vld [vmem:[%s4 + $0x20] sm:$0xf]
        %v436 = vld [vmem:[%s4 + $0x24] sm:$0x3]
        %v437 = vld [vmem:[%s5] sm:$0x1]
        %v438 = vld [vmem:[%s6] sm:$0x1]
        %v439 = vld [vmem:[%s373] sm:$0xf]
        %v440 = vld [vmem:[%s373 + $0x4] sm:$0xf]
        %v441 = vld [vmem:[%s373 + $0x8] sm:$0xf]
        %v442 = vld [vmem:[%s373 + $0xc] sm:$0xf]
        %v443 = vld [vmem:[%s373 + $0x10] sm:$0xf]
        %v444 = vld [vmem:[%s373 + $0x14] sm:$0xf]
        %v445 = vld [vmem:[%s373 + $0x18] sm:$0xf]
        %v446 = vld [vmem:[%s373 + $0x1c] sm:$0xf]
        %v447 = vld [vmem:[%s373 + $0x20] sm:$0xf]
        %v448 = vld [vmem:[%s373 + $0x24] sm:$0xf]
        %v449 = vld [vmem:[%s373 + $0x28] sm:$0xf]
        %v450 = vld [vmem:[%s373 + $0x2c] sm:$0xf]
        %v451 = vld [vmem:[%s373 + $0x30] sm:$0xf]
        %v452 = vld [vmem:[%s373 + $0x34] sm:$0xf]
        %v453 = vld [vmem:[%s373 + $0x38] sm:$0xf]
        %v454 = vld [vmem:[%s373 + $0x3c] sm:$0xf]
        %v455 = vld [vmem:[%s373 + $0x40] sm:$0xf]
        %v456 = vld [vmem:[%s373 + $0x44] sm:$0xf]
        %v457 = vld [vmem:[%s373 + $0x48] sm:$0xf]
        %v458 = vld [vmem:[%s373 + $0x4c] sm:$0xf]
        %v459 = vld [vmem:[%s373 + $0x50] sm:$0xf]
        %v460 = vld [vmem:[%s373 + $0x54] sm:$0xf]
        %v461 = vld [vmem:[%s373 + $0x58] sm:$0xf]
        %v462 = vld [vmem:[%s373 + $0x5c] sm:$0xf]
        %v463 = vld [vmem:[%s373 + $0x60] sm:$0xf]
        %v464 = vld [vmem:[%s373 + $0x64] sm:$0xf]
        %v465 = vld [vmem:[%s373 + $0x68] sm:$0xf]
        %v466 = vld [vmem:[%s373 + $0x6c] sm:$0xf]
        %v467 = vld [vmem:[%s373 + $0x70] sm:$0xf]
        %v468 = vld [vmem:[%s373 + $0x74] sm:$0xf]
        %v499 = vunpack.c.l.b16 %v439
        %v500 = vunpack.c.l.b16 %v440
        %v501 = vunpack.c.l.b16 %v441
        %v502 = vunpack.c.l.b16 %v442
        %v503 = vunpack.c.l.b16 %v443
        %v504 = vunpack.c.l.b16 %v444
        %v505 = vunpack.c.l.b16 %v445
        %v506 = vunpack.c.l.b16 %v446
        %v507 = vunpack.c.l.b16 %v447
        %v508 = vunpack.c.l.b16 %v448
        %v509 = vunpack.c.l.b16 %v449
        %v510 = vunpack.c.l.b16 %v450
        %v511 = vunpack.c.l.b16 %v451
        %v512 = vunpack.c.l.b16 %v452
        %v513 = vunpack.c.l.b16 %v453
        %v514 = vunpack.c.l.b16 %v454
        %v515 = vunpack.c.l.b16 %v455
        %v516 = vunpack.c.l.b16 %v456
        %v517 = vunpack.c.l.b16 %v457
        %v518 = vunpack.c.l.b16 %v458
        %v519 = vunpack.c.l.b16 %v459
        %v520 = vunpack.c.l.b16 %v460
        %v521 = vunpack.c.l.b16 %v461
        %v522 = vunpack.c.l.b16 %v462
        %v523 = vunpack.c.l.b16 %v463
        %v524 = vunpack.c.l.b16 %v464
        %v525 = vunpack.c.l.b16 %v465
        %v526 = vunpack.c.l.b16 %v466
        %v527 = vunpack.c.l.b16 %v467
        %v528 = vunpack.c.l.b16 %v468
        %v529 = vpack.c.b16 %v500, %v499
        %v530 = vpack.c.b16 %v502, %v501
        %v531 = vpack.c.b16 %v504, %v503
        %v532 = vpack.c.b16 %v506, %v505
        %v533 = vpack.c.b16 %v508, %v507
        %v534 = vpack.c.b16 %v510, %v509
        %v535 = vpack.c.b16 %v512, %v511
        %v536 = vpack.c.b16 %v514, %v513
        %v537 = vpack.c.b16 %v516, %v515
        %v538 = vpack.c.b16 %v518, %v517
        %v539 = vpack.c.b16 %v520, %v519
        %v540 = vpack.c.b16 %v522, %v521
        %v541 = vpack.c.b16 %v524, %v523
        %v542 = vpack.c.b16 %v526, %v525
        %v543 = vpack.c.b16 %v528, %v527
        %v554 = vunpack.c.l.b16 %v427
        %v555 = vunpack.c.l.b16 %v428
        %v556 = vunpack.c.l.b16 %v429
        %v557 = vunpack.c.l.b16 %v430
        %v558 = vunpack.c.l.b16 %v431
        %v559 = vunpack.c.l.b16 %v432
        %v560 = vunpack.c.l.b16 %v433
        %v561 = vunpack.c.l.b16 %v434
        %v562 = vunpack.c.l.b16 %v435
        %v563 = vunpack.c.l.b16 %v436
        %v564 = vpack.c.b16 %v555, %v554
        %v565 = vpack.c.b16 %v557, %v556
        %v566 = vpack.c.b16 %v559, %v558
        %v567 = vpack.c.b16 %v561, %v560
        %v568 = vpack.c.b16 %v563, %v562
        %vm573 = vcmask 613376
        %v575 = vsel %vm573, %v529, 0
        %v578 = vsel %vm573, %v530, 0
        %v581 = vsel %vm573, %v531, 0
        %v584 = vsel %vm573, %v532, 0
        %v587 = vsel %vm573, %v533, 0
        %v590 = vsel %vm573, %v534, 0
        %v593 = vsel %vm573, %v535, 0
        %v596 = vsel %vm573, %v536, 0
        %v599 = vsel %vm573, %v537, 0
        %v602 = vsel %vm573, %v538, 0
        %v605 = vsel %vm573, %v539, 0
        %v608 = vsel %vm573, %v540, 0
        %v611 = vsel %vm573, %v541, 0
        %v614 = vsel %vm573, %v542, 0
        %v617 = vsel %vm573, %v543, 0
        %vm619 = vcmask 1044480
        %vm620 = vcmask 1045504
        %v621 = vsel %vm619, 4294967295, 65535
        %v622 = vsel %vm620, %v621, 0
        %v624 = vand.u32 %v568, %v622
        %626 = vmatprep.subr.bf16.mxu0 0
        %627 = vmatpush1.bf16.msra.mxu0 %v564
        %628 = vmatprep.subr.bf16.mxu0 0
        %629 = vmatpush1.bf16.msra.mxu0 %v565
        %630 = vmatprep.subr.bf16.mxu0 0
        %631 = vmatpush1.bf16.msra.mxu0 %v566
        %632 = vmatprep.subr.bf16.mxu0 0
        %633 = vmatpush1.bf16.msra.mxu0 %v567
        %634 = vmatprep.subr.bf16.mxu0 0
        %635 = vmatpush1.bf16.msra.mxu0 %v624
        %636 = vmatprep.subr.bf16.mxu0 0
        %637 = vmatpush1.bf16.msra.mxu0 0
        %638 = vmatprep.subr.bf16.mxu0 0
        %639 = vmatpush1.bf16.msra.mxu0 0
        %640 = vmatprep.subr.bf16.mxu0 0
        %641 = vmatpush1.bf16.msra.mxu0 0
        %642 = vmatprep.subr.bf16.mxu0 0
        %643 = vmatpush1.bf16.msra.mxu0 0
        %644 = vmatprep.subr.bf16.mxu0 0
        %645 = vmatpush1.bf16.msra.mxu0 0
        %646 = vmatprep.subr.bf16.mxu0 0
        %647 = vmatpush1.bf16.msra.mxu0 0
        %648 = vmatprep.subr.bf16.mxu0 0
        %649 = vmatpush1.bf16.msra.mxu0 0
        %650 = vmatprep.subr.bf16.mxu0 0
        %651 = vmatpush1.bf16.msra.mxu0 0
        %652 = vmatprep.subr.bf16.mxu0 0
        %653 = vmatpush1.bf16.msra.mxu0 0
        %654 = vmatprep.subr.bf16.mxu0 0
        %655 = vmatpush1.bf16.msra.mxu0 0
        %656 = vmatprep.subr.bf16.mxu0 0
        %657 = vmatpush1.bf16.msra.mxu0 0
        %658 = vmatprep.mubr.bf16.mxu0 0
        %659 = vmatmul.mubr.bf16.gmra.mrb[0].mxu0 %v575
        %v660 = vpop.f32.mrb[0].mxu0
        %v661 = vadd.f32 0.0, %v660
        %v662 = vpop.f32.mrb[0].mxu0
        %v663 = vpop.f32.mrb[0].mxu0
        %v664 = vadd.f32 0.0, %v663
        %v665 = vpop.f32.mrb[0].mxu0
        %666 = vmatprep.mubr.bf16.mxu0 0
        %667 = vmatmul.mubr.bf16.gmra.mrb[0].mxu0 %v578
        %v668 = vpop.f32.mrb[0].mxu0
        %v669 = vadd.f32 0.0, %v668
        %v670 = vpop.f32.mrb[0].mxu0
        %v671 = vpop.f32.mrb[0].mxu0
        %v672 = vadd.f32 0.0, %v671
        %v673 = vpop.f32.mrb[0].mxu0
        %674 = vmatprep.mubr.bf16.mxu0 0
        %675 = vmatmul.mubr.bf16.gmra.mrb[0].mxu0 %v581
        %v676 = vpop.f32.mrb[0].mxu0
        %v677 = vadd.f32 0.0, %v676
        %v678 = vpop.f32.mrb[0].mxu0
        %v679 = vpop.f32.mrb[0].mxu0
        %v680 = vadd.f32 0.0, %v679
        %v681 = vpop.f32.mrb[0].mxu0
        %682 = vmatprep.mubr.bf16.mxu0 0
        %683 = vmatmul.mubr.bf16.gmra.mrb[0].mxu0 %v584
        %v684 = vpop.f32.mrb[0].mxu0
        %v685 = vadd.f32 0.0, %v684
        %v686 = vpop.f32.mrb[0].mxu0
        %v687 = vpop.f32.mrb[0].mxu0
        %v688 = vadd.f32 0.0, %v687
        %v689 = vpop.f32.mrb[0].mxu0
        %690 = vmatprep.mubr.bf16.mxu0 0
        %691 = vmatmul.mubr.bf16.gmra.mrb[0].mxu0 %v587
        %v692 = vpop.f32.mrb[0].mxu0
        %v693 = vadd.f32 0.0, %v692
        %v694 = vpop.f32.mrb[0].mxu0
        %v695 = vpop.f32.mrb[0].mxu0
        %v696 = vadd.f32 0.0, %v695
        %v697 = vpop.f32.mrb[0].mxu0
        %698 = vmatprep.mubr.bf16.mxu0 0
        %699 = vmatmul.mubr.bf16.gmra.mrb[0].mxu0 %v590
        %v700 = vpop.f32.mrb[0].mxu0
        %v701 = vadd.f32 0.0, %v700
        %v702 = vpop.f32.mrb[0].mxu0
        %v703 = vpop.f32.mrb[0].mxu0
        %v704 = vadd.f32 0.0, %v703
        %v705 = vpop.f32.mrb[0].mxu0
        %706 = vmatprep.mubr.bf16.mxu0 0
        %707 = vmatmul.mubr.bf16.gmra.mrb[0].mxu0 %v593
        %v708 = vpop.f32.mrb[0].mxu0
        %v709 = vadd.f32 0.0, %v708
        %v710 = vpop.f32.mrb[0].mxu0
        %v711 = vpop.f32.mrb[0].mxu0
        %v712 = vadd.f32 0.0, %v711
        %v713 = vpop.f32.mrb[0].mxu0
        %714 = vmatprep.mubr.bf16.mxu0 0
        %715 = vmatmul.mubr.bf16.gmra.mrb[0].mxu0 %v596
        %v716 = vpop.f32.mrb[0].mxu0
        %v717 = vadd.f32 0.0, %v716
        %v718 = vpop.f32.mrb[0].mxu0
        %v719 = vpop.f32.mrb[0].mxu0
        %v720 = vadd.f32 0.0, %v719
        %v721 = vpop.f32.mrb[0].mxu0
        %722 = vmatprep.mubr.bf16.mxu0 0
        %723 = vmatmul.mubr.bf16.gmra.mrb[0].mxu0 %v599
        %v724 = vpop.f32.mrb[0].mxu0
        %v725 = vadd.f32 0.0, %v724
        %v726 = vpop.f32.mrb[0].mxu0
        %v727 = vpop.f32.mrb[0].mxu0
        %v728 = vadd.f32 0.0, %v727
        %v729 = vpop.f32.mrb[0].mxu0
        %730 = vmatprep.mubr.bf16.mxu0 0
        %731 = vmatmul.mubr.bf16.gmra.mrb[0].mxu0 %v602
        %v732 = vpop.f32.mrb[0].mxu0
        %v733 = vadd.f32 0.0, %v732
        %v734 = vpop.f32.mrb[0].mxu0
        %v735 = vpop.f32.mrb[0].mxu0
        %v736 = vadd.f32 0.0, %v735
        %v737 = vpop.f32.mrb[0].mxu0
        %738 = vmatprep.mubr.bf16.mxu0 0
        %739 = vmatmul.mubr.bf16.gmra.mrb[0].mxu0 %v605
        %v740 = vpop.f32.mrb[0].mxu0
        %v741 = vadd.f32 0.0, %v740
        %v742 = vpop.f32.mrb[0].mxu0
        %v743 = vpop.f32.mrb[0].mxu0
        %v744 = vadd.f32 0.0, %v743
        %v745 = vpop.f32.mrb[0].mxu0
        %746 = vmatprep.mubr.bf16.mxu0 0
        %747 = vmatmul.mubr.bf16.gmra.mrb[0].mxu0 %v608
        %v748 = vpop.f32.mrb[0].mxu0
        %v749 = vadd.f32 0.0, %v748
        %v750 = vpop.f32.mrb[0].mxu0
        %v751 = vpop.f32.mrb[0].mxu0
        %v752 = vadd.f32 0.0, %v751
        %v753 = vpop.f32.mrb[0].mxu0
        %754 = vmatprep.mubr.bf16.mxu0 0
        %755 = vmatmul.mubr.bf16.gmra.mrb[0].mxu0 %v611
        %v756 = vpop.f32.mrb[0].mxu0
        %v757 = vadd.f32 0.0, %v756
        %v758 = vpop.f32.mrb[0].mxu0
        %v759 = vpop.f32.mrb[0].mxu0
        %v760 = vadd.f32 0.0, %v759
        %v761 = vpop.f32.mrb[0].mxu0
        %762 = vmatprep.mubr.bf16.mxu0 0
        %763 = vmatmul.mubr.bf16.gmra.mrb[0].mxu0 %v614
        %v764 = vpop.f32.mrb[0].mxu0
        %v765 = vadd.f32 0.0, %v764
        %v766 = vpop.f32.mrb[0].mxu0
        %v767 = vpop.f32.mrb[0].mxu0
        %v768 = vadd.f32 0.0, %v767
        %v769 = vpop.f32.mrb[0].mxu0
        %770 = vmatprep.mubr.bf16.mxu0 0
        %771 = vmatmul.mubr.bf16.gmra.mrb[0].mxu0 %v617
        %v772 = vpop.f32.mrb[0].mxu0
        %v773 = vadd.f32 0.0, %v772
        %v774 = vpop.f32.mrb[0].mxu0
        %v775 = vpop.f32.mrb[0].mxu0
        %v776 = vadd.f32 0.0, %v775
        %v777 = vpop.f32.mrb[0].mxu0
        %778 = vdwg.mxu0
        %v780 = vlaneseq
        %v781 = vshrl.u32 %v780, 7
        %v782 = vsub.s32 0, %v781
        %v783 = vrot.slane %v437, %v782
        %v785 = vmul.f32 %v661, %v783
        %v786 = vmul.f32 %v664, %v783
        %v787 = vmul.f32 %v669, %v783
        %v788 = vmul.f32 %v672, %v783
        %v789 = vmul.f32 %v677, %v783
        %v790 = vmul.f32 %v680, %v783
        %v791 = vmul.f32 %v685, %v783
        %v792 = vmul.f32 %v688, %v783
        %v793 = vmul.f32 %v693, %v783
        %v794 = vmul.f32 %v696, %v783
        %v795 = vmul.f32 %v701, %v783
        %v796 = vmul.f32 %v704, %v783
        %v797 = vmul.f32 %v709, %v783
        %v798 = vmul.f32 %v712, %v783
        %v799 = vmul.f32 %v717, %v783
        %v800 = vmul.f32 %v720, %v783
        %v801 = vmul.f32 %v725, %v783
        %v802 = vmul.f32 %v728, %v783
        %v803 = vmul.f32 %v733, %v783
        %v804 = vmul.f32 %v736, %v783
        %v805 = vmul.f32 %v741, %v783
        %v806 = vmul.f32 %v744, %v783
        %v807 = vmul.f32 %v749, %v783
        %v808 = vmul.f32 %v752, %v783
        %v809 = vmul.f32 %v757, %v783
        %v810 = vmul.f32 %v760, %v783
        %v811 = vmul.f32 %v765, %v783
        %v812 = vmul.f32 %v768, %v783
        %v813 = vmul.f32 %v773, %v783
        %v814 = vmul.f32 %v776, %v783
        %v816 = vlaneseq
        %v817 = vshrl.u32 %v816, 7
        %v818 = vsub.s32 0, %v817
        %v819 = vrot.slane %v438, %v818
        %v821 = vadd.f32 %v785, %v819
        %v822 = vadd.f32 %v786, %v819
        %v823 = vadd.f32 %v787, %v819
        %v824 = vadd.f32 %v788, %v819
        %v825 = vadd.f32 %v789, %v819
        %v826 = vadd.f32 %v790, %v819
        %v827 = vadd.f32 %v791, %v819
        %v828 = vadd.f32 %v792, %v819
        %v829 = vadd.f32 %v793, %v819
        %v830 = vadd.f32 %v794, %v819
        %v831 = vadd.f32 %v795, %v819
        %v832 = vadd.f32 %v796, %v819
        %v833 = vadd.f32 %v797, %v819
        %v834 = vadd.f32 %v798, %v819
        %v835 = vadd.f32 %v799, %v819
        %v836 = vadd.f32 %v800, %v819
        %v837 = vadd.f32 %v801, %v819
        %v838 = vadd.f32 %v802, %v819
        %v839 = vadd.f32 %v803, %v819
        %v840 = vadd.f32 %v804, %v819
        %v841 = vadd.f32 %v805, %v819
        %v842 = vadd.f32 %v806, %v819
        %v843 = vadd.f32 %v807, %v819
        %v844 = vadd.f32 %v808, %v819
        %v845 = vadd.f32 %v809, %v819
        %v846 = vadd.f32 %v810, %v819
        %v847 = vadd.f32 %v811, %v819
        %v848 = vadd.f32 %v812, %v819
        %v849 = vadd.f32 %v813, %v819
        %v850 = vadd.f32 %v814, %v819
        %v851 = vmax.f32 %v821, 0.0
        %v852 = vmax.f32 %v822, 0.0
        %v853 = vmax.f32 %v823, 0.0
        %v854 = vmax.f32 %v824, 0.0
        %v855 = vmax.f32 %v825, 0.0
        %v856 = vmax.f32 %v826, 0.0
        %v857 = vmax.f32 %v827, 0.0
        %v858 = vmax.f32 %v828, 0.0
        %v859 = vmax.f32 %v829, 0.0
        %v860 = vmax.f32 %v830, 0.0
        %v861 = vmax.f32 %v831, 0.0
        %v862 = vmax.f32 %v832, 0.0
        %v863 = vmax.f32 %v833, 0.0
        %v864 = vmax.f32 %v834, 0.0
        %v865 = vmax.f32 %v835, 0.0
        %v866 = vmax.f32 %v836, 0.0
        %v867 = vmax.f32 %v837, 0.0
        %v868 = vmax.f32 %v838, 0.0
        %v869 = vmax.f32 %v839, 0.0
        %v870 = vmax.f32 %v840, 0.0
        %v871 = vmax.f32 %v841, 0.0
        %v872 = vmax.f32 %v842, 0.0
        %v873 = vmax.f32 %v843, 0.0
        %v874 = vmax.f32 %v844, 0.0
        %v875 = vmax.f32 %v845, 0.0
        %v876 = vmax.f32 %v846, 0.0
        %v877 = vmax.f32 %v847, 0.0
        %v878 = vmax.f32 %v848, 0.0
        %v879 = vmax.f32 %v849, 0.0
        %v880 = vmax.f32 %v850, 0.0
        %v881 = vld [vmem:[%s387] sm:$0xf]
        %v882 = vld [vmem:[%s387 + $0x4] sm:$0xf]
        %v883 = vld [vmem:[%s387 + $0x8] sm:$0xf]
        %v884 = vld [vmem:[%s387 + $0xc] sm:$0xf]
        %v885 = vld [vmem:[%s387 + $0x10] sm:$0xf]
        %v886 = vld [vmem:[%s387 + $0x14] sm:$0xf]
        %v887 = vld [vmem:[%s387 + $0x18] sm:$0xf]
        %v888 = vld [vmem:[%s387 + $0x1c] sm:$0xf]
        %v889 = vld [vmem:[%s387 + $0x20] sm:$0xf]
        %v890 = vld [vmem:[%s387 + $0x24] sm:$0xf]
        %v891 = vld [vmem:[%s387 + $0x28] sm:$0xf]
        %v892 = vld [vmem:[%s387 + $0x2c] sm:$0xf]
        %v893 = vld [vmem:[%s387 + $0x30] sm:$0xf]
        %v894 = vld [vmem:[%s387 + $0x34] sm:$0xf]
        %v895 = vld [vmem:[%s387 + $0x38] sm:$0xf]
        %v896 = vld [vmem:[%s387 + $0x3c] sm:$0xf]
        %v897 = vld [vmem:[%s387 + $0x40] sm:$0xf]
        %v898 = vld [vmem:[%s387 + $0x44] sm:$0xf]
        %v899 = vld [vmem:[%s387 + $0x48] sm:$0xf]
        %v900 = vld [vmem:[%s387 + $0x4c] sm:$0xf]
        %v901 = vld [vmem:[%s387 + $0x50] sm:$0xf]
        %v902 = vld [vmem:[%s387 + $0x54] sm:$0xf]
        %v903 = vld [vmem:[%s387 + $0x58] sm:$0xf]
        %v904 = vld [vmem:[%s387 + $0x5c] sm:$0xf]
        %v905 = vld [vmem:[%s387 + $0x60] sm:$0xf]
        %v906 = vld [vmem:[%s387 + $0x64] sm:$0xf]
        %v907 = vld [vmem:[%s387 + $0x68] sm:$0xf]
        %v908 = vld [vmem:[%s387 + $0x6c] sm:$0xf]
        %v909 = vld [vmem:[%s387 + $0x70] sm:$0xf]
        %v910 = vld [vmem:[%s387 + $0x74] sm:$0xf]
        %v941 = vunpack.c.l.b16 %v881
        %v942 = vunpack.c.l.b16 %v882
        %v943 = vunpack.c.l.b16 %v883
        %v944 = vunpack.c.l.b16 %v884
        %v945 = vunpack.c.l.b16 %v885
        %v946 = vunpack.c.l.b16 %v886
        %v947 = vunpack.c.l.b16 %v887
        %v948 = vunpack.c.l.b16 %v888
        %v949 = vunpack.c.l.b16 %v889
        %v950 = vunpack.c.l.b16 %v890
        %v951 = vunpack.c.l.b16 %v891
        %v952 = vunpack.c.l.b16 %v892
        %v953 = vunpack.c.l.b16 %v893
        %v954 = vunpack.c.l.b16 %v894
        %v955 = vunpack.c.l.b16 %v895
        %v956 = vunpack.c.l.b16 %v896
        %v957 = vunpack.c.l.b16 %v897
        %v958 = vunpack.c.l.b16 %v898
        %v959 = vunpack.c.l.b16 %v899
        %v960 = vunpack.c.l.b16 %v900
        %v961 = vunpack.c.l.b16 %v901
        %v962 = vunpack.c.l.b16 %v902
        %v963 = vunpack.c.l.b16 %v903
        %v964 = vunpack.c.l.b16 %v904
        %v965 = vunpack.c.l.b16 %v905
        %v966 = vunpack.c.l.b16 %v906
        %v967 = vunpack.c.l.b16 %v907
        %v968 = vunpack.c.l.b16 %v908
        %v969 = vunpack.c.l.b16 %v909
        %v970 = vunpack.c.l.b16 %v910
        %v971 = vpack.c.b16 %v942, %v941
        %v972 = vpack.c.b16 %v944, %v943
        %v973 = vpack.c.b16 %v946, %v945
        %v974 = vpack.c.b16 %v948, %v947
        %v975 = vpack.c.b16 %v950, %v949
        %v976 = vpack.c.b16 %v952, %v951
        %v977 = vpack.c.b16 %v954, %v953
        %v978 = vpack.c.b16 %v956, %v955
        %v979 = vpack.c.b16 %v958, %v957
        %v980 = vpack.c.b16 %v960, %v959
        %v981 = vpack.c.b16 %v962, %v961
        %v982 = vpack.c.b16 %v964, %v963
        %v983 = vpack.c.b16 %v966, %v965
        %v984 = vpack.c.b16 %v968, %v967
        %v985 = vpack.c.b16 %v970, %v969
        %v987 = vsel %vm573, %v971, 0
        %v990 = vsel %vm573, %v972, 0
        %v993 = vsel %vm573, %v973, 0
        %v996 = vsel %vm573, %v974, 0
        %v999 = vsel %vm573, %v975, 0
        %v1002 = vsel %vm573, %v976, 0
        %v1005 = vsel %vm573, %v977, 0
        %v1008 = vsel %vm573, %v978, 0
        %v1011 = vsel %vm573, %v979, 0
        %v1014 = vsel %vm573, %v980, 0
        %v1017 = vsel %vm573, %v981, 0
        %v1020 = vsel %vm573, %v982, 0
        %v1023 = vsel %vm573, %v983, 0
        %v1026 = vsel %vm573, %v984, 0
        %v1029 = vsel %vm573, %v985, 0
        %1031 = vmatprep.subr.bf16.mxu0 0
        %1032 = vmatpush1.bf16.msra.mxu0 %v564
        %1033 = vmatprep.subr.bf16.mxu0 0
        %1034 = vmatpush1.bf16.msra.mxu0 %v565
        %1035 = vmatprep.subr.bf16.mxu0 0
        %1036 = vmatpush1.bf16.msra.mxu0 %v566
        %1037 = vmatprep.subr.bf16.mxu0 0
        %1038 = vmatpush1.bf16.msra.mxu0 %v567
        %1039 = vmatprep.subr.bf16.mxu0 0
        %1040 = vmatpush1.bf16.msra.mxu0 %v624
        %1041 = vmatprep.subr.bf16.mxu0 0
        %1042 = vmatpush1.bf16.msra.mxu0 0
        %1043 = vmatprep.subr.bf16.mxu0 0
        %1044 = vmatpush1.bf16.msra.mxu0 0
        %1045 = vmatprep.subr.bf16.mxu0 0
        %1046 = vmatpush1.bf16.msra.mxu0 0
        %1047 = vmatprep.subr.bf16.mxu0 0
        %1048 = vmatpush1.bf16.msra.mxu0 0
        %1049 = vmatprep.subr.bf16.mxu0 0
        %1050 = vmatpush1.bf16.msra.mxu0 0
        %1051 = vmatprep.subr.bf16.mxu0 0
        %1052 = vmatpush1.bf16.msra.mxu0 0
        %1053 = vmatprep.subr.bf16.mxu0 0
        %1054 = vmatpush1.bf16.msra.mxu0 0
        %1055 = vmatprep.subr.bf16.mxu0 0
        %1056 = vmatpush1.bf16.msra.mxu0 0
        %1057 = vmatprep.subr.bf16.mxu0 0
        %1058 = vmatpush1.bf16.msra.mxu0 0
        %1059 = vmatprep.subr.bf16.mxu0 0
        %1060 = vmatpush1.bf16.msra.mxu0 0
        %1061 = vmatprep.subr.bf16.mxu0 0
        %1062 = vmatpush1.bf16.msra.mxu0 0
        %1063 = vmatprep.mubr.bf16.mxu0 0
        %1064 = vmatmul.mubr.bf16.gmra.mrb[0].mxu0 %v987
        %v1065 = vpop.f32.mrb[0].mxu0
        %v1066 = vadd.f32 0.0, %v1065
        %v1067 = vpop.f32.mrb[0].mxu0
        %v1068 = vpop.f32.mrb[0].mxu0
        %v1069 = vadd.f32 0.0, %v1068
        %v1070 = vpop.f32.mrb[0].mxu0
        %1071 = vmatprep.mubr.bf16.mxu0 0
        %1072 = vmatmul.mubr.bf16.gmra.mrb[0].mxu0 %v990
        %v1073 = vpop.f32.mrb[0].mxu0
        %v1074 = vadd.f32 0.0, %v1073
        %v1075 = vpop.f32.mrb[0].mxu0
        %v1076 = vpop.f32.mrb[0].mxu0
        %v1077 = vadd.f32 0.0, %v1076
        %v1078 = vpop.f32.mrb[0].mxu0
        %1079 = vmatprep.mubr.bf16.mxu0 0
        %1080 = vmatmul.mubr.bf16.gmra.mrb[0].mxu0 %v993
        %v1081 = vpop.f32.mrb[0].mxu0
        %v1082 = vadd.f32 0.0, %v1081
        %v1083 = vpop.f32.mrb[0].mxu0
        %v1084 = vpop.f32.mrb[0].mxu0
        %v1085 = vadd.f32 0.0, %v1084
        %v1086 = vpop.f32.mrb[0].mxu0
        %1087 = vmatprep.mubr.bf16.mxu0 0
        %1088 = vmatmul.mubr.bf16.gmra.mrb[0].mxu0 %v996
        %v1089 = vpop.f32.mrb[0].mxu0
        %v1090 = vadd.f32 0.0, %v1089
        %v1091 = vpop.f32.mrb[0].mxu0
        %v1092 = vpop.f32.mrb[0].mxu0
        %v1093 = vadd.f32 0.0, %v1092
        %v1094 = vpop.f32.mrb[0].mxu0
        %1095 = vmatprep.mubr.bf16.mxu0 0
        %1096 = vmatmul.mubr.bf16.gmra.mrb[0].mxu0 %v999
        %v1097 = vpop.f32.mrb[0].mxu0
        %v1098 = vadd.f32 0.0, %v1097
        %v1099 = vpop.f32.mrb[0].mxu0
        %v1100 = vpop.f32.mrb[0].mxu0
        %v1101 = vadd.f32 0.0, %v1100
        %v1102 = vpop.f32.mrb[0].mxu0
        %1103 = vmatprep.mubr.bf16.mxu0 0
        %1104 = vmatmul.mubr.bf16.gmra.mrb[0].mxu0 %v1002
        %v1105 = vpop.f32.mrb[0].mxu0
        %v1106 = vadd.f32 0.0, %v1105
        %v1107 = vpop.f32.mrb[0].mxu0
        %v1108 = vpop.f32.mrb[0].mxu0
        %v1109 = vadd.f32 0.0, %v1108
        %v1110 = vpop.f32.mrb[0].mxu0
        %1111 = vmatprep.mubr.bf16.mxu0 0
        %1112 = vmatmul.mubr.bf16.gmra.mrb[0].mxu0 %v1005
        %v1113 = vpop.f32.mrb[0].mxu0
        %v1114 = vadd.f32 0.0, %v1113
        %v1115 = vpop.f32.mrb[0].mxu0
        %v1116 = vpop.f32.mrb[0].mxu0
        %v1117 = vadd.f32 0.0, %v1116
        %v1118 = vpop.f32.mrb[0].mxu0
        %1119 = vmatprep.mubr.bf16.mxu0 0
        %1120 = vmatmul.mubr.bf16.gmra.mrb[0].mxu0 %v1008
        %v1121 = vpop.f32.mrb[0].mxu0
        %v1122 = vadd.f32 0.0, %v1121
        %v1123 = vpop.f32.mrb[0].mxu0
        %v1124 = vpop.f32.mrb[0].mxu0
        %v1125 = vadd.f32 0.0, %v1124
        %v1126 = vpop.f32.mrb[0].mxu0
        %1127 = vmatprep.mubr.bf16.mxu0 0
        %1128 = vmatmul.mubr.bf16.gmra.mrb[0].mxu0 %v1011
        %v1129 = vpop.f32.mrb[0].mxu0
        %v1130 = vadd.f32 0.0, %v1129
        %v1131 = vpop.f32.mrb[0].mxu0
        %v1132 = vpop.f32.mrb[0].mxu0
        %v1133 = vadd.f32 0.0, %v1132
        %v1134 = vpop.f32.mrb[0].mxu0
        %1135 = vmatprep.mubr.bf16.mxu0 0
        %1136 = vmatmul.mubr.bf16.gmra.mrb[0].mxu0 %v1014
        %v1137 = vpop.f32.mrb[0].mxu0
        %v1138 = vadd.f32 0.0, %v1137
        %v1139 = vpop.f32.mrb[0].mxu0
        %v1140 = vpop.f32.mrb[0].mxu0
        %v1141 = vadd.f32 0.0, %v1140
        %v1142 = vpop.f32.mrb[0].mxu0
        %1143 = vmatprep.mubr.bf16.mxu0 0
        %1144 = vmatmul.mubr.bf16.gmra.mrb[0].mxu0 %v1017
        %v1145 = vpop.f32.mrb[0].mxu0
        %v1146 = vadd.f32 0.0, %v1145
        %v1147 = vpop.f32.mrb[0].mxu0
        %v1148 = vpop.f32.mrb[0].mxu0
        %v1149 = vadd.f32 0.0, %v1148
        %v1150 = vpop.f32.mrb[0].mxu0
        %1151 = vmatprep.mubr.bf16.mxu0 0
        %1152 = vmatmul.mubr.bf16.gmra.mrb[0].mxu0 %v1020
        %v1153 = vpop.f32.mrb[0].mxu0
        %v1154 = vadd.f32 0.0, %v1153
        %v1155 = vpop.f32.mrb[0].mxu0
        %v1156 = vpop.f32.mrb[0].mxu0
        %v1157 = vadd.f32 0.0, %v1156
        %v1158 = vpop.f32.mrb[0].mxu0
        %1159 = vmatprep.mubr.bf16.mxu0 0
        %1160 = vmatmul.mubr.bf16.gmra.mrb[0].mxu0 %v1023
        %v1161 = vpop.f32.mrb[0].mxu0
        %v1162 = vadd.f32 0.0, %v1161
        %v1163 = vpop.f32.mrb[0].mxu0
        %v1164 = vpop.f32.mrb[0].mxu0
        %v1165 = vadd.f32 0.0, %v1164
        %v1166 = vpop.f32.mrb[0].mxu0
        %1167 = vmatprep.mubr.bf16.mxu0 0
        %1168 = vmatmul.mubr.bf16.gmra.mrb[0].mxu0 %v1026
        %v1169 = vpop.f32.mrb[0].mxu0
        %v1170 = vadd.f32 0.0, %v1169
        %v1171 = vpop.f32.mrb[0].mxu0
        %v1172 = vpop.f32.mrb[0].mxu0
        %v1173 = vadd.f32 0.0, %v1172
        %v1174 = vpop.f32.mrb[0].mxu0
        %1175 = vmatprep.mubr.bf16.mxu0 0
        %1176 = vmatmul.mubr.bf16.gmra.mrb[0].mxu0 %v1029
        %v1177 = vpop.f32.mrb[0].mxu0
        %v1178 = vadd.f32 0.0, %v1177
        %v1179 = vpop.f32.mrb[0].mxu0
        %v1180 = vpop.f32.mrb[0].mxu0
        %v1181 = vadd.f32 0.0, %v1180
        %v1182 = vpop.f32.mrb[0].mxu0
        %1183 = vdwg.mxu0
        %v1184 = vmul.f32 %v1066, %v783
        %v1185 = vmul.f32 %v1069, %v783
        %v1186 = vmul.f32 %v1074, %v783
        %v1187 = vmul.f32 %v1077, %v783
        %v1188 = vmul.f32 %v1082, %v783
        %v1189 = vmul.f32 %v1085, %v783
        %v1190 = vmul.f32 %v1090, %v783
        %v1191 = vmul.f32 %v1093, %v783
        %v1192 = vmul.f32 %v1098, %v783
        %v1193 = vmul.f32 %v1101, %v783
        %v1194 = vmul.f32 %v1106, %v783
        %v1195 = vmul.f32 %v1109, %v783
        %v1196 = vmul.f32 %v1114, %v783
        %v1197 = vmul.f32 %v1117, %v783
        %v1198 = vmul.f32 %v1122, %v783
        %v1199 = vmul.f32 %v1125, %v783
        %v1200 = vmul.f32 %v1130, %v783
        %v1201 = vmul.f32 %v1133, %v783
        %v1202 = vmul.f32 %v1138, %v783
        %v1203 = vmul.f32 %v1141, %v783
        %v1204 = vmul.f32 %v1146, %v783
        %v1205 = vmul.f32 %v1149, %v783
        %v1206 = vmul.f32 %v1154, %v783
        %v1207 = vmul.f32 %v1157, %v783
        %v1208 = vmul.f32 %v1162, %v783
        %v1209 = vmul.f32 %v1165, %v783
        %v1210 = vmul.f32 %v1170, %v783
        %v1211 = vmul.f32 %v1173, %v783
        %v1212 = vmul.f32 %v1178, %v783
        %v1213 = vmul.f32 %v1181, %v783
        %v1214 = vadd.f32 %v1184, %v819
        %v1215 = vadd.f32 %v1185, %v819
        %v1216 = vadd.f32 %v1186, %v819
        %v1217 = vadd.f32 %v1187, %v819
        %v1218 = vadd.f32 %v1188, %v819
        %v1219 = vadd.f32 %v1189, %v819
        %v1220 = vadd.f32 %v1190, %v819
        %v1221 = vadd.f32 %v1191, %v819
        %v1222 = vadd.f32 %v1192, %v819
        %v1223 = vadd.f32 %v1193, %v819
        %v1224 = vadd.f32 %v1194, %v819
        %v1225 = vadd.f32 %v1195, %v819
        %v1226 = vadd.f32 %v1196, %v819
        %v1227 = vadd.f32 %v1197, %v819
        %v1228 = vadd.f32 %v1198, %v819
        %v1229 = vadd.f32 %v1199, %v819
        %v1230 = vadd.f32 %v1200, %v819
        %v1231 = vadd.f32 %v1201, %v819
        %v1232 = vadd.f32 %v1202, %v819
        %v1233 = vadd.f32 %v1203, %v819
        %v1234 = vadd.f32 %v1204, %v819
        %v1235 = vadd.f32 %v1205, %v819
        %v1236 = vadd.f32 %v1206, %v819
        %v1237 = vadd.f32 %v1207, %v819
        %v1238 = vadd.f32 %v1208, %v819
        %v1239 = vadd.f32 %v1209, %v819
        %v1240 = vadd.f32 %v1210, %v819
        %v1241 = vadd.f32 %v1211, %v819
        %v1242 = vadd.f32 %v1212, %v819
        %v1243 = vadd.f32 %v1213, %v819
        %v1244 = vmax.f32 %v1214, 0.0
        %v1245 = vmax.f32 %v1215, 0.0
        %v1246 = vmax.f32 %v1216, 0.0
        %v1247 = vmax.f32 %v1217, 0.0
        %v1248 = vmax.f32 %v1218, 0.0
        %v1249 = vmax.f32 %v1219, 0.0
        %v1250 = vmax.f32 %v1220, 0.0
        %v1251 = vmax.f32 %v1221, 0.0
        %v1252 = vmax.f32 %v1222, 0.0
        %v1253 = vmax.f32 %v1223, 0.0
        %v1254 = vmax.f32 %v1224, 0.0
        %v1255 = vmax.f32 %v1225, 0.0
        %v1256 = vmax.f32 %v1226, 0.0
        %v1257 = vmax.f32 %v1227, 0.0
        %v1258 = vmax.f32 %v1228, 0.0
        %v1259 = vmax.f32 %v1229, 0.0
        %v1260 = vmax.f32 %v1230, 0.0
        %v1261 = vmax.f32 %v1231, 0.0
        %v1262 = vmax.f32 %v1232, 0.0
        %v1263 = vmax.f32 %v1233, 0.0
        %v1264 = vmax.f32 %v1234, 0.0
        %v1265 = vmax.f32 %v1235, 0.0
        %v1266 = vmax.f32 %v1236, 0.0
        %v1267 = vmax.f32 %v1237, 0.0
        %v1268 = vmax.f32 %v1238, 0.0
        %v1269 = vmax.f32 %v1239, 0.0
        %v1270 = vmax.f32 %v1240, 0.0
        %v1271 = vmax.f32 %v1241, 0.0
        %v1272 = vmax.f32 %v1242, 0.0
        %v1273 = vmax.f32 %v1243, 0.0
        %v1274 = vmax.f32 %v851, %v1244
        %v1275 = vmax.f32 %v852, %v1245
        %v1276 = vmax.f32 %v853, %v1246
        %v1277 = vmax.f32 %v854, %v1247
        %v1278 = vmax.f32 %v855, %v1248
        %v1279 = vmax.f32 %v856, %v1249
        %v1280 = vmax.f32 %v857, %v1250
        %v1281 = vmax.f32 %v858, %v1251
        %v1282 = vmax.f32 %v859, %v1252
        %v1283 = vmax.f32 %v860, %v1253
        %v1284 = vmax.f32 %v861, %v1254
        %v1285 = vmax.f32 %v862, %v1255
        %v1286 = vmax.f32 %v863, %v1256
        %v1287 = vmax.f32 %v864, %v1257
        %v1288 = vmax.f32 %v865, %v1258
        %v1289 = vmax.f32 %v866, %v1259
        %v1290 = vmax.f32 %v867, %v1260
        %v1291 = vmax.f32 %v868, %v1261
        %v1292 = vmax.f32 %v869, %v1262
        %v1293 = vmax.f32 %v870, %v1263
        %v1294 = vmax.f32 %v871, %v1264
        %v1295 = vmax.f32 %v872, %v1265
        %v1296 = vmax.f32 %v873, %v1266
        %v1297 = vmax.f32 %v874, %v1267
        %v1298 = vmax.f32 %v875, %v1268
        %v1299 = vmax.f32 %v876, %v1269
        %v1300 = vmax.f32 %v877, %v1270
        %v1301 = vmax.f32 %v878, %v1271
        %v1302 = vmax.f32 %v879, %v1272
        %v1303 = vmax.f32 %v880, %v1273
        %v1304 = vld [vmem:[%s401] sm:$0xf]
        %v1305 = vld [vmem:[%s401 + $0x4] sm:$0xf]
        %v1306 = vld [vmem:[%s401 + $0x8] sm:$0xf]
        %v1307 = vld [vmem:[%s401 + $0xc] sm:$0xf]
        %v1308 = vld [vmem:[%s401 + $0x10] sm:$0xf]
        %v1309 = vld [vmem:[%s401 + $0x14] sm:$0xf]
        %v1310 = vld [vmem:[%s401 + $0x18] sm:$0xf]
        %v1311 = vld [vmem:[%s401 + $0x1c] sm:$0xf]
        %v1312 = vld [vmem:[%s401 + $0x20] sm:$0xf]
        %v1313 = vld [vmem:[%s401 + $0x24] sm:$0xf]
        %v1314 = vld [vmem:[%s401 + $0x28] sm:$0xf]
        %v1315 = vld [vmem:[%s401 + $0x2c] sm:$0xf]
        %v1316 = vld [vmem:[%s401 + $0x30] sm:$0xf]
        %v1317 = vld [vmem:[%s401 + $0x34] sm:$0xf]
        %v1318 = vld [vmem:[%s401 + $0x38] sm:$0xf]
        %v1319 = vld [vmem:[%s401 + $0x3c] sm:$0xf]
        %v1320 = vld [vmem:[%s401 + $0x40] sm:$0xf]
        %v1321 = vld [vmem:[%s401 + $0x44] sm:$0xf]
        %v1322 = vld [vmem:[%s401 + $0x48] sm:$0xf]
        %v1323 = vld [vmem:[%s401 + $0x4c] sm:$0xf]
        %v1324 = vld [vmem:[%s401 + $0x50] sm:$0xf]
        %v1325 = vld [vmem:[%s401 + $0x54] sm:$0xf]
        %v1326 = vld [vmem:[%s401 + $0x58] sm:$0xf]
        %v1327 = vld [vmem:[%s401 + $0x5c] sm:$0xf]
        %v1328 = vld [vmem:[%s401 + $0x60] sm:$0xf]
        %v1329 = vld [vmem:[%s401 + $0x64] sm:$0xf]
        %v1330 = vld [vmem:[%s401 + $0x68] sm:$0xf]
        %v1331 = vld [vmem:[%s401 + $0x6c] sm:$0xf]
        %v1332 = vld [vmem:[%s401 + $0x70] sm:$0xf]
        %v1333 = vld [vmem:[%s401 + $0x74] sm:$0xf]
        %v1364 = vunpack.c.l.b16 %v1304
        %v1365 = vunpack.c.l.b16 %v1305
        %v1366 = vunpack.c.l.b16 %v1306
        %v1367 = vunpack.c.l.b16 %v1307
        %v1368 = vunpack.c.l.b16 %v1308
        %v1369 = vunpack.c.l.b16 %v1309
        %v1370 = vunpack.c.l.b16 %v1310
        %v1371 = vunpack.c.l.b16 %v1311
        %v1372 = vunpack.c.l.b16 %v1312
        %v1373 = vunpack.c.l.b16 %v1313
        %v1374 = vunpack.c.l.b16 %v1314
        %v1375 = vunpack.c.l.b16 %v1315
        %v1376 = vunpack.c.l.b16 %v1316
        %v1377 = vunpack.c.l.b16 %v1317
        %v1378 = vunpack.c.l.b16 %v1318
        %v1379 = vunpack.c.l.b16 %v1319
        %v1380 = vunpack.c.l.b16 %v1320
        %v1381 = vunpack.c.l.b16 %v1321
        %v1382 = vunpack.c.l.b16 %v1322
        %v1383 = vunpack.c.l.b16 %v1323
        %v1384 = vunpack.c.l.b16 %v1324
        %v1385 = vunpack.c.l.b16 %v1325
        %v1386 = vunpack.c.l.b16 %v1326
        %v1387 = vunpack.c.l.b16 %v1327
        %v1388 = vunpack.c.l.b16 %v1328
        %v1389 = vunpack.c.l.b16 %v1329
        %v1390 = vunpack.c.l.b16 %v1330
        %v1391 = vunpack.c.l.b16 %v1331
        %v1392 = vunpack.c.l.b16 %v1332
        %v1393 = vunpack.c.l.b16 %v1333
        %v1394 = vpack.c.b16 %v1365, %v1364
        %v1395 = vpack.c.b16 %v1367, %v1366
        %v1396 = vpack.c.b16 %v1369, %v1368
        %v1397 = vpack.c.b16 %v1371, %v1370
        %v1398 = vpack.c.b16 %v1373, %v1372
        %v1399 = vpack.c.b16 %v1375, %v1374
        %v1400 = vpack.c.b16 %v1377, %v1376
        %v1401 = vpack.c.b16 %v1379, %v1378
        %v1402 = vpack.c.b16 %v1381, %v1380
        %v1403 = vpack.c.b16 %v1383, %v1382
        %v1404 = vpack.c.b16 %v1385, %v1384
        %v1405 = vpack.c.b16 %v1387, %v1386
        %v1406 = vpack.c.b16 %v1389, %v1388
        %v1407 = vpack.c.b16 %v1391, %v1390
        %v1408 = vpack.c.b16 %v1393, %v1392
        %v1410 = vsel %vm573, %v1394, 0
        %v1413 = vsel %vm573, %v1395, 0
        %v1416 = vsel %vm573, %v1396, 0
        %v1419 = vsel %vm573, %v1397, 0
        %v1422 = vsel %vm573, %v1398, 0
        %v1425 = vsel %vm573, %v1399, 0
        %v1428 = vsel %vm573, %v1400, 0
        %v1431 = vsel %vm573, %v1401, 0
        %v1434 = vsel %vm573, %v1402, 0
        %v1437 = vsel %vm573, %v1403, 0
        %v1440 = vsel %vm573, %v1404, 0
        %v1443 = vsel %vm573, %v1405, 0
        %v1446 = vsel %vm573, %v1406, 0
        %v1449 = vsel %vm573, %v1407, 0
        %v1452 = vsel %vm573, %v1408, 0
        %1454 = vmatprep.subr.bf16.mxu0 0
        %1455 = vmatpush1.bf16.msra.mxu0 %v564
        %1456 = vmatprep.subr.bf16.mxu0 0
        %1457 = vmatpush1.bf16.msra.mxu0 %v565
        %1458 = vmatprep.subr.bf16.mxu0 0
        %1459 = vmatpush1.bf16.msra.mxu0 %v566
        %1460 = vmatprep.subr.bf16.mxu0 0
        %1461 = vmatpush1.bf16.msra.mxu0 %v567
        %1462 = vmatprep.subr.bf16.mxu0 0
        %1463 = vmatpush1.bf16.msra.mxu0 %v624
        %1464 = vmatprep.subr.bf16.mxu0 0
        %1465 = vmatpush1.bf16.msra.mxu0 0
        %1466 = vmatprep.subr.bf16.mxu0 0
        %1467 = vmatpush1.bf16.msra.mxu0 0
        %1468 = vmatprep.subr.bf16.mxu0 0
        %1469 = vmatpush1.bf16.msra.mxu0 0
        %1470 = vmatprep.subr.bf16.mxu0 0
        %1471 = vmatpush1.bf16.msra.mxu0 0
        %1472 = vmatprep.subr.bf16.mxu0 0
        %1473 = vmatpush1.bf16.msra.mxu0 0
        %1474 = vmatprep.subr.bf16.mxu0 0
        %1475 = vmatpush1.bf16.msra.mxu0 0
        %1476 = vmatprep.subr.bf16.mxu0 0
        %1477 = vmatpush1.bf16.msra.mxu0 0
        %1478 = vmatprep.subr.bf16.mxu0 0
        %1479 = vmatpush1.bf16.msra.mxu0 0
        %1480 = vmatprep.subr.bf16.mxu0 0
        %1481 = vmatpush1.bf16.msra.mxu0 0
        %1482 = vmatprep.subr.bf16.mxu0 0
        %1483 = vmatpush1.bf16.msra.mxu0 0
        %1484 = vmatprep.subr.bf16.mxu0 0
        %1485 = vmatpush1.bf16.msra.mxu0 0
        %1486 = vmatprep.mubr.bf16.mxu0 0
        %1487 = vmatmul.mubr.bf16.gmra.mrb[0].mxu0 %v1410
        %v1488 = vpop.f32.mrb[0].mxu0
        %v1489 = vadd.f32 0.0, %v1488
        %v1490 = vpop.f32.mrb[0].mxu0
        %v1491 = vpop.f32.mrb[0].mxu0
        %v1492 = vadd.f32 0.0, %v1491
        %v1493 = vpop.f32.mrb[0].mxu0
        %1494 = vmatprep.mubr.bf16.mxu0 0
        %1495 = vmatmul.mubr.bf16.gmra.mrb[0].mxu0 %v1413
        %v1496 = vpop.f32.mrb[0].mxu0
        %v1497 = vadd.f32 0.0, %v1496
        %v1498 = vpop.f32.mrb[0].mxu0
        %v1499 = vpop.f32.mrb[0].mxu0
        %v1500 = vadd.f32 0.0, %v1499
        %v1501 = vpop.f32.mrb[0].mxu0
        %1502 = vmatprep.mubr.bf16.mxu0 0
        %1503 = vmatmul.mubr.bf16.gmra.mrb[0].mxu0 %v1416
        %v1504 = vpop.f32.mrb[0].mxu0
        %v1505 = vadd.f32 0.0, %v1504
        %v1506 = vpop.f32.mrb[0].mxu0
        %v1507 = vpop.f32.mrb[0].mxu0
        %v1508 = vadd.f32 0.0, %v1507
        %v1509 = vpop.f32.mrb[0].mxu0
        %1510 = vmatprep.mubr.bf16.mxu0 0
        %1511 = vmatmul.mubr.bf16.gmra.mrb[0].mxu0 %v1419
        %v1512 = vpop.f32.mrb[0].mxu0
        %v1513 = vadd.f32 0.0, %v1512
        %v1514 = vpop.f32.mrb[0].mxu0
        %v1515 = vpop.f32.mrb[0].mxu0
        %v1516 = vadd.f32 0.0, %v1515
        %v1517 = vpop.f32.mrb[0].mxu0
        %1518 = vmatprep.mubr.bf16.mxu0 0
        %1519 = vmatmul.mubr.bf16.gmra.mrb[0].mxu0 %v1422
        %v1520 = vpop.f32.mrb[0].mxu0
        %v1521 = vadd.f32 0.0, %v1520
        %v1522 = vpop.f32.mrb[0].mxu0
        %v1523 = vpop.f32.mrb[0].mxu0
        %v1524 = vadd.f32 0.0, %v1523
        %v1525 = vpop.f32.mrb[0].mxu0
        %1526 = vmatprep.mubr.bf16.mxu0 0
        %1527 = vmatmul.mubr.bf16.gmra.mrb[0].mxu0 %v1425
        %v1528 = vpop.f32.mrb[0].mxu0
        %v1529 = vadd.f32 0.0, %v1528
        %v1530 = vpop.f32.mrb[0].mxu0
        %v1531 = vpop.f32.mrb[0].mxu0
        %v1532 = vadd.f32 0.0, %v1531
        %v1533 = vpop.f32.mrb[0].mxu0
        %1534 = vmatprep.mubr.bf16.mxu0 0
        %1535 = vmatmul.mubr.bf16.gmra.mrb[0].mxu0 %v1428
        %v1536 = vpop.f32.mrb[0].mxu0
        %v1537 = vadd.f32 0.0, %v1536
        %v1538 = vpop.f32.mrb[0].mxu0
        %v1539 = vpop.f32.mrb[0].mxu0
        %v1540 = vadd.f32 0.0, %v1539
        %v1541 = vpop.f32.mrb[0].mxu0
        %1542 = vmatprep.mubr.bf16.mxu0 0
        %1543 = vmatmul.mubr.bf16.gmra.mrb[0].mxu0 %v1431
        %v1544 = vpop.f32.mrb[0].mxu0
        %v1545 = vadd.f32 0.0, %v1544
        %v1546 = vpop.f32.mrb[0].mxu0
        %v1547 = vpop.f32.mrb[0].mxu0
        %v1548 = vadd.f32 0.0, %v1547
        %v1549 = vpop.f32.mrb[0].mxu0
        %1550 = vmatprep.mubr.bf16.mxu0 0
        %1551 = vmatmul.mubr.bf16.gmra.mrb[0].mxu0 %v1434
        %v1552 = vpop.f32.mrb[0].mxu0
        %v1553 = vadd.f32 0.0, %v1552
        %v1554 = vpop.f32.mrb[0].mxu0
        %v1555 = vpop.f32.mrb[0].mxu0
        %v1556 = vadd.f32 0.0, %v1555
        %v1557 = vpop.f32.mrb[0].mxu0
        %1558 = vmatprep.mubr.bf16.mxu0 0
        %1559 = vmatmul.mubr.bf16.gmra.mrb[0].mxu0 %v1437
        %v1560 = vpop.f32.mrb[0].mxu0
        %v1561 = vadd.f32 0.0, %v1560
        %v1562 = vpop.f32.mrb[0].mxu0
        %v1563 = vpop.f32.mrb[0].mxu0
        %v1564 = vadd.f32 0.0, %v1563
        %v1565 = vpop.f32.mrb[0].mxu0
        %1566 = vmatprep.mubr.bf16.mxu0 0
        %1567 = vmatmul.mubr.bf16.gmra.mrb[0].mxu0 %v1440
        %v1568 = vpop.f32.mrb[0].mxu0
        %v1569 = vadd.f32 0.0, %v1568
        %v1570 = vpop.f32.mrb[0].mxu0
        %v1571 = vpop.f32.mrb[0].mxu0
        %v1572 = vadd.f32 0.0, %v1571
        %v1573 = vpop.f32.mrb[0].mxu0
        %1574 = vmatprep.mubr.bf16.mxu0 0
        %1575 = vmatmul.mubr.bf16.gmra.mrb[0].mxu0 %v1443
        %v1576 = vpop.f32.mrb[0].mxu0
        %v1577 = vadd.f32 0.0, %v1576
        %v1578 = vpop.f32.mrb[0].mxu0
        %v1579 = vpop.f32.mrb[0].mxu0
        %v1580 = vadd.f32 0.0, %v1579
        %v1581 = vpop.f32.mrb[0].mxu0
        %1582 = vmatprep.mubr.bf16.mxu0 0
        %1583 = vmatmul.mubr.bf16.gmra.mrb[0].mxu0 %v1446
        %v1584 = vpop.f32.mrb[0].mxu0
        %v1585 = vadd.f32 0.0, %v1584
        %v1586 = vpop.f32.mrb[0].mxu0
        %v1587 = vpop.f32.mrb[0].mxu0
        %v1588 = vadd.f32 0.0, %v1587
        %v1589 = vpop.f32.mrb[0].mxu0
        %1590 = vmatprep.mubr.bf16.mxu0 0
        %1591 = vmatmul.mubr.bf16.gmra.mrb[0].mxu0 %v1449
        %v1592 = vpop.f32.mrb[0].mxu0
        %v1593 = vadd.f32 0.0, %v1592
        %v1594 = vpop.f32.mrb[0].mxu0
        %v1595 = vpop.f32.mrb[0].mxu0
        %v1596 = vadd.f32 0.0, %v1595
        %v1597 = vpop.f32.mrb[0].mxu0
        %1598 = vmatprep.mubr.bf16.mxu0 0
        %1599 = vmatmul.mubr.bf16.gmra.mrb[0].mxu0 %v1452
        %v1600 = vpop.f32.mrb[0].mxu0
        %v1601 = vadd.f32 0.0, %v1600
        %v1602 = vpop.f32.mrb[0].mxu0
        %v1603 = vpop.f32.mrb[0].mxu0
        %v1604 = vadd.f32 0.0, %v1603
        %v1605 = vpop.f32.mrb[0].mxu0
        %1606 = vdwg.mxu0
        %v1607 = vmul.f32 %v1489, %v783
        %v1608 = vmul.f32 %v1492, %v783
        %v1609 = vmul.f32 %v1497, %v783
        %v1610 = vmul.f32 %v1500, %v783
        %v1611 = vmul.f32 %v1505, %v783
        %v1612 = vmul.f32 %v1508, %v783
        %v1613 = vmul.f32 %v1513, %v783
        %v1614 = vmul.f32 %v1516, %v783
        %v1615 = vmul.f32 %v1521, %v783
        %v1616 = vmul.f32 %v1524, %v783
        %v1617 = vmul.f32 %v1529, %v783
        %v1618 = vmul.f32 %v1532, %v783
        %v1619 = vmul.f32 %v1537, %v783
        %v1620 = vmul.f32 %v1540, %v783
        %v1621 = vmul.f32 %v1545, %v783
        %v1622 = vmul.f32 %v1548, %v783
        %v1623 = vmul.f32 %v1553, %v783
        %v1624 = vmul.f32 %v1556, %v783
        %v1625 = vmul.f32 %v1561, %v783
        %v1626 = vmul.f32 %v1564, %v783
        %v1627 = vmul.f32 %v1569, %v783
        %v1628 = vmul.f32 %v1572, %v783
        %v1629 = vmul.f32 %v1577, %v783
        %v1630 = vmul.f32 %v1580, %v783
        %v1631 = vmul.f32 %v1585, %v783
        %v1632 = vmul.f32 %v1588, %v783
        %v1633 = vmul.f32 %v1593, %v783
        %v1634 = vmul.f32 %v1596, %v783
        %v1635 = vmul.f32 %v1601, %v783
        %v1636 = vmul.f32 %v1604, %v783
        %v1637 = vadd.f32 %v1607, %v819
        %v1638 = vadd.f32 %v1608, %v819
        %v1639 = vadd.f32 %v1609, %v819
        %v1640 = vadd.f32 %v1610, %v819
        %v1641 = vadd.f32 %v1611, %v819
        %v1642 = vadd.f32 %v1612, %v819
        %v1643 = vadd.f32 %v1613, %v819
        %v1644 = vadd.f32 %v1614, %v819
        %v1645 = vadd.f32 %v1615, %v819
        %v1646 = vadd.f32 %v1616, %v819
        %v1647 = vadd.f32 %v1617, %v819
        %v1648 = vadd.f32 %v1618, %v819
        %v1649 = vadd.f32 %v1619, %v819
        %v1650 = vadd.f32 %v1620, %v819
        %v1651 = vadd.f32 %v1621, %v819
        %v1652 = vadd.f32 %v1622, %v819
        %v1653 = vadd.f32 %v1623, %v819
        %v1654 = vadd.f32 %v1624, %v819
        %v1655 = vadd.f32 %v1625, %v819
        %v1656 = vadd.f32 %v1626, %v819
        %v1657 = vadd.f32 %v1627, %v819
        %v1658 = vadd.f32 %v1628, %v819
        %v1659 = vadd.f32 %v1629, %v819
        %v1660 = vadd.f32 %v1630, %v819
        %v1661 = vadd.f32 %v1631, %v819
        %v1662 = vadd.f32 %v1632, %v819
        %v1663 = vadd.f32 %v1633, %v819
        %v1664 = vadd.f32 %v1634, %v819
        %v1665 = vadd.f32 %v1635, %v819
        %v1666 = vadd.f32 %v1636, %v819
        %v1667 = vmax.f32 %v1637, 0.0
        %v1668 = vmax.f32 %v1638, 0.0
        %v1669 = vmax.f32 %v1639, 0.0
        %v1670 = vmax.f32 %v1640, 0.0
        %v1671 = vmax.f32 %v1641, 0.0
        %v1672 = vmax.f32 %v1642, 0.0
        %v1673 = vmax.f32 %v1643, 0.0
        %v1674 = vmax.f32 %v1644, 0.0
        %v1675 = vmax.f32 %v1645, 0.0
        %v1676 = vmax.f32 %v1646, 0.0
        %v1677 = vmax.f32 %v1647, 0.0
        %v1678 = vmax.f32 %v1648, 0.0
        %v1679 = vmax.f32 %v1649, 0.0
        %v1680 = vmax.f32 %v1650, 0.0
        %v1681 = vmax.f32 %v1651, 0.0
        %v1682 = vmax.f32 %v1652, 0.0
        %v1683 = vmax.f32 %v1653, 0.0
        %v1684 = vmax.f32 %v1654, 0.0
        %v1685 = vmax.f32 %v1655, 0.0
        %v1686 = vmax.f32 %v1656, 0.0
        %v1687 = vmax.f32 %v1657, 0.0
        %v1688 = vmax.f32 %v1658, 0.0
        %v1689 = vmax.f32 %v1659, 0.0
        %v1690 = vmax.f32 %v1660, 0.0
        %v1691 = vmax.f32 %v1661, 0.0
        %v1692 = vmax.f32 %v1662, 0.0
        %v1693 = vmax.f32 %v1663, 0.0
        %v1694 = vmax.f32 %v1664, 0.0
        %v1695 = vmax.f32 %v1665, 0.0
        %v1696 = vmax.f32 %v1666, 0.0
        %v1697 = vld [vmem:[%s415] sm:$0xf]
        %v1698 = vld [vmem:[%s415 + $0x4] sm:$0xf]
        %v1699 = vld [vmem:[%s415 + $0x8] sm:$0xf]
        %v1700 = vld [vmem:[%s415 + $0xc] sm:$0xf]
        %v1701 = vld [vmem:[%s415 + $0x10] sm:$0xf]
        %v1702 = vld [vmem:[%s415 + $0x14] sm:$0xf]
        %v1703 = vld [vmem:[%s415 + $0x18] sm:$0xf]
        %v1704 = vld [vmem:[%s415 + $0x1c] sm:$0xf]
        %v1705 = vld [vmem:[%s415 + $0x20] sm:$0xf]
        %v1706 = vld [vmem:[%s415 + $0x24] sm:$0xf]
        %v1707 = vld [vmem:[%s415 + $0x28] sm:$0xf]
        %v1708 = vld [vmem:[%s415 + $0x2c] sm:$0xf]
        %v1709 = vld [vmem:[%s415 + $0x30] sm:$0xf]
        %v1710 = vld [vmem:[%s415 + $0x34] sm:$0xf]
        %v1711 = vld [vmem:[%s415 + $0x38] sm:$0xf]
        %v1712 = vld [vmem:[%s415 + $0x3c] sm:$0xf]
        %v1713 = vld [vmem:[%s415 + $0x40] sm:$0xf]
        %v1714 = vld [vmem:[%s415 + $0x44] sm:$0xf]
        %v1715 = vld [vmem:[%s415 + $0x48] sm:$0xf]
        %v1716 = vld [vmem:[%s415 + $0x4c] sm:$0xf]
        %v1717 = vld [vmem:[%s415 + $0x50] sm:$0xf]
        %v1718 = vld [vmem:[%s415 + $0x54] sm:$0xf]
        %v1719 = vld [vmem:[%s415 + $0x58] sm:$0xf]
        %v1720 = vld [vmem:[%s415 + $0x5c] sm:$0xf]
        %v1721 = vld [vmem:[%s415 + $0x60] sm:$0xf]
        %v1722 = vld [vmem:[%s415 + $0x64] sm:$0xf]
        %v1723 = vld [vmem:[%s415 + $0x68] sm:$0xf]
        %v1724 = vld [vmem:[%s415 + $0x6c] sm:$0xf]
        %v1725 = vld [vmem:[%s415 + $0x70] sm:$0xf]
        %v1726 = vld [vmem:[%s415 + $0x74] sm:$0xf]
        %v1757 = vunpack.c.l.b16 %v1697
        %v1758 = vunpack.c.l.b16 %v1698
        %v1759 = vunpack.c.l.b16 %v1699
        %v1760 = vunpack.c.l.b16 %v1700
        %v1761 = vunpack.c.l.b16 %v1701
        %v1762 = vunpack.c.l.b16 %v1702
        %v1763 = vunpack.c.l.b16 %v1703
        %v1764 = vunpack.c.l.b16 %v1704
        %v1765 = vunpack.c.l.b16 %v1705
        %v1766 = vunpack.c.l.b16 %v1706
        %v1767 = vunpack.c.l.b16 %v1707
        %v1768 = vunpack.c.l.b16 %v1708
        %v1769 = vunpack.c.l.b16 %v1709
        %v1770 = vunpack.c.l.b16 %v1710
        %v1771 = vunpack.c.l.b16 %v1711
        %v1772 = vunpack.c.l.b16 %v1712
        %v1773 = vunpack.c.l.b16 %v1713
        %v1774 = vunpack.c.l.b16 %v1714
        %v1775 = vunpack.c.l.b16 %v1715
        %v1776 = vunpack.c.l.b16 %v1716
        %v1777 = vunpack.c.l.b16 %v1717
        %v1778 = vunpack.c.l.b16 %v1718
        %v1779 = vunpack.c.l.b16 %v1719
        %v1780 = vunpack.c.l.b16 %v1720
        %v1781 = vunpack.c.l.b16 %v1721
        %v1782 = vunpack.c.l.b16 %v1722
        %v1783 = vunpack.c.l.b16 %v1723
        %v1784 = vunpack.c.l.b16 %v1724
        %v1785 = vunpack.c.l.b16 %v1725
        %v1786 = vunpack.c.l.b16 %v1726
        %v1787 = vpack.c.b16 %v1758, %v1757
        %v1788 = vpack.c.b16 %v1760, %v1759
        %v1789 = vpack.c.b16 %v1762, %v1761
        %v1790 = vpack.c.b16 %v1764, %v1763
        %v1791 = vpack.c.b16 %v1766, %v1765
        %v1792 = vpack.c.b16 %v1768, %v1767
        %v1793 = vpack.c.b16 %v1770, %v1769
        %v1794 = vpack.c.b16 %v1772, %v1771
        %v1795 = vpack.c.b16 %v1774, %v1773
        %v1796 = vpack.c.b16 %v1776, %v1775
        %v1797 = vpack.c.b16 %v1778, %v1777
        %v1798 = vpack.c.b16 %v1780, %v1779
        %v1799 = vpack.c.b16 %v1782, %v1781
        %v1800 = vpack.c.b16 %v1784, %v1783
        %v1801 = vpack.c.b16 %v1786, %v1785
        %v1803 = vsel %vm573, %v1787, 0
        %v1806 = vsel %vm573, %v1788, 0
        %v1809 = vsel %vm573, %v1789, 0
        %v1812 = vsel %vm573, %v1790, 0
        %v1815 = vsel %vm573, %v1791, 0
        %v1818 = vsel %vm573, %v1792, 0
        %v1821 = vsel %vm573, %v1793, 0
        %v1824 = vsel %vm573, %v1794, 0
        %v1827 = vsel %vm573, %v1795, 0
        %v1830 = vsel %vm573, %v1796, 0
        %v1833 = vsel %vm573, %v1797, 0
        %v1836 = vsel %vm573, %v1798, 0
        %v1839 = vsel %vm573, %v1799, 0
        %v1842 = vsel %vm573, %v1800, 0
        %v1845 = vsel %vm573, %v1801, 0
        %1847 = vmatprep.subr.bf16.mxu0 0
        %1848 = vmatpush1.bf16.msra.mxu0 %v564
        %1849 = vmatprep.subr.bf16.mxu0 0
        %1850 = vmatpush1.bf16.msra.mxu0 %v565
        %1851 = vmatprep.subr.bf16.mxu0 0
        %1852 = vmatpush1.bf16.msra.mxu0 %v566
        %1853 = vmatprep.subr.bf16.mxu0 0
        %1854 = vmatpush1.bf16.msra.mxu0 %v567
        %1855 = vmatprep.subr.bf16.mxu0 0
        %1856 = vmatpush1.bf16.msra.mxu0 %v624
        %1857 = vmatprep.subr.bf16.mxu0 0
        %1858 = vmatpush1.bf16.msra.mxu0 0
        %1859 = vmatprep.subr.bf16.mxu0 0
        %1860 = vmatpush1.bf16.msra.mxu0 0
        %1861 = vmatprep.subr.bf16.mxu0 0
        %1862 = vmatpush1.bf16.msra.mxu0 0
        %1863 = vmatprep.subr.bf16.mxu0 0
        %1864 = vmatpush1.bf16.msra.mxu0 0
        %1865 = vmatprep.subr.bf16.mxu0 0
        %1866 = vmatpush1.bf16.msra.mxu0 0
        %1867 = vmatprep.subr.bf16.mxu0 0
        %1868 = vmatpush1.bf16.msra.mxu0 0
        %1869 = vmatprep.subr.bf16.mxu0 0
        %1870 = vmatpush1.bf16.msra.mxu0 0
        %1871 = vmatprep.subr.bf16.mxu0 0
        %1872 = vmatpush1.bf16.msra.mxu0 0
        %1873 = vmatprep.subr.bf16.mxu0 0
        %1874 = vmatpush1.bf16.msra.mxu0 0
        %1875 = vmatprep.subr.bf16.mxu0 0
        %1876 = vmatpush1.bf16.msra.mxu0 0
        %1877 = vmatprep.subr.bf16.mxu0 0
        %1878 = vmatpush1.bf16.msra.mxu0 0
        %1879 = vmatprep.mubr.bf16.mxu0 0
        %1880 = vmatmul.mubr.bf16.gmra.mrb[0].mxu0 %v1803
        %v1881 = vpop.f32.mrb[0].mxu0
        %v1882 = vadd.f32 0.0, %v1881
        %v1883 = vpop.f32.mrb[0].mxu0
        %v1884 = vpop.f32.mrb[0].mxu0
        %v1885 = vadd.f32 0.0, %v1884
        %v1886 = vpop.f32.mrb[0].mxu0
        %1887 = vmatprep.mubr.bf16.mxu0 0
        %1888 = vmatmul.mubr.bf16.gmra.mrb[0].mxu0 %v1806
        %v1889 = vpop.f32.mrb[0].mxu0
        %v1890 = vadd.f32 0.0, %v1889
        %v1891 = vpop.f32.mrb[0].mxu0
        %v1892 = vpop.f32.mrb[0].mxu0
        %v1893 = vadd.f32 0.0, %v1892
        %v1894 = vpop.f32.mrb[0].mxu0
        %1895 = vmatprep.mubr.bf16.mxu0 0
        %1896 = vmatmul.mubr.bf16.gmra.mrb[0].mxu0 %v1809
        %v1897 = vpop.f32.mrb[0].mxu0
        %v1898 = vadd.f32 0.0, %v1897
        %v1899 = vpop.f32.mrb[0].mxu0
        %v1900 = vpop.f32.mrb[0].mxu0
        %v1901 = vadd.f32 0.0, %v1900
        %v1902 = vpop.f32.mrb[0].mxu0
        %1903 = vmatprep.mubr.bf16.mxu0 0
        %1904 = vmatmul.mubr.bf16.gmra.mrb[0].mxu0 %v1812
        %v1905 = vpop.f32.mrb[0].mxu0
        %v1906 = vadd.f32 0.0, %v1905
        %v1907 = vpop.f32.mrb[0].mxu0
        %v1908 = vpop.f32.mrb[0].mxu0
        %v1909 = vadd.f32 0.0, %v1908
        %v1910 = vpop.f32.mrb[0].mxu0
        %1911 = vmatprep.mubr.bf16.mxu0 0
        %1912 = vmatmul.mubr.bf16.gmra.mrb[0].mxu0 %v1815
        %v1913 = vpop.f32.mrb[0].mxu0
        %v1914 = vadd.f32 0.0, %v1913
        %v1915 = vpop.f32.mrb[0].mxu0
        %v1916 = vpop.f32.mrb[0].mxu0
        %v1917 = vadd.f32 0.0, %v1916
        %v1918 = vpop.f32.mrb[0].mxu0
        %1919 = vmatprep.mubr.bf16.mxu0 0
        %1920 = vmatmul.mubr.bf16.gmra.mrb[0].mxu0 %v1818
        %v1921 = vpop.f32.mrb[0].mxu0
        %v1922 = vadd.f32 0.0, %v1921
        %v1923 = vpop.f32.mrb[0].mxu0
        %v1924 = vpop.f32.mrb[0].mxu0
        %v1925 = vadd.f32 0.0, %v1924
        %v1926 = vpop.f32.mrb[0].mxu0
        %1927 = vmatprep.mubr.bf16.mxu0 0
        %1928 = vmatmul.mubr.bf16.gmra.mrb[0].mxu0 %v1821
        %v1929 = vpop.f32.mrb[0].mxu0
        %v1930 = vadd.f32 0.0, %v1929
        %v1931 = vpop.f32.mrb[0].mxu0
        %v1932 = vpop.f32.mrb[0].mxu0
        %v1933 = vadd.f32 0.0, %v1932
        %v1934 = vpop.f32.mrb[0].mxu0
        %1935 = vmatprep.mubr.bf16.mxu0 0
        %1936 = vmatmul.mubr.bf16.gmra.mrb[0].mxu0 %v1824
        %v1937 = vpop.f32.mrb[0].mxu0
        %v1938 = vadd.f32 0.0, %v1937
        %v1939 = vpop.f32.mrb[0].mxu0
        %v1940 = vpop.f32.mrb[0].mxu0
        %v1941 = vadd.f32 0.0, %v1940
        %v1942 = vpop.f32.mrb[0].mxu0
        %1943 = vmatprep.mubr.bf16.mxu0 0
        %1944 = vmatmul.mubr.bf16.gmra.mrb[0].mxu0 %v1827
        %v1945 = vpop.f32.mrb[0].mxu0
        %v1946 = vadd.f32 0.0, %v1945
        %v1947 = vpop.f32.mrb[0].mxu0
        %v1948 = vpop.f32.mrb[0].mxu0
        %v1949 = vadd.f32 0.0, %v1948
        %v1950 = vpop.f32.mrb[0].mxu0
        %1951 = vmatprep.mubr.bf16.mxu0 0
        %1952 = vmatmul.mubr.bf16.gmra.mrb[0].mxu0 %v1830
        %v1953 = vpop.f32.mrb[0].mxu0
        %v1954 = vadd.f32 0.0, %v1953
        %v1955 = vpop.f32.mrb[0].mxu0
        %v1956 = vpop.f32.mrb[0].mxu0
        %v1957 = vadd.f32 0.0, %v1956
        %v1958 = vpop.f32.mrb[0].mxu0
        %1959 = vmatprep.mubr.bf16.mxu0 0
        %1960 = vmatmul.mubr.bf16.gmra.mrb[0].mxu0 %v1833
        %v1961 = vpop.f32.mrb[0].mxu0
        %v1962 = vadd.f32 0.0, %v1961
        %v1963 = vpop.f32.mrb[0].mxu0
        %v1964 = vpop.f32.mrb[0].mxu0
        %v1965 = vadd.f32 0.0, %v1964
        %v1966 = vpop.f32.mrb[0].mxu0
        %1967 = vmatprep.mubr.bf16.mxu0 0
        %1968 = vmatmul.mubr.bf16.gmra.mrb[0].mxu0 %v1836
        %v1969 = vpop.f32.mrb[0].mxu0
        %v1970 = vadd.f32 0.0, %v1969
        %v1971 = vpop.f32.mrb[0].mxu0
        %v1972 = vpop.f32.mrb[0].mxu0
        %v1973 = vadd.f32 0.0, %v1972
        %v1974 = vpop.f32.mrb[0].mxu0
        %1975 = vmatprep.mubr.bf16.mxu0 0
        %1976 = vmatmul.mubr.bf16.gmra.mrb[0].mxu0 %v1839
        %v1977 = vpop.f32.mrb[0].mxu0
        %v1978 = vadd.f32 0.0, %v1977
        %v1979 = vpop.f32.mrb[0].mxu0
        %v1980 = vpop.f32.mrb[0].mxu0
        %v1981 = vadd.f32 0.0, %v1980
        %v1982 = vpop.f32.mrb[0].mxu0
        %1983 = vmatprep.mubr.bf16.mxu0 0
        %1984 = vmatmul.mubr.bf16.gmra.mrb[0].mxu0 %v1842
        %v1985 = vpop.f32.mrb[0].mxu0
        %v1986 = vadd.f32 0.0, %v1985
        %v1987 = vpop.f32.mrb[0].mxu0
        %v1988 = vpop.f32.mrb[0].mxu0
        %v1989 = vadd.f32 0.0, %v1988
        %v1990 = vpop.f32.mrb[0].mxu0
        %1991 = vmatprep.mubr.bf16.mxu0 0
        %1992 = vmatmul.mubr.bf16.gmra.mrb[0].mxu0 %v1845
        %v1993 = vpop.f32.mrb[0].mxu0
        %v1994 = vadd.f32 0.0, %v1993
        %v1995 = vpop.f32.mrb[0].mxu0
        %v1996 = vpop.f32.mrb[0].mxu0
        %v1997 = vadd.f32 0.0, %v1996
        %v1998 = vpop.f32.mrb[0].mxu0
        %1999 = vdwg.mxu0
        %v2000 = vmul.f32 %v1882, %v783
        %v2001 = vmul.f32 %v1885, %v783
        %v2002 = vmul.f32 %v1890, %v783
        %v2003 = vmul.f32 %v1893, %v783
        %v2004 = vmul.f32 %v1898, %v783
        %v2005 = vmul.f32 %v1901, %v783
        %v2006 = vmul.f32 %v1906, %v783
        %v2007 = vmul.f32 %v1909, %v783
        %v2008 = vmul.f32 %v1914, %v783
        %v2009 = vmul.f32 %v1917, %v783
        %v2010 = vmul.f32 %v1922, %v783
        %v2011 = vmul.f32 %v1925, %v783
        %v2012 = vmul.f32 %v1930, %v783
        %v2013 = vmul.f32 %v1933, %v783
        %v2014 = vmul.f32 %v1938, %v783
        %v2015 = vmul.f32 %v1941, %v783
        %v2016 = vmul.f32 %v1946, %v783
        %v2017 = vmul.f32 %v1949, %v783
        %v2018 = vmul.f32 %v1954, %v783
        %v2019 = vmul.f32 %v1957, %v783
        %v2020 = vmul.f32 %v1962, %v783
        %v2021 = vmul.f32 %v1965, %v783
        %v2022 = vmul.f32 %v1970, %v783
        %v2023 = vmul.f32 %v1973, %v783
        %v2024 = vmul.f32 %v1978, %v783
        %v2025 = vmul.f32 %v1981, %v783
        %v2026 = vmul.f32 %v1986, %v783
        %v2027 = vmul.f32 %v1989, %v783
        %v2028 = vmul.f32 %v1994, %v783
        %v2029 = vmul.f32 %v1997, %v783
        %v2030 = vadd.f32 %v2000, %v819
        %v2031 = vadd.f32 %v2001, %v819
        %v2032 = vadd.f32 %v2002, %v819
        %v2033 = vadd.f32 %v2003, %v819
        %v2034 = vadd.f32 %v2004, %v819
        %v2035 = vadd.f32 %v2005, %v819
        %v2036 = vadd.f32 %v2006, %v819
        %v2037 = vadd.f32 %v2007, %v819
        %v2038 = vadd.f32 %v2008, %v819
        %v2039 = vadd.f32 %v2009, %v819
        %v2040 = vadd.f32 %v2010, %v819
        %v2041 = vadd.f32 %v2011, %v819
        %v2042 = vadd.f32 %v2012, %v819
        %v2043 = vadd.f32 %v2013, %v819
        %v2044 = vadd.f32 %v2014, %v819
        %v2045 = vadd.f32 %v2015, %v819
        %v2046 = vadd.f32 %v2016, %v819
        %v2047 = vadd.f32 %v2017, %v819
        %v2048 = vadd.f32 %v2018, %v819
        %v2049 = vadd.f32 %v2019, %v819
        %v2050 = vadd.f32 %v2020, %v819
        %v2051 = vadd.f32 %v2021, %v819
        %v2052 = vadd.f32 %v2022, %v819
        %v2053 = vadd.f32 %v2023, %v819
        %v2054 = vadd.f32 %v2024, %v819
        %v2055 = vadd.f32 %v2025, %v819
        %v2056 = vadd.f32 %v2026, %v819
        %v2057 = vadd.f32 %v2027, %v819
        %v2058 = vadd.f32 %v2028, %v819
        %v2059 = vadd.f32 %v2029, %v819
        %v2060 = vmax.f32 %v2030, 0.0
        %v2061 = vmax.f32 %v2031, 0.0
        %v2062 = vmax.f32 %v2032, 0.0
        %v2063 = vmax.f32 %v2033, 0.0
        %v2064 = vmax.f32 %v2034, 0.0
        %v2065 = vmax.f32 %v2035, 0.0
        %v2066 = vmax.f32 %v2036, 0.0
        %v2067 = vmax.f32 %v2037, 0.0
        %v2068 = vmax.f32 %v2038, 0.0
        %v2069 = vmax.f32 %v2039, 0.0
        %v2070 = vmax.f32 %v2040, 0.0
        %v2071 = vmax.f32 %v2041, 0.0
        %v2072 = vmax.f32 %v2042, 0.0
        %v2073 = vmax.f32 %v2043, 0.0
        %v2074 = vmax.f32 %v2044, 0.0
        %v2075 = vmax.f32 %v2045, 0.0
        %v2076 = vmax.f32 %v2046, 0.0
        %v2077 = vmax.f32 %v2047, 0.0
        %v2078 = vmax.f32 %v2048, 0.0
        %v2079 = vmax.f32 %v2049, 0.0
        %v2080 = vmax.f32 %v2050, 0.0
        %v2081 = vmax.f32 %v2051, 0.0
        %v2082 = vmax.f32 %v2052, 0.0
        %v2083 = vmax.f32 %v2053, 0.0
        %v2084 = vmax.f32 %v2054, 0.0
        %v2085 = vmax.f32 %v2055, 0.0
        %v2086 = vmax.f32 %v2056, 0.0
        %v2087 = vmax.f32 %v2057, 0.0
        %v2088 = vmax.f32 %v2058, 0.0
        %v2089 = vmax.f32 %v2059, 0.0
        %v2090 = vmax.f32 %v1667, %v2060
        %v2091 = vmax.f32 %v1668, %v2061
        %v2092 = vmax.f32 %v1669, %v2062
        %v2093 = vmax.f32 %v1670, %v2063
        %v2094 = vmax.f32 %v1671, %v2064
        %v2095 = vmax.f32 %v1672, %v2065
        %v2096 = vmax.f32 %v1673, %v2066
        %v2097 = vmax.f32 %v1674, %v2067
        %v2098 = vmax.f32 %v1675, %v2068
        %v2099 = vmax.f32 %v1676, %v2069
        %v2100 = vmax.f32 %v1677, %v2070
        %v2101 = vmax.f32 %v1678, %v2071
        %v2102 = vmax.f32 %v1679, %v2072
        %v2103 = vmax.f32 %v1680, %v2073
        %v2104 = vmax.f32 %v1681, %v2074
        %v2105 = vmax.f32 %v1682, %v2075
        %v2106 = vmax.f32 %v1683, %v2076
        %v2107 = vmax.f32 %v1684, %v2077
        %v2108 = vmax.f32 %v1685, %v2078
        %v2109 = vmax.f32 %v1686, %v2079
        %v2110 = vmax.f32 %v1687, %v2080
        %v2111 = vmax.f32 %v1688, %v2081
        %v2112 = vmax.f32 %v1689, %v2082
        %v2113 = vmax.f32 %v1690, %v2083
        %v2114 = vmax.f32 %v1691, %v2084
        %v2115 = vmax.f32 %v1692, %v2085
        %v2116 = vmax.f32 %v1693, %v2086
        %v2117 = vmax.f32 %v1694, %v2087
        %v2118 = vmax.f32 %v1695, %v2088
        %v2119 = vmax.f32 %v1696, %v2089
        %v2120 = vmax.f32 %v1274, %v2090
        %v2121 = vmax.f32 %v1275, %v2091
        %v2122 = vmax.f32 %v1276, %v2092
        %v2123 = vmax.f32 %v1277, %v2093
        %v2124 = vmax.f32 %v1278, %v2094
        %v2125 = vmax.f32 %v1279, %v2095
        %v2126 = vmax.f32 %v1280, %v2096
        %v2127 = vmax.f32 %v1281, %v2097
        %v2128 = vmax.f32 %v1282, %v2098
        %v2129 = vmax.f32 %v1283, %v2099
        %v2130 = vmax.f32 %v1284, %v2100
        %v2131 = vmax.f32 %v1285, %v2101
        %v2132 = vmax.f32 %v1286, %v2102
        %v2133 = vmax.f32 %v1287, %v2103
        %v2134 = vmax.f32 %v1288, %v2104
        %v2135 = vmax.f32 %v1289, %v2105
        %v2136 = vmax.f32 %v1290, %v2106
        %v2137 = vmax.f32 %v1291, %v2107
        %v2138 = vmax.f32 %v1292, %v2108
        %v2139 = vmax.f32 %v1293, %v2109
        %v2140 = vmax.f32 %v1294, %v2110
        %v2141 = vmax.f32 %v1295, %v2111
        %v2142 = vmax.f32 %v1296, %v2112
        %v2143 = vmax.f32 %v1297, %v2113
        %v2144 = vmax.f32 %v1298, %v2114
        %v2145 = vmax.f32 %v1299, %v2115
        %v2146 = vmax.f32 %v1300, %v2116
        %v2147 = vmax.f32 %v1301, %v2117
        %v2148 = vmax.f32 %v1302, %v2118
        %v2149 = vmax.f32 %v1303, %v2119
        %v2150 = vpack.c.bf16 %v2121, %v2120
        %v2151 = vpack.c.bf16 %v2123, %v2122
        %v2152 = vpack.c.bf16 %v2125, %v2124
        %v2153 = vpack.c.bf16 %v2127, %v2126
        %v2154 = vpack.c.bf16 %v2129, %v2128
        %v2155 = vpack.c.bf16 %v2131, %v2130
        %v2156 = vpack.c.bf16 %v2133, %v2132
        %v2157 = vpack.c.bf16 %v2135, %v2134
        %v2158 = vpack.c.bf16 %v2137, %v2136
        %v2159 = vpack.c.bf16 %v2139, %v2138
        %v2160 = vpack.c.bf16 %v2141, %v2140
        %v2161 = vpack.c.bf16 %v2143, %v2142
        %v2162 = vpack.c.bf16 %v2145, %v2144
        %v2163 = vpack.c.bf16 %v2147, %v2146
        %v2164 = vpack.c.bf16 %v2149, %v2148
        %v2180 = vunpack.c.l.b16 %v2150
        %v2181 = vunpack.c.h.b16 %v2150
        %v2182 = vunpack.c.l.b16 %v2151
        %v2183 = vunpack.c.h.b16 %v2151
        %v2184 = vunpack.c.l.b16 %v2152
        %v2185 = vunpack.c.h.b16 %v2152
        %v2186 = vunpack.c.l.b16 %v2153
        %v2187 = vunpack.c.h.b16 %v2153
        %v2188 = vunpack.c.l.b16 %v2154
        %v2189 = vunpack.c.h.b16 %v2154
        %v2190 = vunpack.c.l.b16 %v2155
        %v2191 = vunpack.c.h.b16 %v2155
        %v2192 = vunpack.c.l.b16 %v2156
        %v2193 = vunpack.c.h.b16 %v2156
        %v2194 = vunpack.c.l.b16 %v2157
        %v2195 = vunpack.c.h.b16 %v2157
        %v2196 = vunpack.c.l.b16 %v2158
        %v2197 = vunpack.c.h.b16 %v2158
        %v2198 = vunpack.c.l.b16 %v2159
        %v2199 = vunpack.c.h.b16 %v2159
        %v2200 = vunpack.c.l.b16 %v2160
        %v2201 = vunpack.c.h.b16 %v2160
        %v2202 = vunpack.c.l.b16 %v2161
        %v2203 = vunpack.c.h.b16 %v2161
        %v2204 = vunpack.c.l.b16 %v2162
        %v2205 = vunpack.c.h.b16 %v2162
        %v2206 = vunpack.c.l.b16 %v2163
        %v2207 = vunpack.c.h.b16 %v2163
        %v2208 = vunpack.c.l.b16 %v2164
        %v2209 = vunpack.c.h.b16 %v2164
        %v2210 = vpack.c.b16 %v2180, %v2180
        %v2211 = vpack.c.b16 %v2181, %v2181
        %v2212 = vpack.c.b16 %v2182, %v2182
        %v2213 = vpack.c.b16 %v2183, %v2183
        %v2214 = vpack.c.b16 %v2184, %v2184
        %v2215 = vpack.c.b16 %v2185, %v2185
        %v2216 = vpack.c.b16 %v2186, %v2186
        %v2217 = vpack.c.b16 %v2187, %v2187
        %v2218 = vpack.c.b16 %v2188, %v2188
        %v2219 = vpack.c.b16 %v2189, %v2189
        %v2220 = vpack.c.b16 %v2190, %v2190
        %v2221 = vpack.c.b16 %v2191, %v2191
        %v2222 = vpack.c.b16 %v2192, %v2192
        %v2223 = vpack.c.b16 %v2193, %v2193
        %v2224 = vpack.c.b16 %v2194, %v2194
        %v2225 = vpack.c.b16 %v2195, %v2195
        %v2226 = vpack.c.b16 %v2196, %v2196
        %v2227 = vpack.c.b16 %v2197, %v2197
        %v2228 = vpack.c.b16 %v2198, %v2198
        %v2229 = vpack.c.b16 %v2199, %v2199
        %v2230 = vpack.c.b16 %v2200, %v2200
        %v2231 = vpack.c.b16 %v2201, %v2201
        %v2232 = vpack.c.b16 %v2202, %v2202
        %v2233 = vpack.c.b16 %v2203, %v2203
        %v2234 = vpack.c.b16 %v2204, %v2204
        %v2235 = vpack.c.b16 %v2205, %v2205
        %v2236 = vpack.c.b16 %v2206, %v2206
        %v2237 = vpack.c.b16 %v2207, %v2207
        %v2238 = vpack.c.b16 %v2208, %v2208
        %v2239 = vpack.c.b16 %v2209, %v2209
        %vm2270 = vcmask 257024
        %2271 = vst.msk [vmem:[%s364] sm:$0xf] %vm2270, %v2210
        %2272 = vst.msk [vmem:[%s364 + $0x4] sm:$0xf] %vm2270, %v2211
        %2273 = vst.msk [vmem:[%s364 + $0x8] sm:$0xf] %vm2270, %v2212
        %2274 = vst.msk [vmem:[%s364 + $0xc] sm:$0xf] %vm2270, %v2213
        %2275 = vst.msk [vmem:[%s364 + $0x10] sm:$0xf] %vm2270, %v2214
        %2276 = vst.msk [vmem:[%s364 + $0x14] sm:$0xf] %vm2270, %v2215
        %2277 = vst.msk [vmem:[%s364 + $0x18] sm:$0xf] %vm2270, %v2216
        %2278 = vst.msk [vmem:[%s364 + $0x1c] sm:$0xf] %vm2270, %v2217
        %2279 = vst.msk [vmem:[%s364 + $0x20] sm:$0xf] %vm2270, %v2218
        %2280 = vst.msk [vmem:[%s364 + $0x24] sm:$0xf] %vm2270, %v2219
        %2281 = vst.msk [vmem:[%s364 + $0x28] sm:$0xf] %vm2270, %v2220
        %2282 = vst.msk [vmem:[%s364 + $0x2c] sm:$0xf] %vm2270, %v2221
        %2283 = vst.msk [vmem:[%s364 + $0x30] sm:$0xf] %vm2270, %v2222
        %2284 = vst.msk [vmem:[%s364 + $0x34] sm:$0xf] %vm2270, %v2223
        %2285 = vst.msk [vmem:[%s364 + $0x38] sm:$0xf] %vm2270, %v2224
        %2286 = vst.msk [vmem:[%s364 + $0x3c] sm:$0xf] %vm2270, %v2225
        %2287 = vst.msk [vmem:[%s364 + $0x40] sm:$0xf] %vm2270, %v2226
        %2288 = vst.msk [vmem:[%s364 + $0x44] sm:$0xf] %vm2270, %v2227
        %2289 = vst.msk [vmem:[%s364 + $0x48] sm:$0xf] %vm2270, %v2228
        %2290 = vst.msk [vmem:[%s364 + $0x4c] sm:$0xf] %vm2270, %v2229
        %2291 = vst.msk [vmem:[%s364 + $0x50] sm:$0xf] %vm2270, %v2230
        %2292 = vst.msk [vmem:[%s364 + $0x54] sm:$0xf] %vm2270, %v2231
        %2293 = vst.msk [vmem:[%s364 + $0x58] sm:$0xf] %vm2270, %v2232
        %2294 = vst.msk [vmem:[%s364 + $0x5c] sm:$0xf] %vm2270, %v2233
        %2295 = vst.msk [vmem:[%s364 + $0x60] sm:$0xf] %vm2270, %v2234
        %2296 = vst.msk [vmem:[%s364 + $0x64] sm:$0xf] %vm2270, %v2235
        %2297 = vst.msk [vmem:[%s364 + $0x68] sm:$0xf] %vm2270, %v2236
        %2298 = vst.msk [vmem:[%s364 + $0x6c] sm:$0xf] %vm2270, %v2237
        %2299 = vst.msk [vmem:[%s364 + $0x70] sm:$0xf] %vm2270, %v2238
        %2300 = vst.msk [vmem:[%s364 + $0x74] sm:$0xf] %vm2270, %v2239
        %s2301 = sand.u32 %s193, 1
        %s2302 = sand.u32 %s193, 1
        %s2303 = smul.addr %s2302, 120
        %s2304 = scalar_lea.vmem [#allocation2], %s2303
        // Predicated region
        $region49: #{net3layers_forward.4} parent=47 // pred_check
          %p2305 = pneg %p203
        $region50: #{net3layers_forward.4} parent=47 // pred_check_branch
          %2307 = sbr.rel (%p2305) target = $region52
        $region51: #{net3layers_forward.4} parent=47 // pred_region
          %s2308 = smul.u32 30, %s18
          %s2309 = ssub.s32 57, %s2308
          %p2310 = scmp.lt.s32.totalorder %s2309, 30
          %s2311 = scalar_select %p2310, %s2309, 30
          %s2312 = smul.u32 64, %s2311
          %p2313 = scmp.ne.s32.totalorder 0, %s2312
          %s2314 = smul.addr %s2308, 4
          %s2315 = scalar_lea.vmem %s7, %s2314
          // Predicated region
          $region53: #{net3layers_forward.4} parent=51 // pred_check
            %p2316 = pneg %p2313
          $region54: #{net3layers_forward.4} parent=51 // pred_check_branch
            %2318 = sbr.rel (%p2316) target = $region56
          $region55: #{net3layers_forward.4} parent=51 // pred_region
            // Predicated region
            $region57: #{net3layers_forward.4} parent=55 // pred_check
              _
            $region58: #{net3layers_forward.4} parent=55 // pred_check_branch
              %2320 = sbr.rel target = $region60
            $region59: #{net3layers_forward.4} parent=55 // pred_region
              // Predicated region
              $region79: #{net3layers_forward.4} parent=59 // pred_check
                _
              $region80: #{net3layers_forward.4} parent=59 // pred_check_branch
                %2428 = sbr.rel (0) target = $region82
              $region81: #{net3layers_forward.4} parent=59 // pred_region
                %s2430 = sdiv.u32.pop %s2311, 30
                %s2431 = srem.u32.pop %s2311, 30
                // While loop
                $region83: #{net3layers_forward.4} parent=81 // loop_pre_header
                  _
                $region84: #{net3layers_forward.4} parent=81 // loop_header
                  %s2433 = sphi 0, %s2435
                  %p2434 = scmp.ge.s32.totalorder %s2433, %s2430
                  %s2438 = sphi 0, %s2503
                  %s2439 = sphi %s2304, %s2506
                  %s2440 = sphi %s2315, %s2507
                $region85: #{net3layers_forward.4} parent=81 // loop_header_branch
                  %2437 = sbr.rel (%p2434) target = $region89
                $region86: #{net3layers_forward.4} parent=81 // loop_body
                  %v2441 = vld [vmem:[%s2439] sm:$0xf]
                  %2442 = vst [vmem:[%s2440] sm:$0xf] %v2441
                  %v2443 = vld [vmem:[%s2439 + $0x4] sm:$0xf]
                  %2444 = vst [vmem:[%s2440 + $0x4] sm:$0xf] %v2443
                  %v2445 = vld [vmem:[%s2439 + $0x8] sm:$0xf]
                  %2446 = vst [vmem:[%s2440 + $0x8] sm:$0xf] %v2445
                  %v2447 = vld [vmem:[%s2439 + $0xc] sm:$0xf]
                  %2448 = vst [vmem:[%s2440 + $0xc] sm:$0xf] %v2447
                  %v2449 = vld [vmem:[%s2439 + $0x10] sm:$0xf]
                  %2450 = vst [vmem:[%s2440 + $0x10] sm:$0xf] %v2449
                  %v2451 = vld [vmem:[%s2439 + $0x14] sm:$0xf]
                  %2452 = vst [vmem:[%s2440 + $0x14] sm:$0xf] %v2451
                  %v2453 = vld [vmem:[%s2439 + $0x18] sm:$0xf]
                  %2454 = vst [vmem:[%s2440 + $0x18] sm:$0xf] %v2453
                  %v2455 = vld [vmem:[%s2439 + $0x1c] sm:$0xf]
                  %2456 = vst [vmem:[%s2440 + $0x1c] sm:$0xf] %v2455
                  %v2457 = vld [vmem:[%s2439 + $0x20] sm:$0xf]
                  %2458 = vst [vmem:[%s2440 + $0x20] sm:$0xf] %v2457
                  %v2459 = vld [vmem:[%s2439 + $0x24] sm:$0xf]
                  %2460 = vst [vmem:[%s2440 + $0x24] sm:$0xf] %v2459
                  %v2461 = vld [vmem:[%s2439 + $0x28] sm:$0xf]
                  %2462 = vst [vmem:[%s2440 + $0x28] sm:$0xf] %v2461
                  %v2463 = vld [vmem:[%s2439 + $0x2c] sm:$0xf]
                  %2464 = vst [vmem:[%s2440 + $0x2c] sm:$0xf] %v2463
                  %v2465 = vld [vmem:[%s2439 + $0x30] sm:$0xf]
                  %2466 = vst [vmem:[%s2440 + $0x30] sm:$0xf] %v2465
                  %v2467 = vld [vmem:[%s2439 + $0x34] sm:$0xf]
                  %2468 = vst [vmem:[%s2440 + $0x34] sm:$0xf] %v2467
                  %v2469 = vld [vmem:[%s2439 + $0x38] sm:$0xf]
                  %2470 = vst [vmem:[%s2440 + $0x38] sm:$0xf] %v2469
                  %v2471 = vld [vmem:[%s2439 + $0x3c] sm:$0xf]
                  %2472 = vst [vmem:[%s2440 + $0x3c] sm:$0xf] %v2471
                  %v2473 = vld [vmem:[%s2439 + $0x40] sm:$0xf]
                  %2474 = vst [vmem:[%s2440 + $0x40] sm:$0xf] %v2473
                  %v2475 = vld [vmem:[%s2439 + $0x44] sm:$0xf]
                  %2476 = vst [vmem:[%s2440 + $0x44] sm:$0xf] %v2475
                  %v2477 = vld [vmem:[%s2439 + $0x48] sm:$0xf]
                  %2478 = vst [vmem:[%s2440 + $0x48] sm:$0xf] %v2477
                  %v2479 = vld [vmem:[%s2439 + $0x4c] sm:$0xf]
                  %2480 = vst [vmem:[%s2440 + $0x4c] sm:$0xf] %v2479
                  %v2481 = vld [vmem:[%s2439 + $0x50] sm:$0xf]
                  %2482 = vst [vmem:[%s2440 + $0x50] sm:$0xf] %v2481
                  %v2483 = vld [vmem:[%s2439 + $0x54] sm:$0xf]
                  %2484 = vst [vmem:[%s2440 + $0x54] sm:$0xf] %v2483
                  %v2485 = vld [vmem:[%s2439 + $0x58] sm:$0xf]
                  %2486 = vst [vmem:[%s2440 + $0x58] sm:$0xf] %v2485
                  %v2487 = vld [vmem:[%s2439 + $0x5c] sm:$0xf]
                  %2488 = vst [vmem:[%s2440 + $0x5c] sm:$0xf] %v2487
                  %v2489 = vld [vmem:[%s2439 + $0x60] sm:$0xf]
                  %2490 = vst [vmem:[%s2440 + $0x60] sm:$0xf] %v2489
                  %v2491 = vld [vmem:[%s2439 + $0x64] sm:$0xf]
                  %2492 = vst [vmem:[%s2440 + $0x64] sm:$0xf] %v2491
                  %v2493 = vld [vmem:[%s2439 + $0x68] sm:$0xf]
                  %2494 = vst [vmem:[%s2440 + $0x68] sm:$0xf] %v2493
                  %v2495 = vld [vmem:[%s2439 + $0x6c] sm:$0xf]
                  %2496 = vst [vmem:[%s2440 + $0x6c] sm:$0xf] %v2495
                  %v2497 = vld [vmem:[%s2439 + $0x70] sm:$0xf]
                  %2498 = vst [vmem:[%s2440 + $0x70] sm:$0xf] %v2497
                  %v2499 = vld [vmem:[%s2439 + $0x74] sm:$0xf]
                  %2500 = vst [vmem:[%s2440 + $0x74] sm:$0xf] %v2499
                  %s2501 = sadd.s32 1, %s2438
                  %p2502 = scmp.ge.s32.totalorder %s2501, %s2430
                  %s2503 = scalar_select %p2502, 0, %s2501
                  %s2504 = smul.u32 %s2503, 120
                  %s2505 = smul.u32 %s2503, 120
                  %s2506 = scalar_lea.vmem %s2304, %s2504 [#allocation2]
                  %s2507 = scalar_lea.vmem %s2315, %s2505
                $region87: #{net3layers_forward.4} parent=81 // loop_footer
                  %s2435 = sadd.s32 %s2433, 1
                $region88: #{net3layers_forward.4} parent=81 // loop_footer_branch
                  %2432 = sbr.rel target = $region84
                $region89: #{net3layers_forward.4} parent=81 // loop_exit
                  _
                %s2508 = sdiv.u32.pop %s2311, 30
                %s2509 = srem.u32.pop %s2311, 30
                %s2510 = smul.u32 %s2508, 30
                %s2511 = smul.u32 4, %s2510
                %s2512 = scalar_lea.vmem %s2304, %s2511 [#allocation2]
                %s2513 = smul.u32 4, %s2510
                %s2514 = scalar_lea.vmem %s2315, %s2513
                // While loop
                $region90: #{net3layers_forward.4} parent=81 // loop_pre_header
                  _
                $region91: #{net3layers_forward.4} parent=81 // loop_header
                  %s2516 = sphi 0, %s2518
                  %p2517 = scmp.ge.s32.totalorder %s2516, %s2509
                  %s2521 = sphi 0, %s2528
                  %s2522 = sphi %s2512, %s2531
                  %s2523 = sphi %s2514, %s2532
                $region92: #{net3layers_forward.4} parent=81 // loop_header_branch
                  %2520 = sbr.rel (%p2517) target = $region96
                $region93: #{net3layers_forward.4} parent=81 // loop_body
                  %v2524 = vld [vmem:[%s2522] sm:$0xf]
                  %2525 = vst [vmem:[%s2523] sm:$0xf] %v2524
                  %s2526 = sadd.s32 1, %s2521
                  %p2527 = scmp.ge.s32.totalorder %s2526, %s2509
                  %s2528 = scalar_select %p2527, 0, %s2526
                  %s2529 = smul.u32 %s2528, 4
                  %s2530 = smul.u32 %s2528, 4
                  %s2531 = scalar_lea.vmem %s2512, %s2529 [#allocation2]
                  %s2532 = scalar_lea.vmem %s2514, %s2530
                $region94: #{net3layers_forward.4} parent=81 // loop_footer
                  %s2518 = sadd.s32 %s2516, 1
                $region95: #{net3layers_forward.4} parent=81 // loop_footer_branch
                  %2515 = sbr.rel target = $region91
                $region96: #{net3layers_forward.4} parent=81 // loop_exit
                  _
              $region82: #{net3layers_forward.4} parent=59 // pred_fallthru
                _
            $region60: #{net3layers_forward.4} parent=55 // pred_fallthru
              _
            // Predicated region
            $region61: #{net3layers_forward.4} parent=55 // pred_check
              _
            $region62: #{net3layers_forward.4} parent=55 // pred_check_branch
              %2322 = sbr.rel (0) target = $region64
            $region63: #{net3layers_forward.4} parent=55 // pred_region
              %s2324 = sdiv.u32.pop %s2311, 30
              %s2325 = srem.u32.pop %s2311, 30
              // While loop
              $region65: #{net3layers_forward.4} parent=63 // loop_pre_header
                _
              $region66: #{net3layers_forward.4} parent=63 // loop_header
                %s2327 = sphi 0, %s2329
                %p2328 = scmp.ge.s32.totalorder %s2327, %s2324
                %s2332 = sphi 0, %s2397
                %s2333 = sphi %s2304, %s2400
                %s2334 = sphi %s2315, %s2401
              $region67: #{net3layers_forward.4} parent=63 // loop_header_branch
                %2331 = sbr.rel (%p2328) target = $region71
              $region68: #{net3layers_forward.4} parent=63 // loop_body
                %v2335 = vld [vmem:[%s2333] sm:$0xf]
                %2336 = vst [vmem:[%s2334] sm:$0xf] %v2335
                %v2337 = vld [vmem:[%s2333 + $0x4] sm:$0xf]
                %2338 = vst [vmem:[%s2334 + $0x4] sm:$0xf] %v2337
                %v2339 = vld [vmem:[%s2333 + $0x8] sm:$0xf]
                %2340 = vst [vmem:[%s2334 + $0x8] sm:$0xf] %v2339
                %v2341 = vld [vmem:[%s2333 + $0xc] sm:$0xf]
                %2342 = vst [vmem:[%s2334 + $0xc] sm:$0xf] %v2341
                %v2343 = vld [vmem:[%s2333 + $0x10] sm:$0xf]
                %2344 = vst [vmem:[%s2334 + $0x10] sm:$0xf] %v2343
                %v2345 = vld [vmem:[%s2333 + $0x14] sm:$0xf]
                %2346 = vst [vmem:[%s2334 + $0x14] sm:$0xf] %v2345
                %v2347 = vld [vmem:[%s2333 + $0x18] sm:$0xf]
                %2348 = vst [vmem:[%s2334 + $0x18] sm:$0xf] %v2347
                %v2349 = vld [vmem:[%s2333 + $0x1c] sm:$0xf]
                %2350 = vst [vmem:[%s2334 + $0x1c] sm:$0xf] %v2349
                %v2351 = vld [vmem:[%s2333 + $0x20] sm:$0xf]
                %2352 = vst [vmem:[%s2334 + $0x20] sm:$0xf] %v2351
                %v2353 = vld [vmem:[%s2333 + $0x24] sm:$0xf]
                %2354 = vst [vmem:[%s2334 + $0x24] sm:$0xf] %v2353
                %v2355 = vld [vmem:[%s2333 + $0x28] sm:$0xf]
                %2356 = vst [vmem:[%s2334 + $0x28] sm:$0xf] %v2355
                %v2357 = vld [vmem:[%s2333 + $0x2c] sm:$0xf]
                %2358 = vst [vmem:[%s2334 + $0x2c] sm:$0xf] %v2357
                %v2359 = vld [vmem:[%s2333 + $0x30] sm:$0xf]
                %2360 = vst [vmem:[%s2334 + $0x30] sm:$0xf] %v2359
                %v2361 = vld [vmem:[%s2333 + $0x34] sm:$0xf]
                %2362 = vst [vmem:[%s2334 + $0x34] sm:$0xf] %v2361
                %v2363 = vld [vmem:[%s2333 + $0x38] sm:$0xf]
                %2364 = vst [vmem:[%s2334 + $0x38] sm:$0xf] %v2363
                %v2365 = vld [vmem:[%s2333 + $0x3c] sm:$0xf]
                %2366 = vst [vmem:[%s2334 + $0x3c] sm:$0xf] %v2365
                %v2367 = vld [vmem:[%s2333 + $0x40] sm:$0xf]
                %2368 = vst [vmem:[%s2334 + $0x40] sm:$0xf] %v2367
                %v2369 = vld [vmem:[%s2333 + $0x44] sm:$0xf]
                %2370 = vst [vmem:[%s2334 + $0x44] sm:$0xf] %v2369
                %v2371 = vld [vmem:[%s2333 + $0x48] sm:$0xf]
                %2372 = vst [vmem:[%s2334 + $0x48] sm:$0xf] %v2371
                %v2373 = vld [vmem:[%s2333 + $0x4c] sm:$0xf]
                %2374 = vst [vmem:[%s2334 + $0x4c] sm:$0xf] %v2373
                %v2375 = vld [vmem:[%s2333 + $0x50] sm:$0xf]
                %2376 = vst [vmem:[%s2334 + $0x50] sm:$0xf] %v2375
                %v2377 = vld [vmem:[%s2333 + $0x54] sm:$0xf]
                %2378 = vst [vmem:[%s2334 + $0x54] sm:$0xf] %v2377
                %v2379 = vld [vmem:[%s2333 + $0x58] sm:$0xf]
                %2380 = vst [vmem:[%s2334 + $0x58] sm:$0xf] %v2379
                %v2381 = vld [vmem:[%s2333 + $0x5c] sm:$0xf]
                %2382 = vst [vmem:[%s2334 + $0x5c] sm:$0xf] %v2381
                %v2383 = vld [vmem:[%s2333 + $0x60] sm:$0xf]
                %2384 = vst [vmem:[%s2334 + $0x60] sm:$0xf] %v2383
                %v2385 = vld [vmem:[%s2333 + $0x64] sm:$0xf]
                %2386 = vst [vmem:[%s2334 + $0x64] sm:$0xf] %v2385
                %v2387 = vld [vmem:[%s2333 + $0x68] sm:$0xf]
                %2388 = vst [vmem:[%s2334 + $0x68] sm:$0xf] %v2387
                %v2389 = vld [vmem:[%s2333 + $0x6c] sm:$0xf]
                %2390 = vst [vmem:[%s2334 + $0x6c] sm:$0xf] %v2389
                %v2391 = vld [vmem:[%s2333 + $0x70] sm:$0xf]
                %2392 = vst [vmem:[%s2334 + $0x70] sm:$0xf] %v2391
                %v2393 = vld [vmem:[%s2333 + $0x74] sm:$0xf]
                %2394 = vst [vmem:[%s2334 + $0x74] sm:$0xf] %v2393
                %s2395 = sadd.s32 1, %s2332
                %p2396 = scmp.ge.s32.totalorder %s2395, %s2324
                %s2397 = scalar_select %p2396, 0, %s2395
                %s2398 = smul.u32 %s2397, 120
                %s2399 = smul.u32 %s2397, 120
                %s2400 = scalar_lea.vmem %s2304, %s2398 [#allocation2]
                %s2401 = scalar_lea.vmem %s2315, %s2399
              $region69: #{net3layers_forward.4} parent=63 // loop_footer
                %s2329 = sadd.s32 %s2327, 1
              $region70: #{net3layers_forward.4} parent=63 // loop_footer_branch
                %2326 = sbr.rel target = $region66
              $region71: #{net3layers_forward.4} parent=63 // loop_exit
                _
              %s2402 = sdiv.u32.pop %s2311, 30
              %s2403 = srem.u32.pop %s2311, 30
              %s2404 = smul.u32 %s2402, 30
              %s2405 = smul.u32 4, %s2404
              %s2406 = scalar_lea.vmem %s2304, %s2405 [#allocation2]
              %s2407 = smul.u32 4, %s2404
              %s2408 = scalar_lea.vmem %s2315, %s2407
              // While loop
              $region72: #{net3layers_forward.4} parent=63 // loop_pre_header
                _
              $region73: #{net3layers_forward.4} parent=63 // loop_header
                %s2410 = sphi 0, %s2412
                %p2411 = scmp.ge.s32.totalorder %s2410, %s2403
                %s2415 = sphi 0, %s2422
                %s2416 = sphi %s2406, %s2425
                %s2417 = sphi %s2408, %s2426
              $region74: #{net3layers_forward.4} parent=63 // loop_header_branch
                %2414 = sbr.rel (%p2411) target = $region78
              $region75: #{net3layers_forward.4} parent=63 // loop_body
                %v2418 = vld [vmem:[%s2416] sm:$0xf]
                %2419 = vst [vmem:[%s2417] sm:$0xf] %v2418
                %s2420 = sadd.s32 1, %s2415
                %p2421 = scmp.ge.s32.totalorder %s2420, %s2403
                %s2422 = scalar_select %p2421, 0, %s2420
                %s2423 = smul.u32 %s2422, 4
                %s2424 = smul.u32 %s2422, 4
                %s2425 = scalar_lea.vmem %s2406, %s2423 [#allocation2]
                %s2426 = scalar_lea.vmem %s2408, %s2424
              $region76: #{net3layers_forward.4} parent=63 // loop_footer
                %s2412 = sadd.s32 %s2410, 1
              $region77: #{net3layers_forward.4} parent=63 // loop_footer_branch
                %2409 = sbr.rel target = $region73
              $region78: #{net3layers_forward.4} parent=63 // loop_exit
                _
            $region64: #{net3layers_forward.4} parent=55 // pred_fallthru
              _
          $region56: #{net3layers_forward.4} parent=51 // pred_fallthru
            _
          %2533 = vnop
        $region52: #{net3layers_forward.4} parent=47 // pred_fallthru
          _
      $region48: #{net3layers_forward.4} parent=5 // pred_fallthru
        _
      %p2534 = scmp.le.s32.totalorder 2, %s13
      // Predicated region
      $region97: #{net3layers_forward.4} parent=5 // pred_check
        %p2535 = pneg %p2534
      $region98: #{net3layers_forward.4} parent=5 // pred_check_branch
        %2537 = sbr.rel (%p2535) target = $region100
      $region99: #{net3layers_forward.4} parent=5 // pred_region
        %s2538 = ssub.s32 %s13, 2
        // Predicated region
        $region101: #{net3layers_forward.4} parent=99 // pred_check
          %p2539 = pneg %p209
        $region102: #{net3layers_forward.4} parent=99 // pred_check_branch
          %2541 = sbr.rel (%p2539) target = $region104
        $region103: #{net3layers_forward.4} parent=99 // pred_region
          %s2542 = sand.u32 %s194, 1
          %s2543 = sand.u32 %s194, 1
          %s2544 = smul.addr %s2543, 120
          %s2545 = scalar_lea.vmem [#allocation2], %s2544
        $region104: #{net3layers_forward.4} parent=99 // pred_fallthru
          _
      $region100: #{net3layers_forward.4} parent=5 // pred_fallthru
        _
    $region6: #{net3layers_forward.4} parent=1 // loop_footer
      %s17 = sadd.s32 1, %s13
    $region7: #{net3layers_forward.4} parent=1 // loop_footer_branch
      %12 = sbr.rel target = $region3
    $region8: #{net3layers_forward.4} parent=1 // loop_exit
      _

// kernel: net3layers_forward.5
$region0: #{net3layers_forward.5}
  #allocation0 [shape = 'u32[]', space=smem, size = 0x4, offset = 0x4, fixed_abs, tag = 'smem constant byte address 0x4 - core index']
  #allocation1 [shape = 'u32[144,128]{1,0:T(1,128)}', space=vmem, size = 0x12000, scoped, tag = 'internal scratch']
  %s0 = inlined_call_operand.vmem [shape: bf16[72,800], index: 0, kind: input, shape index: {}]
  %s1 = inlined_call_operand.vmem [shape: bf16[72,800], index: 1, kind: input, shape index: {}]
  %s2 = inlined_call_operand.vmem [shape: bf16[72,800], index: 2, kind: input, shape index: {}]
  %s3 = inlined_call_operand.vmem [shape: bf16[72,800], index: 3, kind: input, shape index: {}]
  %s4 = inlined_call_operand.vmem [shape: bf16[800,64], index: 4, kind: input, shape index: {}]
  %s5 = inlined_call_operand.vmem [shape: f32[1,64], index: 5, kind: input, shape index: {}]
  %s6 = inlined_call_operand.vmem [shape: f32[1,64], index: 6, kind: input, shape index: {}]
  %s7 = inlined_call_operand.vmem [shape: bf16[72,64], index: 7, kind: output, shape index: {}]
  %s8 = sld [smem:[#allocation0]]
  $region105: #{net3layers_forward.5} parent=0
    _
  %s10 = ssub.s32 1, %s8
  %s11 = scalar_select 0, %s10, %s8
  $region1: #{net3layers_forward.5} parent=0
    #allocation2 [shape = 'u8[24576]{0}', space=vmem, size = 0x6000, scoped, tag = 'output window, operand 0']
    loop: start=0, step=1, limit=4
    $region2: #{net3layers_forward.5} parent=1 // loop_pre_header
      _
    $region3: #{net3layers_forward.5} parent=1 // loop_header
      %s13 = sphi 0, %s17
      %p14 = scmp.ge.s32.totalorder %s13, 4
      %s23 = sphi 0, %s25
      %s26 = sphi 0, %s23
      %s27 = sphi 0, %s26
      %s43 = sphi 0, %s27
      %s49 = sphi 0, %s51
      %s52 = sphi 0, %s49
      %s53 = sphi 0, %s52
      %s69 = sphi 0, %s53
      %s75 = sphi 0, %s77
      %s78 = sphi 0, %s75
      %s79 = sphi 0, %s78
      %s95 = sphi 0, %s79
      %s101 = sphi 0, %s103
      %s104 = sphi 0, %s101
      %s105 = sphi 0, %s104
      %s121 = sphi 0, %s105
      %s125 = sphi 0, %s125
      %s127 = sphi 0, %s125
      %s128 = sphi 0, %s127
      %s142 = sphi 0, %s128
      %s146 = sphi 0, %s146
      %s148 = sphi 0, %s146
      %s149 = sphi 0, %s148
      %s163 = sphi 0, %s149
      %s167 = sphi 0, %s167
      %s169 = sphi 0, %s167
      %s170 = sphi 0, %s169
      %s184 = sphi 0, %s170
      %s190 = sphi 0, %s192
      %s193 = sphi 0, %s190
      %s194 = sphi 0, %s193
      %s210 = sphi 0, %s194
    $region4: #{net3layers_forward.5} parent=1 // loop_header_branch
      %16 = sbr.rel (%p14) target = $region8
    $region5: #{net3layers_forward.5} parent=1 // loop_body
      %s18 = ssub.s32 %s13, 1
      %s19 = ssub.s32 %s13, 2
      %s20 = sadd.s32 %s13, 1
      %s21 = ssub.s32 %s13, %s20
      %p22 = scmp.eq.s32.totalorder %s21, 0
      %s24 = sadd.s32 %s23, 1
      %s25 = scalar_select %p22, %s23, %s24
      %p28 = pneg %p22
      %p29 = scmp.eq.s32.totalorder %s13, 1
      %p30 = por %p28, %p29
      %p31 = scmp.ne.s32.totalorder %s23, %s26
      %p32 = scmp.eq.s32.totalorder %s13, 0
      %p33 = por %p31, %p32
      %p34 = scmp.ne.s32.totalorder %s23, %s26
      %p35 = scmp.eq.s32.totalorder %s18, 1
      %p36 = por %p34, %p35
      %p37 = scmp.ne.s32.totalorder %s26, %s27
      %p38 = scmp.eq.s32.totalorder %s18, 0
      %p39 = por %p37, %p38
      %p40 = scmp.ne.s32.totalorder %s26, %s27
      %p41 = scmp.eq.s32.totalorder %s19, 1
      %p42 = por %p40, %p41
      %p44 = scmp.ne.s32.totalorder %s27, %s43
      %p45 = scmp.eq.s32.totalorder %s19, 0
      %p46 = por %p44, %p45
      %s47 = ssub.s32 %s13, %s20
      %p48 = scmp.eq.s32.totalorder %s47, 0
      %s50 = sadd.s32 %s49, 1
      %s51 = scalar_select %p48, %s49, %s50
      %p54 = pneg %p48
      %p55 = scmp.eq.s32.totalorder %s13, 1
      %p56 = por %p54, %p55
      %p57 = scmp.ne.s32.totalorder %s49, %s52
      %p58 = scmp.eq.s32.totalorder %s13, 0
      %p59 = por %p57, %p58
      %p60 = scmp.ne.s32.totalorder %s49, %s52
      %p61 = scmp.eq.s32.totalorder %s18, 1
      %p62 = por %p60, %p61
      %p63 = scmp.ne.s32.totalorder %s52, %s53
      %p64 = scmp.eq.s32.totalorder %s18, 0
      %p65 = por %p63, %p64
      %p66 = scmp.ne.s32.totalorder %s52, %s53
      %p67 = scmp.eq.s32.totalorder %s19, 1
      %p68 = por %p66, %p67
      %p70 = scmp.ne.s32.totalorder %s53, %s69
      %p71 = scmp.eq.s32.totalorder %s19, 0
      %p72 = por %p70, %p71
      %s73 = ssub.s32 %s13, %s20
      %p74 = scmp.eq.s32.totalorder %s73, 0
      %s76 = sadd.s32 %s75, 1
      %s77 = scalar_select %p74, %s75, %s76
      %p80 = pneg %p74
      %p81 = scmp.eq.s32.totalorder %s13, 1
      %p82 = por %p80, %p81
      %p83 = scmp.ne.s32.totalorder %s75, %s78
      %p84 = scmp.eq.s32.totalorder %s13, 0
      %p85 = por %p83, %p84
      %p86 = scmp.ne.s32.totalorder %s75, %s78
      %p87 = scmp.eq.s32.totalorder %s18, 1
      %p88 = por %p86, %p87
      %p89 = scmp.ne.s32.totalorder %s78, %s79
      %p90 = scmp.eq.s32.totalorder %s18, 0
      %p91 = por %p89, %p90
      %p92 = scmp.ne.s32.totalorder %s78, %s79
      %p93 = scmp.eq.s32.totalorder %s19, 1
      %p94 = por %p92, %p93
      %p96 = scmp.ne.s32.totalorder %s79, %s95
      %p97 = scmp.eq.s32.totalorder %s19, 0
      %p98 = por %p96, %p97
      %s99 = ssub.s32 %s13, %s20
      %p100 = scmp.eq.s32.totalorder %s99, 0
      %s102 = sadd.s32 %s101, 1
      %s103 = scalar_select %p100, %s101, %s102
      %p106 = pneg %p100
      %p107 = scmp.eq.s32.totalorder %s13, 1
      %p108 = por %p106, %p107
      %p109 = scmp.ne.s32.totalorder %s101, %s104
      %p110 = scmp.eq.s32.totalorder %s13, 0
      %p111 = por %p109, %p110
      %p112 = scmp.ne.s32.totalorder %s101, %s104
      %p113 = scmp.eq.s32.totalorder %s18, 1
      %p114 = por %p112, %p113
      %p115 = scmp.ne.s32.totalorder %s104, %s105
      %p116 = scmp.eq.s32.totalorder %s18, 0
      %p117 = por %p115, %p116
      %p118 = scmp.ne.s32.totalorder %s104, %s105
      %p119 = scmp.eq.s32.totalorder %s19, 1
      %p120 = por %p118, %p119
      %p122 = scmp.ne.s32.totalorder %s105, %s121
      %p123 = scmp.eq.s32.totalorder %s19, 0
      %p124 = por %p122, %p123
      %s126 = sadd.s32 %s125, 1
      %p129 = scmp.eq.s32.totalorder %s13, 1
      %p130 = scmp.ne.s32.totalorder %s125, %s127
      %p131 = scmp.eq.s32.totalorder %s13, 0
      %p132 = por %p130, %p131
      %p133 = scmp.ne.s32.totalorder %s125, %s127
      %p134 = scmp.eq.s32.totalorder %s18, 1
      %p135 = por %p133, %p134
      %p136 = scmp.ne.s32.totalorder %s127, %s128
      %p137 = scmp.eq.s32.totalorder %s18, 0
      %p138 = por %p136, %p137
      %p139 = scmp.ne.s32.totalorder %s127, %s128
      %p140 = scmp.eq.s32.totalorder %s19, 1
      %p141 = por %p139, %p140
      %p143 = scmp.ne.s32.totalorder %s128, %s142
      %p144 = scmp.eq.s32.totalorder %s19, 0
      %p145 = por %p143, %p144
      %s147 = sadd.s32 %s146, 1
      %p150 = scmp.eq.s32.totalorder %s13, 1
      %p151 = scmp.ne.s32.totalorder %s146, %s148
      %p152 = scmp.eq.s32.totalorder %s13, 0
      %p153 = por %p151, %p152
      %p154 = scmp.ne.s32.totalorder %s146, %s148
      %p155 = scmp.eq.s32.totalorder %s18, 1
      %p156 = por %p154, %p155
      %p157 = scmp.ne.s32.totalorder %s148, %s149
      %p158 = scmp.eq.s32.totalorder %s18, 0
      %p159 = por %p157, %p158
      %p160 = scmp.ne.s32.totalorder %s148, %s149
      %p161 = scmp.eq.s32.totalorder %s19, 1
      %p162 = por %p160, %p161
      %p164 = scmp.ne.s32.totalorder %s149, %s163
      %p165 = scmp.eq.s32.totalorder %s19, 0
      %p166 = por %p164, %p165
      %s168 = sadd.s32 %s167, 1
      %p171 = scmp.eq.s32.totalorder %s13, 1
      %p172 = scmp.ne.s32.totalorder %s167, %s169
      %p173 = scmp.eq.s32.totalorder %s13, 0
      %p174 = por %p172, %p173
      %p175 = scmp.ne.s32.totalorder %s167, %s169
      %p176 = scmp.eq.s32.totalorder %s18, 1
      %p177 = por %p175, %p176
      %p178 = scmp.ne.s32.totalorder %s169, %s170
      %p179 = scmp.eq.s32.totalorder %s18, 0
      %p180 = por %p178, %p179
      %p181 = scmp.ne.s32.totalorder %s169, %s170
      %p182 = scmp.eq.s32.totalorder %s19, 1
      %p183 = por %p181, %p182
      %p185 = scmp.ne.s32.totalorder %s170, %s184
      %p186 = scmp.eq.s32.totalorder %s19, 0
      %p187 = por %p185, %p186
      %s188 = ssub.s32 %s13, %s20
      %p189 = scmp.eq.s32.totalorder %s188, 0
      %s191 = sadd.s32 %s190, 1
      %s192 = scalar_select %p189, %s190, %s191
      %p195 = pneg %p189
      %p196 = scmp.eq.s32.totalorder %s13, 1
      %p197 = por %p195, %p196
      %p198 = scmp.ne.s32.totalorder %s190, %s193
      %p199 = scmp.eq.s32.totalorder %s13, 0
      %p200 = por %p198, %p199
      %p201 = scmp.ne.s32.totalorder %s190, %s193
      %p202 = scmp.eq.s32.totalorder %s18, 1
      %p203 = por %p201, %p202
      %p204 = scmp.ne.s32.totalorder %s193, %s194
      %p205 = scmp.eq.s32.totalorder %s18, 0
      %p206 = por %p204, %p205
      %p207 = scmp.ne.s32.totalorder %s193, %s194
      %p208 = scmp.eq.s32.totalorder %s19, 1
      %p209 = por %p207, %p208
      %p211 = scmp.ne.s32.totalorder %s194, %s210
      %p212 = scmp.eq.s32.totalorder %s19, 0
      %p213 = por %p211, %p212
      %p214 = scmp.le.s32.totalorder 1, %s13
      %p215 = scmp.lt.s32.totalorder %s13, 3
      %p216 = pnand %p214, %p215
      %p217 = pneg %p216
      // Predicated region
      $region9: #{net3layers_forward.5} parent=5 // pred_check
        _
      $region10: #{net3layers_forward.5} parent=5 // pred_check_branch
        %219 = sbr.rel (%p216) target = $region12
      $region11: #{net3layers_forward.5} parent=5 // pred_region
        %s220 = ssub.s32 %s13, 1
        // Predicated region
        $region13: #{net3layers_forward.5} parent=11 // pred_check
          %p221 = pneg %p138
        $region14: #{net3layers_forward.5} parent=11 // pred_check_branch
          %223 = sbr.rel (%p221) target = $region16
        $region15: #{net3layers_forward.5} parent=11 // pred_region
          _
        $region16: #{net3layers_forward.5} parent=11 // pred_fallthru
          _
        // Predicated region
        $region17: #{net3layers_forward.5} parent=11 // pred_check
          %p224 = pneg %p159
        $region18: #{net3layers_forward.5} parent=11 // pred_check_branch
          %226 = sbr.rel (%p224) target = $region20
        $region19: #{net3layers_forward.5} parent=11 // pred_region
          _
        $region20: #{net3layers_forward.5} parent=11 // pred_fallthru
          _
        // Predicated region
        $region21: #{net3layers_forward.5} parent=11 // pred_check
          %p227 = pneg %p180
        $region22: #{net3layers_forward.5} parent=11 // pred_check_branch
          %229 = sbr.rel (%p227) target = $region24
        $region23: #{net3layers_forward.5} parent=11 // pred_region
          _
        $region24: #{net3layers_forward.5} parent=11 // pred_fallthru
          _
      $region12: #{net3layers_forward.5} parent=5 // pred_fallthru
        _
      %p230 = scmp.lt.s32.totalorder %s13, 2
      // Predicated region
      $region25: #{net3layers_forward.5} parent=5 // pred_check
        %p231 = pneg %p230
      $region26: #{net3layers_forward.5} parent=5 // pred_check_branch
        %233 = sbr.rel (%p231) target = $region28
      $region27: #{net3layers_forward.5} parent=5 // pred_region
        // Predicated region
        $region29: #{net3layers_forward.5} parent=27 // pred_check
          %p234 = pneg %p33
        $region30: #{net3layers_forward.5} parent=27 // pred_check_branch
          %236 = sbr.rel (%p234) target = $region32
        $region31: #{net3layers_forward.5} parent=27 // pred_region
          %s237 = smul.u32 6, %s13
          %s238 = ssub.s32 9, %s237
          %p239 = scmp.lt.s32.totalorder %s238, 6
          %s240 = scalar_select %p239, %s238, 6
          %s241 = smul.u32 64, %s240
          %s242 = smul.u32 %s241, 7
          %p243 = scmp.lt.s32.totalorder %s237, 8
          %s244 = scalar_select %p243, %s237, 8
          %s245 = smul.addr %s244, 7
          %s246 = smul.addr %s245, 4
          %s247 = scalar_lea.vmem %s0, %s246
          %s248 = smul.u32 6, %s13
          %s249 = ssub.s32 9, %s248
          %p250 = scmp.lt.s32.totalorder %s249, 6
          %s251 = scalar_select %p250, %s249, 6
          %s252 = smul.u32 64, %s251
          %s253 = smul.u32 %s252, 7
        $region32: #{net3layers_forward.5} parent=27 // pred_fallthru
          _
        // Predicated region
        $region33: #{net3layers_forward.5} parent=27 // pred_check
          %p254 = pneg %p59
        $region34: #{net3layers_forward.5} parent=27 // pred_check_branch
          %256 = sbr.rel (%p254) target = $region36
        $region35: #{net3layers_forward.5} parent=27 // pred_region
          %s257 = smul.u32 6, %s13
          %s258 = ssub.s32 9, %s257
          %p259 = scmp.lt.s32.totalorder %s258, 6
          %s260 = scalar_select %p259, %s258, 6
          %s261 = smul.u32 64, %s260
          %s262 = smul.u32 %s261, 7
          %p263 = scmp.lt.s32.totalorder %s257, 8
          %s264 = scalar_select %p263, %s257, 8
          %s265 = smul.addr %s264, 7
          %s266 = smul.addr %s265, 4
          %s267 = scalar_lea.vmem %s1, %s266
          %s268 = smul.u32 6, %s13
          %s269 = ssub.s32 9, %s268
          %p270 = scmp.lt.s32.totalorder %s269, 6
          %s271 = scalar_select %p270, %s269, 6
          %s272 = smul.u32 64, %s271
          %s273 = smul.u32 %s272, 7
        $region36: #{net3layers_forward.5} parent=27 // pred_fallthru
          _
        // Predicated region
        $region37: #{net3layers_forward.5} parent=27 // pred_check
          %p274 = pneg %p85
        $region38: #{net3layers_forward.5} parent=27 // pred_check_branch
          %276 = sbr.rel (%p274) target = $region40
        $region39: #{net3layers_forward.5} parent=27 // pred_region
          %s277 = smul.u32 6, %s13
          %s278 = ssub.s32 9, %s277
          %p279 = scmp.lt.s32.totalorder %s278, 6
          %s280 = scalar_select %p279, %s278, 6
          %s281 = smul.u32 64, %s280
          %s282 = smul.u32 %s281, 7
          %p283 = scmp.lt.s32.totalorder %s277, 8
          %s284 = scalar_select %p283, %s277, 8
          %s285 = smul.addr %s284, 7
          %s286 = smul.addr %s285, 4
          %s287 = scalar_lea.vmem %s2, %s286
          %s288 = smul.u32 6, %s13
          %s289 = ssub.s32 9, %s288
          %p290 = scmp.lt.s32.totalorder %s289, 6
          %s291 = scalar_select %p290, %s289, 6
          %s292 = smul.u32 64, %s291
          %s293 = smul.u32 %s292, 7
        $region40: #{net3layers_forward.5} parent=27 // pred_fallthru
          _
        // Predicated region
        $region41: #{net3layers_forward.5} parent=27 // pred_check
          %p294 = pneg %p111
        $region42: #{net3layers_forward.5} parent=27 // pred_check_branch
          %296 = sbr.rel (%p294) target = $region44
        $region43: #{net3layers_forward.5} parent=27 // pred_region
          %s297 = smul.u32 6, %s13
          %s298 = ssub.s32 9, %s297
          %p299 = scmp.lt.s32.totalorder %s298, 6
          %s300 = scalar_select %p299, %s298, 6
          %s301 = smul.u32 64, %s300
          %s302 = smul.u32 %s301, 7
          %p303 = scmp.lt.s32.totalorder %s297, 8
          %s304 = scalar_select %p303, %s297, 8
          %s305 = smul.addr %s304, 7
          %s306 = smul.addr %s305, 4
          %s307 = scalar_lea.vmem %s3, %s306
          %s308 = smul.u32 6, %s13
          %s309 = ssub.s32 9, %s308
          %p310 = scmp.lt.s32.totalorder %s309, 6
          %s311 = scalar_select %p310, %s309, 6
          %s312 = smul.u32 64, %s311
          %s313 = smul.u32 %s312, 7
        $region44: #{net3layers_forward.5} parent=27 // pred_fallthru
          _
      $region28: #{net3layers_forward.5} parent=5 // pred_fallthru
        _
      %p314 = scmp.le.s32.totalorder 1, %s13
      %p315 = scmp.lt.s32.totalorder %s13, 3
      %p316 = pnand %p314, %p315
      %p317 = pneg %p316
      // Predicated region
      $region45: #{net3layers_forward.5} parent=5 // pred_check
        _
      $region46: #{net3layers_forward.5} parent=5 // pred_check_branch
        %319 = sbr.rel (%p316) target = $region48
      $region47: #{net3layers_forward.5} parent=5 // pred_region
        %s320 = ssub.s32 %s13, 1
        %s321 = smul.u32 6, %s18
        %s322 = ssub.s32 9, %s321
        %p323 = scmp.lt.s32.totalorder %s322, 6
        %s324 = scalar_select %p323, %s322, 6
        %s325 = smul.u32 64, %s324
        %s326 = smul.u32 %s325, 7
        %p327 = scmp.lt.s32.totalorder %s321, 8
        %s328 = scalar_select %p327, %s321, 8
        %s329 = smul.addr %s328, 7
        %s330 = smul.addr %s329, 4
        %s331 = scalar_lea.vmem %s0, %s330
        %p332 = pneg %p39
        %p333 = pneg %p36
        %s334 = smul.u32 6, %s18
        %s335 = ssub.s32 9, %s334
        %p336 = scmp.lt.s32.totalorder %s335, 6
        %s337 = scalar_select %p336, %s335, 6
        %s338 = smul.u32 64, %s337
        %s339 = smul.u32 %s338, 7
        %p340 = scmp.lt.s32.totalorder %s334, 8
        %s341 = scalar_select %p340, %s334, 8
        %s342 = smul.addr %s341, 7
        %s343 = smul.addr %s342, 4
        %s344 = scalar_lea.vmem %s1, %s343
        %p345 = pneg %p65
        %p346 = pneg %p62
        %s347 = smul.u32 6, %s18
        %s348 = ssub.s32 9, %s347
        %p349 = scmp.lt.s32.totalorder %s348, 6
        %s350 = scalar_select %p349, %s348, 6
        %s351 = smul.u32 64, %s350
        %s352 = smul.u32 %s351, 7
        %p353 = scmp.lt.s32.totalorder %s347, 8
        %s354 = scalar_select %p353, %s347, 8
        %s355 = smul.addr %s354, 7
        %s356 = smul.addr %s355, 4
        %s357 = scalar_lea.vmem %s2, %s356
        %p358 = pneg %p91
        %p359 = pneg %p88
        %s360 = smul.u32 6, %s18
        %s361 = ssub.s32 9, %s360
        %p362 = scmp.lt.s32.totalorder %s361, 6
        %s363 = scalar_select %p362, %s361, 6
        %s364 = smul.u32 64, %s363
        %s365 = smul.u32 %s364, 7
        %p366 = scmp.lt.s32.totalorder %s360, 8
        %s367 = scalar_select %p366, %s360, 8
        %s368 = smul.addr %s367, 7
        %s369 = smul.addr %s368, 4
        %s370 = scalar_lea.vmem %s3, %s369
        %p371 = pneg %p117
        %p372 = pneg %p114
        %p373 = pneg %p138
        %p374 = pneg %p135
        %p375 = pneg %p159
        %p376 = pneg %p156
        %p377 = pneg %p180
        %p378 = pneg %p177
        %p379 = pneg %p206
        %p380 = pneg %p203
        %s381 = sand.u32 %s193, 1
        %s382 = sand.u32 %s193, 1
        %s383 = smul.addr %s382, 24
        %s384 = scalar_lea.vmem [#allocation2], %s383
        %s385 = smul.u32 6, %s18
        %s386 = ssub.s32 9, %s385
        %p387 = scmp.lt.s32.totalorder %s386, 6
        %s388 = scalar_select %p387, %s386, 6
        %s389 = smul.u32 64, %s388
        %s390 = smul.u32 %s389, 7
        %p391 = scmp.lt.s32.totalorder %s385, 8
        %s392 = scalar_select %p391, %s385, 8
        %s393 = smul.addr %s392, 7
        %s394 = smul.addr %s393, 4
        %s395 = scalar_lea.vmem %s0, %s394
        %s396 = smul.u32 6, %s18
        %s397 = ssub.s32 9, %s396
        %p398 = scmp.lt.s32.totalorder %s397, 6
        %s399 = scalar_select %p398, %s397, 6
        %s400 = smul.u32 64, %s399
        %s401 = smul.u32 %s400, 7
        %s402 = smul.u32 6, %s18
        %s403 = ssub.s32 9, %s402
        %p404 = scmp.lt.s32.totalorder %s403, 6
        %s405 = scalar_select %p404, %s403, 6
        %s406 = smul.u32 64, %s405
        %s407 = smul.u32 %s406, 7
        %p408 = scmp.lt.s32.totalorder %s402, 8
        %s409 = scalar_select %p408, %s402, 8
        %s410 = smul.addr %s409, 7
        %s411 = smul.addr %s410, 4
        %s412 = scalar_lea.vmem %s1, %s411
        %s413 = smul.u32 6, %s18
        %s414 = ssub.s32 9, %s413
        %p415 = scmp.lt.s32.totalorder %s414, 6
        %s416 = scalar_select %p415, %s414, 6
        %s417 = smul.u32 64, %s416
        %s418 = smul.u32 %s417, 7
        %s419 = smul.u32 6, %s18
        %s420 = ssub.s32 9, %s419
        %p421 = scmp.lt.s32.totalorder %s420, 6
        %s422 = scalar_select %p421, %s420, 6
        %s423 = smul.u32 64, %s422
        %s424 = smul.u32 %s423, 7
        %p425 = scmp.lt.s32.totalorder %s419, 8
        %s426 = scalar_select %p425, %s419, 8
        %s427 = smul.addr %s426, 7
        %s428 = smul.addr %s427, 4
        %s429 = scalar_lea.vmem %s2, %s428
        %s430 = smul.u32 6, %s18
        %s431 = ssub.s32 9, %s430
        %p432 = scmp.lt.s32.totalorder %s431, 6
        %s433 = scalar_select %p432, %s431, 6
        %s434 = smul.u32 64, %s433
        %s435 = smul.u32 %s434, 7
        %s436 = smul.u32 6, %s18
        %s437 = ssub.s32 9, %s436
        %p438 = scmp.lt.s32.totalorder %s437, 6
        %s439 = scalar_select %p438, %s437, 6
        %s440 = smul.u32 64, %s439
        %s441 = smul.u32 %s440, 7
        %p442 = scmp.lt.s32.totalorder %s436, 8
        %s443 = scalar_select %p442, %s436, 8
        %s444 = smul.addr %s443, 7
        %s445 = smul.addr %s444, 4
        %s446 = scalar_lea.vmem %s3, %s445
        %s447 = smul.u32 6, %s18
        %s448 = ssub.s32 9, %s447
        %p449 = scmp.lt.s32.totalorder %s448, 6
        %s450 = scalar_select %p449, %s448, 6
        %s451 = smul.u32 64, %s450
        %s452 = smul.u32 %s451, 7
        %s453 = smul.u32 6, %s18
        %s454 = ssub.s32 9, %s453
        %p455 = scmp.lt.s32.totalorder %s454, 6
        %s456 = scalar_select %p455, %s454, 6
        %s457 = smul.u32 64, %s456
        %v459 = vld [vmem:[%s4] sm:$0xf]
        %v460 = vld [vmem:[%s4 + $0x4] sm:$0xf]
        %v461 = vld [vmem:[%s4 + $0x8] sm:$0xf]
        %v462 = vld [vmem:[%s4 + $0xc] sm:$0xf]
        %v463 = vld [vmem:[%s4 + $0x10] sm:$0xf]
        %v464 = vld [vmem:[%s4 + $0x14] sm:$0xf]
        %v465 = vld [vmem:[%s4 + $0x18] sm:$0xf]
        %v466 = vld [vmem:[%s4 + $0x1c] sm:$0xf]
        %v467 = vld [vmem:[%s4 + $0x20] sm:$0xf]
        %v468 = vld [vmem:[%s4 + $0x24] sm:$0xf]
        %v469 = vld [vmem:[%s4 + $0x28] sm:$0xf]
        %v470 = vld [vmem:[%s4 + $0x2c] sm:$0xf]
        %v471 = vld [vmem:[%s4 + $0x30] sm:$0xf]
        %v472 = vld [vmem:[%s4 + $0x34] sm:$0xf]
        %v473 = vld [vmem:[%s4 + $0x38] sm:$0xf]
        %v474 = vld [vmem:[%s4 + $0x3c] sm:$0xf]
        %v475 = vld [vmem:[%s4 + $0x40] sm:$0xf]
        %v476 = vld [vmem:[%s4 + $0x44] sm:$0xf]
        %v477 = vld [vmem:[%s4 + $0x48] sm:$0xf]
        %v478 = vld [vmem:[%s4 + $0x4c] sm:$0xf]
        %v479 = vld [vmem:[%s4 + $0x50] sm:$0xf]
        %v480 = vld [vmem:[%s4 + $0x54] sm:$0xf]
        %v481 = vld [vmem:[%s4 + $0x58] sm:$0xf]
        %v482 = vld [vmem:[%s4 + $0x5c] sm:$0xf]
        %v483 = vld [vmem:[%s4 + $0x60] sm:$0xf]
        %v484 = vld [vmem:[%s4 + $0x64] sm:$0xf]
        %v485 = vld [vmem:[%s4 + $0x68] sm:$0xf]
        %v486 = vld [vmem:[%s4 + $0x6c] sm:$0xf]
        %v487 = vld [vmem:[%s4 + $0x70] sm:$0xf]
        %v488 = vld [vmem:[%s4 + $0x74] sm:$0xf]
        %v489 = vld [vmem:[%s4 + $0x78] sm:$0xf]
        %v490 = vld [vmem:[%s4 + $0x7c] sm:$0xf]
        %v491 = vld [vmem:[%s4 + $0x80] sm:$0xf]
        %v492 = vld [vmem:[%s4 + $0x84] sm:$0xf]
        %v493 = vld [vmem:[%s4 + $0x88] sm:$0xf]
        %v494 = vld [vmem:[%s4 + $0x8c] sm:$0xf]
        %v495 = vld [vmem:[%s4 + $0x90] sm:$0xf]
        %v496 = vld [vmem:[%s4 + $0x94] sm:$0xf]
        %v497 = vld [vmem:[%s4 + $0x98] sm:$0xf]
        %v498 = vld [vmem:[%s4 + $0x9c] sm:$0xf]
        %v499 = vld [vmem:[%s4 + $0xa0] sm:$0xf]
        %v500 = vld [vmem:[%s4 + $0xa4] sm:$0xf]
        %v501 = vld [vmem:[%s4 + $0xa8] sm:$0xf]
        %v502 = vld [vmem:[%s4 + $0xac] sm:$0xf]
        %v503 = vld [vmem:[%s4 + $0xb0] sm:$0xf]
        %v504 = vld [vmem:[%s4 + $0xb4] sm:$0xf]
        %v505 = vld [vmem:[%s4 + $0xb8] sm:$0xf]
        %v506 = vld [vmem:[%s4 + $0xbc] sm:$0xf]
        %v507 = vld [vmem:[%s4 + $0xc0] sm:$0xf]
        %v508 = vld [vmem:[%s4 + $0xc4] sm:$0xf]
        %v509 = vld [vmem:[%s4 + $0xc8] sm:$0xf]
        %v510 = vld [vmem:[%s4 + $0xcc] sm:$0xf]
        %v511 = vld [vmem:[%s4 + $0xd0] sm:$0xf]
        %v512 = vld [vmem:[%s4 + $0xd4] sm:$0xf]
        %v513 = vld [vmem:[%s4 + $0xd8] sm:$0xf]
        %v514 = vld [vmem:[%s4 + $0xdc] sm:$0xf]
        %v515 = vld [vmem:[%s4 + $0xe0] sm:$0xf]
        %v516 = vld [vmem:[%s4 + $0xe4] sm:$0xf]
        %v517 = vld [vmem:[%s4 + $0xe8] sm:$0xf]
        %v518 = vld [vmem:[%s4 + $0xec] sm:$0xf]
        %v519 = vld [vmem:[%s4 + $0xf0] sm:$0xf]
        %v520 = vld [vmem:[%s4 + $0xf4] sm:$0xf]
        %v521 = vld [vmem:[%s4 + $0xf8] sm:$0xf]
        %v522 = vld [vmem:[%s4 + $0xfc] sm:$0xf]
        %v523 = vld [vmem:[%s4 + $0x100] sm:$0xf]
        %v524 = vld [vmem:[%s4 + $0x104] sm:$0xf]
        %v525 = vld [vmem:[%s4 + $0x108] sm:$0xf]
        %v526 = vld [vmem:[%s4 + $0x10c] sm:$0xf]
        %v527 = vld [vmem:[%s4 + $0x110] sm:$0xf]
        %v528 = vld [vmem:[%s4 + $0x114] sm:$0xf]
        %v529 = vld [vmem:[%s4 + $0x118] sm:$0xf]
        %v530 = vld [vmem:[%s4 + $0x11c] sm:$0xf]
        %v531 = vld [vmem:[%s4 + $0x120] sm:$0xf]
        %v532 = vld [vmem:[%s4 + $0x124] sm:$0xf]
        %v533 = vld [vmem:[%s4 + $0x128] sm:$0xf]
        %v534 = vld [vmem:[%s4 + $0x12c] sm:$0xf]
        %v535 = vld [vmem:[%s4 + $0x130] sm:$0xf]
        %v536 = vld [vmem:[%s4 + $0x134] sm:$0xf]
        %v537 = vld [vmem:[%s4 + $0x138] sm:$0xf]
        %v538 = vld [vmem:[%s4 + $0x13c] sm:$0xf]
        %v539 = vld [vmem:[%s4 + $0x140] sm:$0xf]
        %v540 = vld [vmem:[%s4 + $0x144] sm:$0xf]
        %v541 = vld [vmem:[%s4 + $0x148] sm:$0xf]
        %v542 = vld [vmem:[%s4 + $0x14c] sm:$0xf]
        %v543 = vld [vmem:[%s4 + $0x150] sm:$0xf]
        %v544 = vld [vmem:[%s4 + $0x154] sm:$0xf]
        %v545 = vld [vmem:[%s4 + $0x158] sm:$0xf]
        %v546 = vld [vmem:[%s4 + $0x15c] sm:$0xf]
        %v547 = vld [vmem:[%s4 + $0x160] sm:$0xf]
        %v548 = vld [vmem:[%s4 + $0x164] sm:$0xf]
        %v549 = vld [vmem:[%s4 + $0x168] sm:$0xf]
        %v550 = vld [vmem:[%s4 + $0x16c] sm:$0xf]
        %v551 = vld [vmem:[%s4 + $0x170] sm:$0xf]
        %v552 = vld [vmem:[%s4 + $0x174] sm:$0xf]
        %v553 = vld [vmem:[%s4 + $0x178] sm:$0xf]
        %v554 = vld [vmem:[%s4 + $0x17c] sm:$0xf]
        %v555 = vld [vmem:[%s4 + $0x180] sm:$0xf]
        %v556 = vld [vmem:[%s4 + $0x184] sm:$0xf]
        %v557 = vld [vmem:[%s4 + $0x188] sm:$0xf]
        %v558 = vld [vmem:[%s4 + $0x18c] sm:$0xf]
        %v559 = vld [vmem:[%s5] sm:$0x1]
        %v560 = vld [vmem:[%s6] sm:$0x1]
        %v561 = vld [vmem:[%s395] sm:$0xff]
        %v562 = vld [vmem:[%s395 + $0x8] sm:$0xff]
        %v563 = vld [vmem:[%s395 + $0x10] sm:$0xff]
        %v564 = vld [vmem:[%s395 + $0x18] sm:$0xf]
        %v565 = vld [vmem:[%s395 + $0x1c] sm:$0xff]
        %v566 = vld [vmem:[%s395 + $0x24] sm:$0xff]
        %v567 = vld [vmem:[%s395 + $0x2c] sm:$0xff]
        %v568 = vld [vmem:[%s395 + $0x34] sm:$0xf]
        %v569 = vld [vmem:[%s395 + $0x38] sm:$0xff]
        %v570 = vld [vmem:[%s395 + $0x40] sm:$0xff]
        %v571 = vld [vmem:[%s395 + $0x48] sm:$0xff]
        %v572 = vld [vmem:[%s395 + $0x50] sm:$0xf]
        %v573 = vld [vmem:[%s395 + $0x54] sm:$0xff]
        %v574 = vld [vmem:[%s395 + $0x5c] sm:$0xff]
        %v575 = vld [vmem:[%s395 + $0x64] sm:$0xff]
        %v576 = vld [vmem:[%s395 + $0x6c] sm:$0xf]
        %v577 = vld [vmem:[%s395 + $0x70] sm:$0xff]
        %v578 = vld [vmem:[%s395 + $0x78] sm:$0xff]
        %v579 = vld [vmem:[%s395 + $0x80] sm:$0xff]
        %v580 = vld [vmem:[%s395 + $0x88] sm:$0xf]
        %v581 = vld [vmem:[%s395 + $0x8c] sm:$0xff]
        %v582 = vld [vmem:[%s395 + $0x94] sm:$0xff]
        %v583 = vld [vmem:[%s395 + $0x9c] sm:$0xff]
        %v584 = vld [vmem:[%s395 + $0xa4] sm:$0xf]
        %v609 = vunpack.c.l.b16 %v561
        %v610 = vunpack.c.h.b16 %v561
        %v611 = vunpack.c.l.b16 %v562
        %v612 = vunpack.c.h.b16 %v562
        %v613 = vunpack.c.l.b16 %v563
        %v614 = vunpack.c.h.b16 %v563
        %v615 = vunpack.c.l.b16 %v564
        %v616 = vunpack.c.l.b16 %v565
        %v617 = vunpack.c.h.b16 %v565
        %v618 = vunpack.c.l.b16 %v566
        %v619 = vunpack.c.h.b16 %v566
        %v620 = vunpack.c.l.b16 %v567
        %v621 = vunpack.c.h.b16 %v567
        %v622 = vunpack.c.l.b16 %v568
        %v623 = vunpack.c.l.b16 %v569
        %v624 = vunpack.c.h.b16 %v569
        %v625 = vunpack.c.l.b16 %v570
        %v626 = vunpack.c.h.b16 %v570
        %v627 = vunpack.c.l.b16 %v571
        %v628 = vunpack.c.h.b16 %v571
        %v629 = vunpack.c.l.b16 %v572
        %v630 = vunpack.c.l.b16 %v573
        %v631 = vunpack.c.h.b16 %v573
        %v632 = vunpack.c.l.b16 %v574
        %v633 = vunpack.c.h.b16 %v574
        %v634 = vunpack.c.l.b16 %v575
        %v635 = vunpack.c.h.b16 %v575
        %v636 = vunpack.c.l.b16 %v576
        %v637 = vunpack.c.l.b16 %v577
        %v638 = vunpack.c.h.b16 %v577
        %v639 = vunpack.c.l.b16 %v578
        %v640 = vunpack.c.h.b16 %v578
        %v641 = vunpack.c.l.b16 %v579
        %v642 = vunpack.c.h.b16 %v579
        %v643 = vunpack.c.l.b16 %v580
        %v644 = vunpack.c.l.b16 %v581
        %v645 = vunpack.c.h.b16 %v581
        %v646 = vunpack.c.l.b16 %v582
        %v647 = vunpack.c.h.b16 %v582
        %v648 = vunpack.c.l.b16 %v583
        %v649 = vunpack.c.h.b16 %v583
        %v650 = vunpack.c.l.b16 %v584
        %v651 = vpack.c.b16 %v616, %v609
        %v652 = vpack.c.b16 %v617, %v610
        %v653 = vpack.c.b16 %v618, %v611
        %v654 = vpack.c.b16 %v619, %v612
        %v655 = vpack.c.b16 %v620, %v613
        %v656 = vpack.c.b16 %v621, %v614
        %v657 = vpack.c.b16 %v622, %v615
        %v658 = vpack.c.b16 %v630, %v623
        %v659 = vpack.c.b16 %v631, %v624
        %v660 = vpack.c.b16 %v632, %v625
        %v661 = vpack.c.b16 %v633, %v626
        %v662 = vpack.c.b16 %v634, %v627
        %v663 = vpack.c.b16 %v635, %v628
        %v664 = vpack.c.b16 %v636, %v629
        %v665 = vpack.c.b16 %v644, %v637
        %v666 = vpack.c.b16 %v645, %v638
        %v667 = vpack.c.b16 %v646, %v639
        %v668 = vpack.c.b16 %v647, %v640
        %v669 = vpack.c.b16 %v648, %v641
        %v670 = vpack.c.b16 %v649, %v642
        %v671 = vpack.c.b16 %v650, %v643
        %v790 = vunpack.c.l.b16 %v459
        %v791 = vunpack.c.l.b16 %v460
        %v792 = vunpack.c.l.b16 %v461
        %v793 = vunpack.c.l.b16 %v462
        %v794 = vunpack.c.l.b16 %v463
        %v795 = vunpack.c.l.b16 %v464
        %v796 = vunpack.c.l.b16 %v465
        %v797 = vunpack.c.l.b16 %v466
        %v798 = vunpack.c.l.b16 %v467
        %v799 = vunpack.c.l.b16 %v468
        %v800 = vunpack.c.l.b16 %v469
        %v801 = vunpack.c.l.b16 %v470
        %v802 = vunpack.c.l.b16 %v471
        %v803 = vunpack.c.l.b16 %v472
        %v804 = vunpack.c.l.b16 %v473
        %v805 = vunpack.c.l.b16 %v474
        %v806 = vunpack.c.l.b16 %v475
        %v807 = vunpack.c.l.b16 %v476
        %v808 = vunpack.c.l.b16 %v477
        %v809 = vunpack.c.l.b16 %v478
        %v810 = vunpack.c.l.b16 %v479
        %v811 = vunpack.c.l.b16 %v480
        %v812 = vunpack.c.l.b16 %v481
        %v813 = vunpack.c.l.b16 %v482
        %v814 = vunpack.c.l.b16 %v483
        %v815 = vunpack.c.l.b16 %v484
        %v816 = vunpack.c.l.b16 %v485
        %v817 = vunpack.c.l.b16 %v486
        %v818 = vunpack.c.l.b16 %v487
        %v819 = vunpack.c.l.b16 %v488
        %v820 = vunpack.c.l.b16 %v489
        %v821 = vunpack.c.l.b16 %v490
        %v822 = vunpack.c.l.b16 %v491
        %v823 = vunpack.c.l.b16 %v492
        %v824 = vunpack.c.l.b16 %v493
        %v825 = vunpack.c.l.b16 %v494
        %v826 = vunpack.c.l.b16 %v495
        %v827 = vunpack.c.l.b16 %v496
        %v828 = vunpack.c.l.b16 %v497
        %v829 = vunpack.c.l.b16 %v498
        %v830 = vunpack.c.l.b16 %v499
        %v831 = vunpack.c.l.b16 %v500
        %v832 = vunpack.c.l.b16 %v501
        %v833 = vunpack.c.l.b16 %v502
        %v834 = vunpack.c.l.b16 %v503
        %v835 = vunpack.c.l.b16 %v504
        %v836 = vunpack.c.l.b16 %v505
        %v837 = vunpack.c.l.b16 %v506
        %v838 = vunpack.c.l.b16 %v507
        %v839 = vunpack.c.l.b16 %v508
        %v840 = vunpack.c.l.b16 %v509
        %v841 = vunpack.c.l.b16 %v510
        %v842 = vunpack.c.l.b16 %v511
        %v843 = vunpack.c.l.b16 %v512
        %v844 = vunpack.c.l.b16 %v513
        %v845 = vunpack.c.l.b16 %v514
        %v846 = vunpack.c.l.b16 %v515
        %v847 = vunpack.c.l.b16 %v516
        %v848 = vunpack.c.l.b16 %v517
        %v849 = vunpack.c.l.b16 %v518
        %v850 = vunpack.c.l.b16 %v519
        %v851 = vunpack.c.l.b16 %v520
        %v852 = vunpack.c.l.b16 %v521
        %v853 = vunpack.c.l.b16 %v522
        %v854 = vunpack.c.l.b16 %v523
        %v855 = vunpack.c.l.b16 %v524
        %v856 = vunpack.c.l.b16 %v525
        %v857 = vunpack.c.l.b16 %v526
        %v858 = vunpack.c.l.b16 %v527
        %v859 = vunpack.c.l.b16 %v528
        %v860 = vunpack.c.l.b16 %v529
        %v861 = vunpack.c.l.b16 %v530
        %v862 = vunpack.c.l.b16 %v531
        %v863 = vunpack.c.l.b16 %v532
        %v864 = vunpack.c.l.b16 %v533
        %v865 = vunpack.c.l.b16 %v534
        %v866 = vunpack.c.l.b16 %v535
        %v867 = vunpack.c.l.b16 %v536
        %v868 = vunpack.c.l.b16 %v537
        %v869 = vunpack.c.l.b16 %v538
        %v870 = vunpack.c.l.b16 %v539
        %v871 = vunpack.c.l.b16 %v540
        %v872 = vunpack.c.l.b16 %v541
        %v873 = vunpack.c.l.b16 %v542
        %v874 = vunpack.c.l.b16 %v543
        %v875 = vunpack.c.l.b16 %v544
        %v876 = vunpack.c.l.b16 %v545
        %v877 = vunpack.c.l.b16 %v546
        %v878 = vunpack.c.l.b16 %v547
        %v879 = vunpack.c.l.b16 %v548
        %v880 = vunpack.c.l.b16 %v549
        %v881 = vunpack.c.l.b16 %v550
        %v882 = vunpack.c.l.b16 %v551
        %v883 = vunpack.c.l.b16 %v552
        %v884 = vunpack.c.l.b16 %v553
        %v885 = vunpack.c.l.b16 %v554
        %v886 = vunpack.c.l.b16 %v555
        %v887 = vunpack.c.l.b16 %v556
        %v888 = vunpack.c.l.b16 %v557
        %v889 = vunpack.c.l.b16 %v558
        %v890 = vpack.c.b16 %v791, %v790
        %v891 = vpack.c.b16 %v793, %v792
        %v892 = vpack.c.b16 %v795, %v794
        %v893 = vpack.c.b16 %v797, %v796
        %v894 = vpack.c.b16 %v799, %v798
        %v895 = vpack.c.b16 %v801, %v800
        %v896 = vpack.c.b16 %v803, %v802
        %v897 = vpack.c.b16 %v805, %v804
        %v898 = vpack.c.b16 %v807, %v806
        %v899 = vpack.c.b16 %v809, %v808
        %v900 = vpack.c.b16 %v811, %v810
        %v901 = vpack.c.b16 %v813, %v812
        %v902 = vpack.c.b16 %v815, %v814
        %v903 = vpack.c.b16 %v817, %v816
        %v904 = vpack.c.b16 %v819, %v818
        %v905 = vpack.c.b16 %v821, %v820
        %v906 = vpack.c.b16 %v823, %v822
        %v907 = vpack.c.b16 %v825, %v824
        %v908 = vpack.c.b16 %v827, %v826
        %v909 = vpack.c.b16 %v829, %v828
        %v910 = vpack.c.b16 %v831, %v830
        %v911 = vpack.c.b16 %v833, %v832
        %v912 = vpack.c.b16 %v835, %v834
        %v913 = vpack.c.b16 %v837, %v836
        %v914 = vpack.c.b16 %v839, %v838
        %v915 = vpack.c.b16 %v841, %v840
        %v916 = vpack.c.b16 %v843, %v842
        %v917 = vpack.c.b16 %v845, %v844
        %v918 = vpack.c.b16 %v847, %v846
        %v919 = vpack.c.b16 %v849, %v848
        %v920 = vpack.c.b16 %v851, %v850
        %v921 = vpack.c.b16 %v853, %v852
        %v922 = vpack.c.b16 %v855, %v854
        %v923 = vpack.c.b16 %v857, %v856
        %v924 = vpack.c.b16 %v859, %v858
        %v925 = vpack.c.b16 %v861, %v860
        %v926 = vpack.c.b16 %v863, %v862
        %v927 = vpack.c.b16 %v865, %v864
        %v928 = vpack.c.b16 %v867, %v866
        %v929 = vpack.c.b16 %v869, %v868
        %v930 = vpack.c.b16 %v871, %v870
        %v931 = vpack.c.b16 %v873, %v872
        %v932 = vpack.c.b16 %v875, %v874
        %v933 = vpack.c.b16 %v877, %v876
        %v934 = vpack.c.b16 %v879, %v878
        %v935 = vpack.c.b16 %v881, %v880
        %v936 = vpack.c.b16 %v883, %v882
        %v937 = vpack.c.b16 %v885, %v884
        %v938 = vpack.c.b16 %v887, %v886
        %v939 = vpack.c.b16 %v889, %v888
        %vm990 = vcmask 261120
        %v992 = vsel %vm990, %v657, 0
        %v995 = vsel %vm990, %v664, 0
        %v998 = vsel %vm990, %v671, 0
        %1000 = vmatprep.subr.bf16.mxu0 0
        %1001 = vmatpush1.bf16.msra.mxu0 %v890
        %1002 = vmatprep.subr.bf16.mxu0 0
        %1003 = vmatpush1.bf16.msra.mxu0 %v891
        %1004 = vmatprep.subr.bf16.mxu0 0
        %1005 = vmatpush1.bf16.msra.mxu0 %v892
        %1006 = vmatprep.subr.bf16.mxu0 0
        %1007 = vmatpush1.bf16.msra.mxu0 %v893
        %1008 = vmatprep.subr.bf16.mxu0 0
        %1009 = vmatpush1.bf16.msra.mxu0 %v894
        %1010 = vmatprep.subr.bf16.mxu0 0
        %1011 = vmatpush1.bf16.msra.mxu0 %v895
        %1012 = vmatprep.subr.bf16.mxu0 0
        %1013 = vmatpush1.bf16.msra.mxu0 %v896
        %1014 = vmatprep.subr.bf16.mxu0 0
        %1015 = vmatpush1.bf16.msra.mxu0 %v897
        %1016 = vmatprep.subr.bf16.mxu0 0
        %1017 = vmatpush1.bf16.msra.mxu0 %v898
        %1018 = vmatprep.subr.bf16.mxu0 0
        %1019 = vmatpush1.bf16.msra.mxu0 %v899
        %1020 = vmatprep.subr.bf16.mxu0 0
        %1021 = vmatpush1.bf16.msra.mxu0 %v900
        %1022 = vmatprep.subr.bf16.mxu0 0
        %1023 = vmatpush1.bf16.msra.mxu0 %v901
        %1024 = vmatprep.subr.bf16.mxu0 0
        %1025 = vmatpush1.bf16.msra.mxu0 %v902
        %1026 = vmatprep.subr.bf16.mxu0 0
        %1027 = vmatpush1.bf16.msra.mxu0 %v903
        %1028 = vmatprep.subr.bf16.mxu0 0
        %1029 = vmatpush1.bf16.msra.mxu0 %v904
        %1030 = vmatprep.subr.bf16.mxu0 0
        %1031 = vmatpush1.bf16.msra.mxu0 %v905
        %1032 = vmatprep.mubr.bf16.mxu0 %v652
        %1033 = vmatmul.mubr.bf16.gmra.mrb[0].mxu0 %v651
        %v1034 = vpop.f32.mrb[0].mxu0
        %v1035 = vadd.f32 0.0, %v1034
        %v1036 = vpop.f32.mrb[0].mxu0
        %v1037 = vpop.f32.mrb[0].mxu0
        %v1038 = vadd.f32 0.0, %v1037
        %v1039 = vpop.f32.mrb[0].mxu0
        %1040 = vmatprep.mubr.bf16.mxu0 %v659
        %1041 = vmatmul.mubr.bf16.gmra.mrb[0].mxu0 %v658
        %v1042 = vpop.f32.mrb[0].mxu0
        %v1043 = vadd.f32 0.0, %v1042
        %v1044 = vpop.f32.mrb[0].mxu0
        %v1045 = vpop.f32.mrb[0].mxu0
        %v1046 = vadd.f32 0.0, %v1045
        %v1047 = vpop.f32.mrb[0].mxu0
        %1048 = vmatprep.mubr.bf16.mxu0 %v666
        %1049 = vmatmul.mubr.bf16.gmra.mrb[0].mxu0 %v665
        %v1050 = vpop.f32.mrb[0].mxu0
        %v1051 = vadd.f32 0.0, %v1050
        %v1052 = vpop.f32.mrb[0].mxu0
        %v1053 = vpop.f32.mrb[0].mxu0
        %v1054 = vadd.f32 0.0, %v1053
        %v1055 = vpop.f32.mrb[0].mxu0
        %1056 = vdwg.mxu0
        %1057 = vmatprep.subr.bf16.mxu0 0
        %1058 = vmatpush1.bf16.msra.mxu0 %v906
        %1059 = vmatprep.subr.bf16.mxu0 0
        %1060 = vmatpush1.bf16.msra.mxu0 %v907
        %1061 = vmatprep.subr.bf16.mxu0 0
        %1062 = vmatpush1.bf16.msra.mxu0 %v908
        %1063 = vmatprep.subr.bf16.mxu0 0
        %1064 = vmatpush1.bf16.msra.mxu0 %v909
        %1065 = vmatprep.subr.bf16.mxu0 0
        %1066 = vmatpush1.bf16.msra.mxu0 %v910
        %1067 = vmatprep.subr.bf16.mxu0 0
        %1068 = vmatpush1.bf16.msra.mxu0 %v911
        %1069 = vmatprep.subr.bf16.mxu0 0
        %1070 = vmatpush1.bf16.msra.mxu0 %v912
        %1071 = vmatprep.subr.bf16.mxu0 0
        %1072 = vmatpush1.bf16.msra.mxu0 %v913
        %1073 = vmatprep.subr.bf16.mxu0 0
        %1074 = vmatpush1.bf16.msra.mxu0 %v914
        %1075 = vmatprep.subr.bf16.mxu0 0
        %1076 = vmatpush1.bf16.msra.mxu0 %v915
        %1077 = vmatprep.subr.bf16.mxu0 0
        %1078 = vmatpush1.bf16.msra.mxu0 %v916
        %1079 = vmatprep.subr.bf16.mxu0 0
        %1080 = vmatpush1.bf16.msra.mxu0 %v917
        %1081 = vmatprep.subr.bf16.mxu0 0
        %1082 = vmatpush1.bf16.msra.mxu0 %v918
        %1083 = vmatprep.subr.bf16.mxu0 0
        %1084 = vmatpush1.bf16.msra.mxu0 %v919
        %1085 = vmatprep.subr.bf16.mxu0 0
        %1086 = vmatpush1.bf16.msra.mxu0 %v920
        %1087 = vmatprep.subr.bf16.mxu0 0
        %1088 = vmatpush1.bf16.msra.mxu0 %v921
        %1089 = vmatprep.mubr.bf16.mxu0 %v654
        %1090 = vmatmul.mubr.bf16.gmra.mrb[0].mxu0 %v653
        %v1091 = vpop.f32.mrb[0].mxu0
        %v1092 = vadd.f32 %v1035, %v1091
        %v1093 = vpop.f32.mrb[0].mxu0
        %v1094 = vpop.f32.mrb[0].mxu0
        %v1095 = vadd.f32 %v1038, %v1094
        %v1096 = vpop.f32.mrb[0].mxu0
        %1097 = vmatprep.mubr.bf16.mxu0 %v661
        %1098 = vmatmul.mubr.bf16.gmra.mrb[0].mxu0 %v660
        %v1099 = vpop.f32.mrb[0].mxu0
        %v1100 = vadd.f32 %v1043, %v1099
        %v1101 = vpop.f32.mrb[0].mxu0
        %v1102 = vpop.f32.mrb[0].mxu0
        %v1103 = vadd.f32 %v1046, %v1102
        %v1104 = vpop.f32.mrb[0].mxu0
        %1105 = vmatprep.mubr.bf16.mxu0 %v668
        %1106 = vmatmul.mubr.bf16.gmra.mrb[0].mxu0 %v667
        %v1107 = vpop.f32.mrb[0].mxu0
        %v1108 = vadd.f32 %v1051, %v1107
        %v1109 = vpop.f32.mrb[0].mxu0
        %v1110 = vpop.f32.mrb[0].mxu0
        %v1111 = vadd.f32 %v1054, %v1110
        %v1112 = vpop.f32.mrb[0].mxu0
        %1113 = vdwg.mxu0
        %1114 = vmatprep.subr.bf16.mxu0 0
        %1115 = vmatpush1.bf16.msra.mxu0 %v922
        %1116 = vmatprep.subr.bf16.mxu0 0
        %1117 = vmatpush1.bf16.msra.mxu0 %v923
        %1118 = vmatprep.subr.bf16.mxu0 0
        %1119 = vmatpush1.bf16.msra.mxu0 %v924
        %1120 = vmatprep.subr.bf16.mxu0 0
        %1121 = vmatpush1.bf16.msra.mxu0 %v925
        %1122 = vmatprep.subr.bf16.mxu0 0
        %1123 = vmatpush1.bf16.msra.mxu0 %v926
        %1124 = vmatprep.subr.bf16.mxu0 0
        %1125 = vmatpush1.bf16.msra.mxu0 %v927
        %1126 = vmatprep.subr.bf16.mxu0 0
        %1127 = vmatpush1.bf16.msra.mxu0 %v928
        %1128 = vmatprep.subr.bf16.mxu0 0
        %1129 = vmatpush1.bf16.msra.mxu0 %v929
        %1130 = vmatprep.subr.bf16.mxu0 0
        %1131 = vmatpush1.bf16.msra.mxu0 %v930
        %1132 = vmatprep.subr.bf16.mxu0 0
        %1133 = vmatpush1.bf16.msra.mxu0 %v931
        %1134 = vmatprep.subr.bf16.mxu0 0
        %1135 = vmatpush1.bf16.msra.mxu0 %v932
        %1136 = vmatprep.subr.bf16.mxu0 0
        %1137 = vmatpush1.bf16.msra.mxu0 %v933
        %1138 = vmatprep.subr.bf16.mxu0 0
        %1139 = vmatpush1.bf16.msra.mxu0 %v934
        %1140 = vmatprep.subr.bf16.mxu0 0
        %1141 = vmatpush1.bf16.msra.mxu0 %v935
        %1142 = vmatprep.subr.bf16.mxu0 0
        %1143 = vmatpush1.bf16.msra.mxu0 %v936
        %1144 = vmatprep.subr.bf16.mxu0 0
        %1145 = vmatpush1.bf16.msra.mxu0 %v937
        %1146 = vmatprep.mubr.bf16.mxu0 %v656
        %1147 = vmatmul.mubr.bf16.gmra.mrb[0].mxu0 %v655
        %v1148 = vpop.f32.mrb[0].mxu0
        %v1149 = vadd.f32 %v1092, %v1148
        %v1150 = vpop.f32.mrb[0].mxu0
        %v1151 = vpop.f32.mrb[0].mxu0
        %v1152 = vadd.f32 %v1095, %v1151
        %v1153 = vpop.f32.mrb[0].mxu0
        %1154 = vmatprep.mubr.bf16.mxu0 %v663
        %1155 = vmatmul.mubr.bf16.gmra.mrb[0].mxu0 %v662
        %v1156 = vpop.f32.mrb[0].mxu0
        %v1157 = vadd.f32 %v1100, %v1156
        %v1158 = vpop.f32.mrb[0].mxu0
        %v1159 = vpop.f32.mrb[0].mxu0
        %v1160 = vadd.f32 %v1103, %v1159
        %v1161 = vpop.f32.mrb[0].mxu0
        %1162 = vmatprep.mubr.bf16.mxu0 %v670
        %1163 = vmatmul.mubr.bf16.gmra.mrb[0].mxu0 %v669
        %v1164 = vpop.f32.mrb[0].mxu0
        %v1165 = vadd.f32 %v1108, %v1164
        %v1166 = vpop.f32.mrb[0].mxu0
        %v1167 = vpop.f32.mrb[0].mxu0
        %v1168 = vadd.f32 %v1111, %v1167
        %v1169 = vpop.f32.mrb[0].mxu0
        %1170 = vdwg.mxu0
        %1171 = vmatprep.subr.bf16.mxu0 0
        %1172 = vmatpush1.bf16.msra.mxu0 %v938
        %1173 = vmatprep.subr.bf16.mxu0 0
        %1174 = vmatpush1.bf16.msra.mxu0 %v939
        %1175 = vmatprep.subr.bf16.mxu0 0
        %1176 = vmatpush1.bf16.msra.mxu0 0
        %1177 = vmatprep.subr.bf16.mxu0 0
        %1178 = vmatpush1.bf16.msra.mxu0 0
        %1179 = vmatprep.subr.bf16.mxu0 0
        %1180 = vmatpush1.bf16.msra.mxu0 0
        %1181 = vmatprep.subr.bf16.mxu0 0
        %1182 = vmatpush1.bf16.msra.mxu0 0
        %1183 = vmatprep.subr.bf16.mxu0 0
        %1184 = vmatpush1.bf16.msra.mxu0 0
        %1185 = vmatprep.subr.bf16.mxu0 0
        %1186 = vmatpush1.bf16.msra.mxu0 0
        %1187 = vmatprep.subr.bf16.mxu0 0
        %1188 = vmatpush1.bf16.msra.mxu0 0
        %1189 = vmatprep.subr.bf16.mxu0 0
        %1190 = vmatpush1.bf16.msra.mxu0 0
        %1191 = vmatprep.subr.bf16.mxu0 0
        %1192 = vmatpush1.bf16.msra.mxu0 0
        %1193 = vmatprep.subr.bf16.mxu0 0
        %1194 = vmatpush1.bf16.msra.mxu0 0
        %1195 = vmatprep.subr.bf16.mxu0 0
        %1196 = vmatpush1.bf16.msra.mxu0 0
        %1197 = vmatprep.subr.bf16.mxu0 0
        %1198 = vmatpush1.bf16.msra.mxu0 0
        %1199 = vmatprep.subr.bf16.mxu0 0
        %1200 = vmatpush1.bf16.msra.mxu0 0
        %1201 = vmatprep.subr.bf16.mxu0 0
        %1202 = vmatpush1.bf16.msra.mxu0 0
        %1203 = vmatprep.mubr.bf16.mxu0 0
        %1204 = vmatmul.mubr.bf16.gmra.mrb[0].mxu0 %v992
        %v1205 = vpop.f32.mrb[0].mxu0
        %v1206 = vadd.f32 %v1149, %v1205
        %v1207 = vpop.f32.mrb[0].mxu0
        %v1208 = vpop.f32.mrb[0].mxu0
        %v1209 = vadd.f32 %v1152, %v1208
        %v1210 = vpop.f32.mrb[0].mxu0
        %1211 = vmatprep.mubr.bf16.mxu0 0
        %1212 = vmatmul.mubr.bf16.gmra.mrb[0].mxu0 %v995
        %v1213 = vpop.f32.mrb[0].mxu0
        %v1214 = vadd.f32 %v1157, %v1213
        %v1215 = vpop.f32.mrb[0].mxu0
        %v1216 = vpop.f32.mrb[0].mxu0
        %v1217 = vadd.f32 %v1160, %v1216
        %v1218 = vpop.f32.mrb[0].mxu0
        %1219 = vmatprep.mubr.bf16.mxu0 0
        %1220 = vmatmul.mubr.bf16.gmra.mrb[0].mxu0 %v998
        %v1221 = vpop.f32.mrb[0].mxu0
        %v1222 = vadd.f32 %v1165, %v1221
        %v1223 = vpop.f32.mrb[0].mxu0
        %v1224 = vpop.f32.mrb[0].mxu0
        %v1225 = vadd.f32 %v1168, %v1224
        %v1226 = vpop.f32.mrb[0].mxu0
        %1227 = vdwg.mxu0
        %v1229 = vlaneseq
        %v1230 = vshrl.u32 %v1229, 7
        %v1231 = vsub.s32 0, %v1230
        %v1232 = vrot.slane %v559, %v1231
        %v1234 = vmul.f32 %v1206, %v1232
        %v1235 = vmul.f32 %v1209, %v1232
        %v1236 = vmul.f32 %v1214, %v1232
        %v1237 = vmul.f32 %v1217, %v1232
        %v1238 = vmul.f32 %v1222, %v1232
        %v1239 = vmul.f32 %v1225, %v1232
        %v1241 = vlaneseq
        %v1242 = vshrl.u32 %v1241, 7
        %v1243 = vsub.s32 0, %v1242
        %v1244 = vrot.slane %v560, %v1243
        %v1246 = vadd.f32 %v1234, %v1244
        %v1247 = vadd.f32 %v1235, %v1244
        %v1248 = vadd.f32 %v1236, %v1244
        %v1249 = vadd.f32 %v1237, %v1244
        %v1250 = vadd.f32 %v1238, %v1244
        %v1251 = vadd.f32 %v1239, %v1244
        %v1252 = vmax.f32 %v1246, 0.0
        %v1253 = vmax.f32 %v1247, 0.0
        %v1254 = vmax.f32 %v1248, 0.0
        %v1255 = vmax.f32 %v1249, 0.0
        %v1256 = vmax.f32 %v1250, 0.0
        %v1257 = vmax.f32 %v1251, 0.0
        %v1258 = vld [vmem:[%s412] sm:$0xff]
        %v1259 = vld [vmem:[%s412 + $0x8] sm:$0xff]
        %v1260 = vld [vmem:[%s412 + $0x10] sm:$0xff]
        %v1261 = vld [vmem:[%s412 + $0x18] sm:$0xf]
        %v1262 = vld [vmem:[%s412 + $0x1c] sm:$0xff]
        %v1263 = vld [vmem:[%s412 + $0x24] sm:$0xff]
        %v1264 = vld [vmem:[%s412 + $0x2c] sm:$0xff]
        %v1265 = vld [vmem:[%s412 + $0x34] sm:$0xf]
        %v1266 = vld [vmem:[%s412 + $0x38] sm:$0xff]
        %v1267 = vld [vmem:[%s412 + $0x40] sm:$0xff]
        %v1268 = vld [vmem:[%s412 + $0x48] sm:$0xff]
        %v1269 = vld [vmem:[%s412 + $0x50] sm:$0xf]
        %v1270 = vld [vmem:[%s412 + $0x54] sm:$0xff]
        %v1271 = vld [vmem:[%s412 + $0x5c] sm:$0xff]
        %v1272 = vld [vmem:[%s412 + $0x64] sm:$0xff]
        %v1273 = vld [vmem:[%s412 + $0x6c] sm:$0xf]
        %v1274 = vld [vmem:[%s412 + $0x70] sm:$0xff]
        %v1275 = vld [vmem:[%s412 + $0x78] sm:$0xff]
        %v1276 = vld [vmem:[%s412 + $0x80] sm:$0xff]
        %v1277 = vld [vmem:[%s412 + $0x88] sm:$0xf]
        %v1278 = vld [vmem:[%s412 + $0x8c] sm:$0xff]
        %v1279 = vld [vmem:[%s412 + $0x94] sm:$0xff]
        %v1280 = vld [vmem:[%s412 + $0x9c] sm:$0xff]
        %v1281 = vld [vmem:[%s412 + $0xa4] sm:$0xf]
        %v1306 = vunpack.c.l.b16 %v1258
        %v1307 = vunpack.c.h.b16 %v1258
        %v1308 = vunpack.c.l.b16 %v1259
        %v1309 = vunpack.c.h.b16 %v1259
        %v1310 = vunpack.c.l.b16 %v1260
        %v1311 = vunpack.c.h.b16 %v1260
        %v1312 = vunpack.c.l.b16 %v1261
        %v1313 = vunpack.c.l.b16 %v1262
        %v1314 = vunpack.c.h.b16 %v1262
        %v1315 = vunpack.c.l.b16 %v1263
        %v1316 = vunpack.c.h.b16 %v1263
        %v1317 = vunpack.c.l.b16 %v1264
        %v1318 = vunpack.c.h.b16 %v1264
        %v1319 = vunpack.c.l.b16 %v1265
        %v1320 = vunpack.c.l.b16 %v1266
        %v1321 = vunpack.c.h.b16 %v1266
        %v1322 = vunpack.c.l.b16 %v1267
        %v1323 = vunpack.c.h.b16 %v1267
        %v1324 = vunpack.c.l.b16 %v1268
        %v1325 = vunpack.c.h.b16 %v1268
        %v1326 = vunpack.c.l.b16 %v1269
        %v1327 = vunpack.c.l.b16 %v1270
        %v1328 = vunpack.c.h.b16 %v1270
        %v1329 = vunpack.c.l.b16 %v1271
        %v1330 = vunpack.c.h.b16 %v1271
        %v1331 = vunpack.c.l.b16 %v1272
        %v1332 = vunpack.c.h.b16 %v1272
        %v1333 = vunpack.c.l.b16 %v1273
        %v1334 = vunpack.c.l.b16 %v1274
        %v1335 = vunpack.c.h.b16 %v1274
        %v1336 = vunpack.c.l.b16 %v1275
        %v1337 = vunpack.c.h.b16 %v1275
        %v1338 = vunpack.c.l.b16 %v1276
        %v1339 = vunpack.c.h.b16 %v1276
        %v1340 = vunpack.c.l.b16 %v1277
        %v1341 = vunpack.c.l.b16 %v1278
        %v1342 = vunpack.c.h.b16 %v1278
        %v1343 = vunpack.c.l.b16 %v1279
        %v1344 = vunpack.c.h.b16 %v1279
        %v1345 = vunpack.c.l.b16 %v1280
        %v1346 = vunpack.c.h.b16 %v1280
        %v1347 = vunpack.c.l.b16 %v1281
        %v1348 = vpack.c.b16 %v1313, %v1306
        %v1349 = vpack.c.b16 %v1314, %v1307
        %v1350 = vpack.c.b16 %v1315, %v1308
        %v1351 = vpack.c.b16 %v1316, %v1309
        %v1352 = vpack.c.b16 %v1317, %v1310
        %v1353 = vpack.c.b16 %v1318, %v1311
        %v1354 = vpack.c.b16 %v1319, %v1312
        %v1355 = vpack.c.b16 %v1327, %v1320
        %v1356 = vpack.c.b16 %v1328, %v1321
        %v1357 = vpack.c.b16 %v1329, %v1322
        %v1358 = vpack.c.b16 %v1330, %v1323
        %v1359 = vpack.c.b16 %v1331, %v1324
        %v1360 = vpack.c.b16 %v1332, %v1325
        %v1361 = vpack.c.b16 %v1333, %v1326
        %v1362 = vpack.c.b16 %v1341, %v1334
        %v1363 = vpack.c.b16 %v1342, %v1335
        %v1364 = vpack.c.b16 %v1343, %v1336
        %v1365 = vpack.c.b16 %v1344, %v1337
        %v1366 = vpack.c.b16 %v1345, %v1338
        %v1367 = vpack.c.b16 %v1346, %v1339
        %v1368 = vpack.c.b16 %v1347, %v1340
        %v1388 = vsel %vm990, %v1354, 0
        %v1391 = vsel %vm990, %v1361, 0
        %v1394 = vsel %vm990, %v1368, 0
        %1396 = vmatprep.subr.bf16.mxu0 0
        %1397 = vmatpush1.bf16.msra.mxu0 %v890
        %1398 = vmatprep.subr.bf16.mxu0 0
        %1399 = vmatpush1.bf16.msra.mxu0 %v891
        %1400 = vmatprep.subr.bf16.mxu0 0
        %1401 = vmatpush1.bf16.msra.mxu0 %v892
        %1402 = vmatprep.subr.bf16.mxu0 0
        %1403 = vmatpush1.bf16.msra.mxu0 %v893
        %1404 = vmatprep.subr.bf16.mxu0 0
        %1405 = vmatpush1.bf16.msra.mxu0 %v894
        %1406 = vmatprep.subr.bf16.mxu0 0
        %1407 = vmatpush1.bf16.msra.mxu0 %v895
        %1408 = vmatprep.subr.bf16.mxu0 0
        %1409 = vmatpush1.bf16.msra.mxu0 %v896
        %1410 = vmatprep.subr.bf16.mxu0 0
        %1411 = vmatpush1.bf16.msra.mxu0 %v897
        %1412 = vmatprep.subr.bf16.mxu0 0
        %1413 = vmatpush1.bf16.msra.mxu0 %v898
        %1414 = vmatprep.subr.bf16.mxu0 0
        %1415 = vmatpush1.bf16.msra.mxu0 %v899
        %1416 = vmatprep.subr.bf16.mxu0 0
        %1417 = vmatpush1.bf16.msra.mxu0 %v900
        %1418 = vmatprep.subr.bf16.mxu0 0
        %1419 = vmatpush1.bf16.msra.mxu0 %v901
        %1420 = vmatprep.subr.bf16.mxu0 0
        %1421 = vmatpush1.bf16.msra.mxu0 %v902
        %1422 = vmatprep.subr.bf16.mxu0 0
        %1423 = vmatpush1.bf16.msra.mxu0 %v903
        %1424 = vmatprep.subr.bf16.mxu0 0
        %1425 = vmatpush1.bf16.msra.mxu0 %v904
        %1426 = vmatprep.subr.bf16.mxu0 0
        %1427 = vmatpush1.bf16.msra.mxu0 %v905
        %1428 = vmatprep.mubr.bf16.mxu0 %v1349
        %1429 = vmatmul.mubr.bf16.gmra.mrb[0].mxu0 %v1348
        %v1430 = vpop.f32.mrb[0].mxu0
        %v1431 = vadd.f32 0.0, %v1430
        %v1432 = vpop.f32.mrb[0].mxu0
        %v1433 = vpop.f32.mrb[0].mxu0
        %v1434 = vadd.f32 0.0, %v1433
        %v1435 = vpop.f32.mrb[0].mxu0
        %1436 = vmatprep.mubr.bf16.mxu0 %v1356
        %1437 = vmatmul.mubr.bf16.gmra.mrb[0].mxu0 %v1355
        %v1438 = vpop.f32.mrb[0].mxu0
        %v1439 = vadd.f32 0.0, %v1438
        %v1440 = vpop.f32.mrb[0].mxu0
        %v1441 = vpop.f32.mrb[0].mxu0
        %v1442 = vadd.f32 0.0, %v1441
        %v1443 = vpop.f32.mrb[0].mxu0
        %1444 = vmatprep.mubr.bf16.mxu0 %v1363
        %1445 = vmatmul.mubr.bf16.gmra.mrb[0].mxu0 %v1362
        %v1446 = vpop.f32.mrb[0].mxu0
        %v1447 = vadd.f32 0.0, %v1446
        %v1448 = vpop.f32.mrb[0].mxu0
        %v1449 = vpop.f32.mrb[0].mxu0
        %v1450 = vadd.f32 0.0, %v1449
        %v1451 = vpop.f32.mrb[0].mxu0
        %1452 = vdwg.mxu0
        %1453 = vmatprep.subr.bf16.mxu0 0
        %1454 = vmatpush1.bf16.msra.mxu0 %v906
        %1455 = vmatprep.subr.bf16.mxu0 0
        %1456 = vmatpush1.bf16.msra.mxu0 %v907
        %1457 = vmatprep.subr.bf16.mxu0 0
        %1458 = vmatpush1.bf16.msra.mxu0 %v908
        %1459 = vmatprep.subr.bf16.mxu0 0
        %1460 = vmatpush1.bf16.msra.mxu0 %v909
        %1461 = vmatprep.subr.bf16.mxu0 0
        %1462 = vmatpush1.bf16.msra.mxu0 %v910
        %1463 = vmatprep.subr.bf16.mxu0 0
        %1464 = vmatpush1.bf16.msra.mxu0 %v911
        %1465 = vmatprep.subr.bf16.mxu0 0
        %1466 = vmatpush1.bf16.msra.mxu0 %v912
        %1467 = vmatprep.subr.bf16.mxu0 0
        %1468 = vmatpush1.bf16.msra.mxu0 %v913
        %1469 = vmatprep.subr.bf16.mxu0 0
        %1470 = vmatpush1.bf16.msra.mxu0 %v914
        %1471 = vmatprep.subr.bf16.mxu0 0
        %1472 = vmatpush1.bf16.msra.mxu0 %v915
        %1473 = vmatprep.subr.bf16.mxu0 0
        %1474 = vmatpush1.bf16.msra.mxu0 %v916
        %1475 = vmatprep.subr.bf16.mxu0 0
        %1476 = vmatpush1.bf16.msra.mxu0 %v917
        %1477 = vmatprep.subr.bf16.mxu0 0
        %1478 = vmatpush1.bf16.msra.mxu0 %v918
        %1479 = vmatprep.subr.bf16.mxu0 0
        %1480 = vmatpush1.bf16.msra.mxu0 %v919
        %1481 = vmatprep.subr.bf16.mxu0 0
        %1482 = vmatpush1.bf16.msra.mxu0 %v920
        %1483 = vmatprep.subr.bf16.mxu0 0
        %1484 = vmatpush1.bf16.msra.mxu0 %v921
        %1485 = vmatprep.mubr.bf16.mxu0 %v1351
        %1486 = vmatmul.mubr.bf16.gmra.mrb[0].mxu0 %v1350
        %v1487 = vpop.f32.mrb[0].mxu0
        %v1488 = vadd.f32 %v1431, %v1487
        %v1489 = vpop.f32.mrb[0].mxu0
        %v1490 = vpop.f32.mrb[0].mxu0
        %v1491 = vadd.f32 %v1434, %v1490
        %v1492 = vpop.f32.mrb[0].mxu0
        %1493 = vmatprep.mubr.bf16.mxu0 %v1358
        %1494 = vmatmul.mubr.bf16.gmra.mrb[0].mxu0 %v1357
        %v1495 = vpop.f32.mrb[0].mxu0
        %v1496 = vadd.f32 %v1439, %v1495
        %v1497 = vpop.f32.mrb[0].mxu0
        %v1498 = vpop.f32.mrb[0].mxu0
        %v1499 = vadd.f32 %v1442, %v1498
        %v1500 = vpop.f32.mrb[0].mxu0
        %1501 = vmatprep.mubr.bf16.mxu0 %v1365
        %1502 = vmatmul.mubr.bf16.gmra.mrb[0].mxu0 %v1364
        %v1503 = vpop.f32.mrb[0].mxu0
        %v1504 = vadd.f32 %v1447, %v1503
        %v1505 = vpop.f32.mrb[0].mxu0
        %v1506 = vpop.f32.mrb[0].mxu0
        %v1507 = vadd.f32 %v1450, %v1506
        %v1508 = vpop.f32.mrb[0].mxu0
        %1509 = vdwg.mxu0
        %1510 = vmatprep.subr.bf16.mxu0 0
        %1511 = vmatpush1.bf16.msra.mxu0 %v922
        %1512 = vmatprep.subr.bf16.mxu0 0
        %1513 = vmatpush1.bf16.msra.mxu0 %v923
        %1514 = vmatprep.subr.bf16.mxu0 0
        %1515 = vmatpush1.bf16.msra.mxu0 %v924
        %1516 = vmatprep.subr.bf16.mxu0 0
        %1517 = vmatpush1.bf16.msra.mxu0 %v925
        %1518 = vmatprep.subr.bf16.mxu0 0
        %1519 = vmatpush1.bf16.msra.mxu0 %v926
        %1520 = vmatprep.subr.bf16.mxu0 0
        %1521 = vmatpush1.bf16.msra.mxu0 %v927
        %1522 = vmatprep.subr.bf16.mxu0 0
        %1523 = vmatpush1.bf16.msra.mxu0 %v928
        %1524 = vmatprep.subr.bf16.mxu0 0
        %1525 = vmatpush1.bf16.msra.mxu0 %v929
        %1526 = vmatprep.subr.bf16.mxu0 0
        %1527 = vmatpush1.bf16.msra.mxu0 %v930
        %1528 = vmatprep.subr.bf16.mxu0 0
        %1529 = vmatpush1.bf16.msra.mxu0 %v931
        %1530 = vmatprep.subr.bf16.mxu0 0
        %1531 = vmatpush1.bf16.msra.mxu0 %v932
        %1532 = vmatprep.subr.bf16.mxu0 0
        %1533 = vmatpush1.bf16.msra.mxu0 %v933
        %1534 = vmatprep.subr.bf16.mxu0 0
        %1535 = vmatpush1.bf16.msra.mxu0 %v934
        %1536 = vmatprep.subr.bf16.mxu0 0
        %1537 = vmatpush1.bf16.msra.mxu0 %v935
        %1538 = vmatprep.subr.bf16.mxu0 0
        %1539 = vmatpush1.bf16.msra.mxu0 %v936
        %1540 = vmatprep.subr.bf16.mxu0 0
        %1541 = vmatpush1.bf16.msra.mxu0 %v937
        %1542 = vmatprep.mubr.bf16.mxu0 %v1353
        %1543 = vmatmul.mubr.bf16.gmra.mrb[0].mxu0 %v1352
        %v1544 = vpop.f32.mrb[0].mxu0
        %v1545 = vadd.f32 %v1488, %v1544
        %v1546 = vpop.f32.mrb[0].mxu0
        %v1547 = vpop.f32.mrb[0].mxu0
        %v1548 = vadd.f32 %v1491, %v1547
        %v1549 = vpop.f32.mrb[0].mxu0
        %1550 = vmatprep.mubr.bf16.mxu0 %v1360
        %1551 = vmatmul.mubr.bf16.gmra.mrb[0].mxu0 %v1359
        %v1552 = vpop.f32.mrb[0].mxu0
        %v1553 = vadd.f32 %v1496, %v1552
        %v1554 = vpop.f32.mrb[0].mxu0
        %v1555 = vpop.f32.mrb[0].mxu0
        %v1556 = vadd.f32 %v1499, %v1555
        %v1557 = vpop.f32.mrb[0].mxu0
        %1558 = vmatprep.mubr.bf16.mxu0 %v1367
        %1559 = vmatmul.mubr.bf16.gmra.mrb[0].mxu0 %v1366
        %v1560 = vpop.f32.mrb[0].mxu0
        %v1561 = vadd.f32 %v1504, %v1560
        %v1562 = vpop.f32.mrb[0].mxu0
        %v1563 = vpop.f32.mrb[0].mxu0
        %v1564 = vadd.f32 %v1507, %v1563
        %v1565 = vpop.f32.mrb[0].mxu0
        %1566 = vdwg.mxu0
        %1567 = vmatprep.subr.bf16.mxu0 0
        %1568 = vmatpush1.bf16.msra.mxu0 %v938
        %1569 = vmatprep.subr.bf16.mxu0 0
        %1570 = vmatpush1.bf16.msra.mxu0 %v939
        %1571 = vmatprep.subr.bf16.mxu0 0
        %1572 = vmatpush1.bf16.msra.mxu0 0
        %1573 = vmatprep.subr.bf16.mxu0 0
        %1574 = vmatpush1.bf16.msra.mxu0 0
        %1575 = vmatprep.subr.bf16.mxu0 0
        %1576 = vmatpush1.bf16.msra.mxu0 0
        %1577 = vmatprep.subr.bf16.mxu0 0
        %1578 = vmatpush1.bf16.msra.mxu0 0
        %1579 = vmatprep.subr.bf16.mxu0 0
        %1580 = vmatpush1.bf16.msra.mxu0 0
        %1581 = vmatprep.subr.bf16.mxu0 0
        %1582 = vmatpush1.bf16.msra.mxu0 0
        %1583 = vmatprep.subr.bf16.mxu0 0
        %1584 = vmatpush1.bf16.msra.mxu0 0
        %1585 = vmatprep.subr.bf16.mxu0 0
        %1586 = vmatpush1.bf16.msra.mxu0 0
        %1587 = vmatprep.subr.bf16.mxu0 0
        %1588 = vmatpush1.bf16.msra.mxu0 0
        %1589 = vmatprep.subr.bf16.mxu0 0
        %1590 = vmatpush1.bf16.msra.mxu0 0
        %1591 = vmatprep.subr.bf16.mxu0 0
        %1592 = vmatpush1.bf16.msra.mxu0 0
        %1593 = vmatprep.subr.bf16.mxu0 0
        %1594 = vmatpush1.bf16.msra.mxu0 0
        %1595 = vmatprep.subr.bf16.mxu0 0
        %1596 = vmatpush1.bf16.msra.mxu0 0
        %1597 = vmatprep.subr.bf16.mxu0 0
        %1598 = vmatpush1.bf16.msra.mxu0 0
        %1599 = vmatprep.mubr.bf16.mxu0 0
        %1600 = vmatmul.mubr.bf16.gmra.mrb[0].mxu0 %v1388
        %v1601 = vpop.f32.mrb[0].mxu0
        %v1602 = vadd.f32 %v1545, %v1601
        %v1603 = vpop.f32.mrb[0].mxu0
        %v1604 = vpop.f32.mrb[0].mxu0
        %v1605 = vadd.f32 %v1548, %v1604
        %v1606 = vpop.f32.mrb[0].mxu0
        %1607 = vmatprep.mubr.bf16.mxu0 0
        %1608 = vmatmul.mubr.bf16.gmra.mrb[0].mxu0 %v1391
        %v1609 = vpop.f32.mrb[0].mxu0
        %v1610 = vadd.f32 %v1553, %v1609
        %v1611 = vpop.f32.mrb[0].mxu0
        %v1612 = vpop.f32.mrb[0].mxu0
        %v1613 = vadd.f32 %v1556, %v1612
        %v1614 = vpop.f32.mrb[0].mxu0
        %1615 = vmatprep.mubr.bf16.mxu0 0
        %1616 = vmatmul.mubr.bf16.gmra.mrb[0].mxu0 %v1394
        %v1617 = vpop.f32.mrb[0].mxu0
        %v1618 = vadd.f32 %v1561, %v1617
        %v1619 = vpop.f32.mrb[0].mxu0
        %v1620 = vpop.f32.mrb[0].mxu0
        %v1621 = vadd.f32 %v1564, %v1620
        %v1622 = vpop.f32.mrb[0].mxu0
        %1623 = vdwg.mxu0
        %v1624 = vmul.f32 %v1602, %v1232
        %v1625 = vmul.f32 %v1605, %v1232
        %v1626 = vmul.f32 %v1610, %v1232
        %v1627 = vmul.f32 %v1613, %v1232
        %v1628 = vmul.f32 %v1618, %v1232
        %v1629 = vmul.f32 %v1621, %v1232
        %v1630 = vadd.f32 %v1624, %v1244
        %v1631 = vadd.f32 %v1625, %v1244
        %v1632 = vadd.f32 %v1626, %v1244
        %v1633 = vadd.f32 %v1627, %v1244
        %v1634 = vadd.f32 %v1628, %v1244
        %v1635 = vadd.f32 %v1629, %v1244
        %v1636 = vmax.f32 %v1630, 0.0
        %v1637 = vmax.f32 %v1631, 0.0
        %v1638 = vmax.f32 %v1632, 0.0
        %v1639 = vmax.f32 %v1633, 0.0
        %v1640 = vmax.f32 %v1634, 0.0
        %v1641 = vmax.f32 %v1635, 0.0
        %v1642 = vmax.f32 %v1252, %v1636
        %v1643 = vmax.f32 %v1253, %v1637
        %v1644 = vmax.f32 %v1254, %v1638
        %v1645 = vmax.f32 %v1255, %v1639
        %v1646 = vmax.f32 %v1256, %v1640
        %v1647 = vmax.f32 %v1257, %v1641
        %v1648 = vld [vmem:[%s429] sm:$0xff]
        %v1649 = vld [vmem:[%s429 + $0x8] sm:$0xff]
        %v1650 = vld [vmem:[%s429 + $0x10] sm:$0xff]
        %v1651 = vld [vmem:[%s429 + $0x18] sm:$0xf]
        %v1652 = vld [vmem:[%s429 + $0x1c] sm:$0xff]
        %v1653 = vld [vmem:[%s429 + $0x24] sm:$0xff]
        %v1654 = vld [vmem:[%s429 + $0x2c] sm:$0xff]
        %v1655 = vld [vmem:[%s429 + $0x34] sm:$0xf]
        %v1656 = vld [vmem:[%s429 + $0x38] sm:$0xff]
        %v1657 = vld [vmem:[%s429 + $0x40] sm:$0xff]
        %v1658 = vld [vmem:[%s429 + $0x48] sm:$0xff]
        %v1659 = vld [vmem:[%s429 + $0x50] sm:$0xf]
        %v1660 = vld [vmem:[%s429 + $0x54] sm:$0xff]
        %v1661 = vld [vmem:[%s429 + $0x5c] sm:$0xff]
        %v1662 = vld [vmem:[%s429 + $0x64] sm:$0xff]
        %v1663 = vld [vmem:[%s429 + $0x6c] sm:$0xf]
        %v1664 = vld [vmem:[%s429 + $0x70] sm:$0xff]
        %v1665 = vld [vmem:[%s429 + $0x78] sm:$0xff]
        %v1666 = vld [vmem:[%s429 + $0x80] sm:$0xff]
        %v1667 = vld [vmem:[%s429 + $0x88] sm:$0xf]
        %v1668 = vld [vmem:[%s429 + $0x8c] sm:$0xff]
        %v1669 = vld [vmem:[%s429 + $0x94] sm:$0xff]
        %v1670 = vld [vmem:[%s429 + $0x9c] sm:$0xff]
        %v1671 = vld [vmem:[%s429 + $0xa4] sm:$0xf]
        %v1696 = vunpack.c.l.b16 %v1648
        %v1697 = vunpack.c.h.b16 %v1648
        %v1698 = vunpack.c.l.b16 %v1649
        %v1699 = vunpack.c.h.b16 %v1649
        %v1700 = vunpack.c.l.b16 %v1650
        %v1701 = vunpack.c.h.b16 %v1650
        %v1702 = vunpack.c.l.b16 %v1651
        %v1703 = vunpack.c.l.b16 %v1652
        %v1704 = vunpack.c.h.b16 %v1652
        %v1705 = vunpack.c.l.b16 %v1653
        %v1706 = vunpack.c.h.b16 %v1653
        %v1707 = vunpack.c.l.b16 %v1654
        %v1708 = vunpack.c.h.b16 %v1654
        %v1709 = vunpack.c.l.b16 %v1655
        %v1710 = vunpack.c.l.b16 %v1656
        %v1711 = vunpack.c.h.b16 %v1656
        %v1712 = vunpack.c.l.b16 %v1657
        %v1713 = vunpack.c.h.b16 %v1657
        %v1714 = vunpack.c.l.b16 %v1658
        %v1715 = vunpack.c.h.b16 %v1658
        %v1716 = vunpack.c.l.b16 %v1659
        %v1717 = vunpack.c.l.b16 %v1660
        %v1718 = vunpack.c.h.b16 %v1660
        %v1719 = vunpack.c.l.b16 %v1661
        %v1720 = vunpack.c.h.b16 %v1661
        %v1721 = vunpack.c.l.b16 %v1662
        %v1722 = vunpack.c.h.b16 %v1662
        %v1723 = vunpack.c.l.b16 %v1663
        %v1724 = vunpack.c.l.b16 %v1664
        %v1725 = vunpack.c.h.b16 %v1664
        %v1726 = vunpack.c.l.b16 %v1665
        %v1727 = vunpack.c.h.b16 %v1665
        %v1728 = vunpack.c.l.b16 %v1666
        %v1729 = vunpack.c.h.b16 %v1666
        %v1730 = vunpack.c.l.b16 %v1667
        %v1731 = vunpack.c.l.b16 %v1668
        %v1732 = vunpack.c.h.b16 %v1668
        %v1733 = vunpack.c.l.b16 %v1669
        %v1734 = vunpack.c.h.b16 %v1669
        %v1735 = vunpack.c.l.b16 %v1670
        %v1736 = vunpack.c.h.b16 %v1670
        %v1737 = vunpack.c.l.b16 %v1671
        %v1738 = vpack.c.b16 %v1703, %v1696
        %v1739 = vpack.c.b16 %v1704, %v1697
        %v1740 = vpack.c.b16 %v1705, %v1698
        %v1741 = vpack.c.b16 %v1706, %v1699
        %v1742 = vpack.c.b16 %v1707, %v1700
        %v1743 = vpack.c.b16 %v1708, %v1701
        %v1744 = vpack.c.b16 %v1709, %v1702
        %v1745 = vpack.c.b16 %v1717, %v1710
        %v1746 = vpack.c.b16 %v1718, %v1711
        %v1747 = vpack.c.b16 %v1719, %v1712
        %v1748 = vpack.c.b16 %v1720, %v1713
        %v1749 = vpack.c.b16 %v1721, %v1714
        %v1750 = vpack.c.b16 %v1722, %v1715
        %v1751 = vpack.c.b16 %v1723, %v1716
        %v1752 = vpack.c.b16 %v1731, %v1724
        %v1753 = vpack.c.b16 %v1732, %v1725
        %v1754 = vpack.c.b16 %v1733, %v1726
        %v1755 = vpack.c.b16 %v1734, %v1727
        %v1756 = vpack.c.b16 %v1735, %v1728
        %v1757 = vpack.c.b16 %v1736, %v1729
        %v1758 = vpack.c.b16 %v1737, %v1730
        %v1778 = vsel %vm990, %v1744, 0
        %v1781 = vsel %vm990, %v1751, 0
        %v1784 = vsel %vm990, %v1758, 0
        %1786 = vmatprep.subr.bf16.mxu0 0
        %1787 = vmatpush1.bf16.msra.mxu0 %v890
        %1788 = vmatprep.subr.bf16.mxu0 0
        %1789 = vmatpush1.bf16.msra.mxu0 %v891
        %1790 = vmatprep.subr.bf16.mxu0 0
        %1791 = vmatpush1.bf16.msra.mxu0 %v892
        %1792 = vmatprep.subr.bf16.mxu0 0
        %1793 = vmatpush1.bf16.msra.mxu0 %v893
        %1794 = vmatprep.subr.bf16.mxu0 0
        %1795 = vmatpush1.bf16.msra.mxu0 %v894
        %1796 = vmatprep.subr.bf16.mxu0 0
        %1797 = vmatpush1.bf16.msra.mxu0 %v895
        %1798 = vmatprep.subr.bf16.mxu0 0
        %1799 = vmatpush1.bf16.msra.mxu0 %v896
        %1800 = vmatprep.subr.bf16.mxu0 0
        %1801 = vmatpush1.bf16.msra.mxu0 %v897
        %1802 = vmatprep.subr.bf16.mxu0 0
        %1803 = vmatpush1.bf16.msra.mxu0 %v898
        %1804 = vmatprep.subr.bf16.mxu0 0
        %1805 = vmatpush1.bf16.msra.mxu0 %v899
        %1806 = vmatprep.subr.bf16.mxu0 0
        %1807 = vmatpush1.bf16.msra.mxu0 %v900
        %1808 = vmatprep.subr.bf16.mxu0 0
        %1809 = vmatpush1.bf16.msra.mxu0 %v901
        %1810 = vmatprep.subr.bf16.mxu0 0
        %1811 = vmatpush1.bf16.msra.mxu0 %v902
        %1812 = vmatprep.subr.bf16.mxu0 0
        %1813 = vmatpush1.bf16.msra.mxu0 %v903
        %1814 = vmatprep.subr.bf16.mxu0 0
        %1815 = vmatpush1.bf16.msra.mxu0 %v904
        %1816 = vmatprep.subr.bf16.mxu0 0
        %1817 = vmatpush1.bf16.msra.mxu0 %v905
        %1818 = vmatprep.mubr.bf16.mxu0 %v1739
        %1819 = vmatmul.mubr.bf16.gmra.mrb[0].mxu0 %v1738
        %v1820 = vpop.f32.mrb[0].mxu0
        %v1821 = vadd.f32 0.0, %v1820
        %v1822 = vpop.f32.mrb[0].mxu0
        %v1823 = vpop.f32.mrb[0].mxu0
        %v1824 = vadd.f32 0.0, %v1823
        %v1825 = vpop.f32.mrb[0].mxu0
        %1826 = vmatprep.mubr.bf16.mxu0 %v1746
        %1827 = vmatmul.mubr.bf16.gmra.mrb[0].mxu0 %v1745
        %v1828 = vpop.f32.mrb[0].mxu0
        %v1829 = vadd.f32 0.0, %v1828
        %v1830 = vpop.f32.mrb[0].mxu0
        %v1831 = vpop.f32.mrb[0].mxu0
        %v1832 = vadd.f32 0.0, %v1831
        %v1833 = vpop.f32.mrb[0].mxu0
        %1834 = vmatprep.mubr.bf16.mxu0 %v1753
        %1835 = vmatmul.mubr.bf16.gmra.mrb[0].mxu0 %v1752
        %v1836 = vpop.f32.mrb[0].mxu0
        %v1837 = vadd.f32 0.0, %v1836
        %v1838 = vpop.f32.mrb[0].mxu0
        %v1839 = vpop.f32.mrb[0].mxu0
        %v1840 = vadd.f32 0.0, %v1839
        %v1841 = vpop.f32.mrb[0].mxu0
        %1842 = vdwg.mxu0
        %1843 = vmatprep.subr.bf16.mxu0 0
        %1844 = vmatpush1.bf16.msra.mxu0 %v906
        %1845 = vmatprep.subr.bf16.mxu0 0
        %1846 = vmatpush1.bf16.msra.mxu0 %v907
        %1847 = vmatprep.subr.bf16.mxu0 0
        %1848 = vmatpush1.bf16.msra.mxu0 %v908
        %1849 = vmatprep.subr.bf16.mxu0 0
        %1850 = vmatpush1.bf16.msra.mxu0 %v909
        %1851 = vmatprep.subr.bf16.mxu0 0
        %1852 = vmatpush1.bf16.msra.mxu0 %v910
        %1853 = vmatprep.subr.bf16.mxu0 0
        %1854 = vmatpush1.bf16.msra.mxu0 %v911
        %1855 = vmatprep.subr.bf16.mxu0 0
        %1856 = vmatpush1.bf16.msra.mxu0 %v912
        %1857 = vmatprep.subr.bf16.mxu0 0
        %1858 = vmatpush1.bf16.msra.mxu0 %v913
        %1859 = vmatprep.subr.bf16.mxu0 0
        %1860 = vmatpush1.bf16.msra.mxu0 %v914
        %1861 = vmatprep.subr.bf16.mxu0 0
        %1862 = vmatpush1.bf16.msra.mxu0 %v915
        %1863 = vmatprep.subr.bf16.mxu0 0
        %1864 = vmatpush1.bf16.msra.mxu0 %v916
        %1865 = vmatprep.subr.bf16.mxu0 0
        %1866 = vmatpush1.bf16.msra.mxu0 %v917
        %1867 = vmatprep.subr.bf16.mxu0 0
        %1868 = vmatpush1.bf16.msra.mxu0 %v918
        %1869 = vmatprep.subr.bf16.mxu0 0
        %1870 = vmatpush1.bf16.msra.mxu0 %v919
        %1871 = vmatprep.subr.bf16.mxu0 0
        %1872 = vmatpush1.bf16.msra.mxu0 %v920
        %1873 = vmatprep.subr.bf16.mxu0 0
        %1874 = vmatpush1.bf16.msra.mxu0 %v921
        %1875 = vmatprep.mubr.bf16.mxu0 %v1741
        %1876 = vmatmul.mubr.bf16.gmra.mrb[0].mxu0 %v1740
        %v1877 = vpop.f32.mrb[0].mxu0
        %v1878 = vadd.f32 %v1821, %v1877
        %v1879 = vpop.f32.mrb[0].mxu0
        %v1880 = vpop.f32.mrb[0].mxu0
        %v1881 = vadd.f32 %v1824, %v1880
        %v1882 = vpop.f32.mrb[0].mxu0
        %1883 = vmatprep.mubr.bf16.mxu0 %v1748
        %1884 = vmatmul.mubr.bf16.gmra.mrb[0].mxu0 %v1747
        %v1885 = vpop.f32.mrb[0].mxu0
        %v1886 = vadd.f32 %v1829, %v1885
        %v1887 = vpop.f32.mrb[0].mxu0
        %v1888 = vpop.f32.mrb[0].mxu0
        %v1889 = vadd.f32 %v1832, %v1888
        %v1890 = vpop.f32.mrb[0].mxu0
        %1891 = vmatprep.mubr.bf16.mxu0 %v1755
        %1892 = vmatmul.mubr.bf16.gmra.mrb[0].mxu0 %v1754
        %v1893 = vpop.f32.mrb[0].mxu0
        %v1894 = vadd.f32 %v1837, %v1893
        %v1895 = vpop.f32.mrb[0].mxu0
        %v1896 = vpop.f32.mrb[0].mxu0
        %v1897 = vadd.f32 %v1840, %v1896
        %v1898 = vpop.f32.mrb[0].mxu0
        %1899 = vdwg.mxu0
        %1900 = vmatprep.subr.bf16.mxu0 0
        %1901 = vmatpush1.bf16.msra.mxu0 %v922
        %1902 = vmatprep.subr.bf16.mxu0 0
        %1903 = vmatpush1.bf16.msra.mxu0 %v923
        %1904 = vmatprep.subr.bf16.mxu0 0
        %1905 = vmatpush1.bf16.msra.mxu0 %v924
        %1906 = vmatprep.subr.bf16.mxu0 0
        %1907 = vmatpush1.bf16.msra.mxu0 %v925
        %1908 = vmatprep.subr.bf16.mxu0 0
        %1909 = vmatpush1.bf16.msra.mxu0 %v926
        %1910 = vmatprep.subr.bf16.mxu0 0
        %1911 = vmatpush1.bf16.msra.mxu0 %v927
        %1912 = vmatprep.subr.bf16.mxu0 0
        %1913 = vmatpush1.bf16.msra.mxu0 %v928
        %1914 = vmatprep.subr.bf16.mxu0 0
        %1915 = vmatpush1.bf16.msra.mxu0 %v929
        %1916 = vmatprep.subr.bf16.mxu0 0
        %1917 = vmatpush1.bf16.msra.mxu0 %v930
        %1918 = vmatprep.subr.bf16.mxu0 0
        %1919 = vmatpush1.bf16.msra.mxu0 %v931
        %1920 = vmatprep.subr.bf16.mxu0 0
        %1921 = vmatpush1.bf16.msra.mxu0 %v932
        %1922 = vmatprep.subr.bf16.mxu0 0
        %1923 = vmatpush1.bf16.msra.mxu0 %v933
        %1924 = vmatprep.subr.bf16.mxu0 0
        %1925 = vmatpush1.bf16.msra.mxu0 %v934
        %1926 = vmatprep.subr.bf16.mxu0 0
        %1927 = vmatpush1.bf16.msra.mxu0 %v935
        %1928 = vmatprep.subr.bf16.mxu0 0
        %1929 = vmatpush1.bf16.msra.mxu0 %v936
        %1930 = vmatprep.subr.bf16.mxu0 0
        %1931 = vmatpush1.bf16.msra.mxu0 %v937
        %1932 = vmatprep.mubr.bf16.mxu0 %v1743
        %1933 = vmatmul.mubr.bf16.gmra.mrb[0].mxu0 %v1742
        %v1934 = vpop.f32.mrb[0].mxu0
        %v1935 = vadd.f32 %v1878, %v1934
        %v1936 = vpop.f32.mrb[0].mxu0
        %v1937 = vpop.f32.mrb[0].mxu0
        %v1938 = vadd.f32 %v1881, %v1937
        %v1939 = vpop.f32.mrb[0].mxu0
        %1940 = vmatprep.mubr.bf16.mxu0 %v1750
        %1941 = vmatmul.mubr.bf16.gmra.mrb[0].mxu0 %v1749
        %v1942 = vpop.f32.mrb[0].mxu0
        %v1943 = vadd.f32 %v1886, %v1942
        %v1944 = vpop.f32.mrb[0].mxu0
        %v1945 = vpop.f32.mrb[0].mxu0
        %v1946 = vadd.f32 %v1889, %v1945
        %v1947 = vpop.f32.mrb[0].mxu0
        %1948 = vmatprep.mubr.bf16.mxu0 %v1757
        %1949 = vmatmul.mubr.bf16.gmra.mrb[0].mxu0 %v1756
        %v1950 = vpop.f32.mrb[0].mxu0
        %v1951 = vadd.f32 %v1894, %v1950
        %v1952 = vpop.f32.mrb[0].mxu0
        %v1953 = vpop.f32.mrb[0].mxu0
        %v1954 = vadd.f32 %v1897, %v1953
        %v1955 = vpop.f32.mrb[0].mxu0
        %1956 = vdwg.mxu0
        %1957 = vmatprep.subr.bf16.mxu0 0
        %1958 = vmatpush1.bf16.msra.mxu0 %v938
        %1959 = vmatprep.subr.bf16.mxu0 0
        %1960 = vmatpush1.bf16.msra.mxu0 %v939
        %1961 = vmatprep.subr.bf16.mxu0 0
        %1962 = vmatpush1.bf16.msra.mxu0 0
        %1963 = vmatprep.subr.bf16.mxu0 0
        %1964 = vmatpush1.bf16.msra.mxu0 0
        %1965 = vmatprep.subr.bf16.mxu0 0
        %1966 = vmatpush1.bf16.msra.mxu0 0
        %1967 = vmatprep.subr.bf16.mxu0 0
        %1968 = vmatpush1.bf16.msra.mxu0 0
        %1969 = vmatprep.subr.bf16.mxu0 0
        %1970 = vmatpush1.bf16.msra.mxu0 0
        %1971 = vmatprep.subr.bf16.mxu0 0
        %1972 = vmatpush1.bf16.msra.mxu0 0
        %1973 = vmatprep.subr.bf16.mxu0 0
        %1974 = vmatpush1.bf16.msra.mxu0 0
        %1975 = vmatprep.subr.bf16.mxu0 0
        %1976 = vmatpush1.bf16.msra.mxu0 0
        %1977 = vmatprep.subr.bf16.mxu0 0
        %1978 = vmatpush1.bf16.msra.mxu0 0
        %1979 = vmatprep.subr.bf16.mxu0 0
        %1980 = vmatpush1.bf16.msra.mxu0 0
        %1981 = vmatprep.subr.bf16.mxu0 0
        %1982 = vmatpush1.bf16.msra.mxu0 0
        %1983 = vmatprep.subr.bf16.mxu0 0
        %1984 = vmatpush1.bf16.msra.mxu0 0
        %1985 = vmatprep.subr.bf16.mxu0 0
        %1986 = vmatpush1.bf16.msra.mxu0 0
        %1987 = vmatprep.subr.bf16.mxu0 0
        %1988 = vmatpush1.bf16.msra.mxu0 0
        %1989 = vmatprep.mubr.bf16.mxu0 0
        %1990 = vmatmul.mubr.bf16.gmra.mrb[0].mxu0 %v1778
        %v1991 = vpop.f32.mrb[0].mxu0
        %v1992 = vadd.f32 %v1935, %v1991
        %v1993 = vpop.f32.mrb[0].mxu0
        %v1994 = vpop.f32.mrb[0].mxu0
        %v1995 = vadd.f32 %v1938, %v1994
        %v1996 = vpop.f32.mrb[0].mxu0
        %1997 = vmatprep.mubr.bf16.mxu0 0
        %1998 = vmatmul.mubr.bf16.gmra.mrb[0].mxu0 %v1781
        %v1999 = vpop.f32.mrb[0].mxu0
        %v2000 = vadd.f32 %v1943, %v1999
        %v2001 = vpop.f32.mrb[0].mxu0
        %v2002 = vpop.f32.mrb[0].mxu0
        %v2003 = vadd.f32 %v1946, %v2002
        %v2004 = vpop.f32.mrb[0].mxu0
        %2005 = vmatprep.mubr.bf16.mxu0 0
        %2006 = vmatmul.mubr.bf16.gmra.mrb[0].mxu0 %v1784
        %v2007 = vpop.f32.mrb[0].mxu0
        %v2008 = vadd.f32 %v1951, %v2007
        %v2009 = vpop.f32.mrb[0].mxu0
        %v2010 = vpop.f32.mrb[0].mxu0
        %v2011 = vadd.f32 %v1954, %v2010
        %v2012 = vpop.f32.mrb[0].mxu0
        %2013 = vdwg.mxu0
        %v2014 = vmul.f32 %v1992, %v1232
        %v2015 = vmul.f32 %v1995, %v1232
        %v2016 = vmul.f32 %v2000, %v1232
        %v2017 = vmul.f32 %v2003, %v1232
        %v2018 = vmul.f32 %v2008, %v1232
        %v2019 = vmul.f32 %v2011, %v1232
        %v2020 = vadd.f32 %v2014, %v1244
        %v2021 = vadd.f32 %v2015, %v1244
        %v2022 = vadd.f32 %v2016, %v1244
        %v2023 = vadd.f32 %v2017, %v1244
        %v2024 = vadd.f32 %v2018, %v1244
        %v2025 = vadd.f32 %v2019, %v1244
        %v2026 = vmax.f32 %v2020, 0.0
        %v2027 = vmax.f32 %v2021, 0.0
        %v2028 = vmax.f32 %v2022, 0.0
        %v2029 = vmax.f32 %v2023, 0.0
        %v2030 = vmax.f32 %v2024, 0.0
        %v2031 = vmax.f32 %v2025, 0.0
        %v2032 = vld [vmem:[%s446] sm:$0xff]
        %v2033 = vld [vmem:[%s446 + $0x8] sm:$0xff]
        %v2034 = vld [vmem:[%s446 + $0x10] sm:$0xff]
        %v2035 = vld [vmem:[%s446 + $0x18] sm:$0xf]
        %v2036 = vld [vmem:[%s446 + $0x1c] sm:$0xff]
        %v2037 = vld [vmem:[%s446 + $0x24] sm:$0xff]
        %v2038 = vld [vmem:[%s446 + $0x2c] sm:$0xff]
        %v2039 = vld [vmem:[%s446 + $0x34] sm:$0xf]
        %v2040 = vld [vmem:[%s446 + $0x38] sm:$0xff]
        %v2041 = vld [vmem:[%s446 + $0x40] sm:$0xff]
        %v2042 = vld [vmem:[%s446 + $0x48] sm:$0xff]
        %v2043 = vld [vmem:[%s446 + $0x50] sm:$0xf]
        %v2044 = vld [vmem:[%s446 + $0x54] sm:$0xff]
        %v2045 = vld [vmem:[%s446 + $0x5c] sm:$0xff]
        %v2046 = vld [vmem:[%s446 + $0x64] sm:$0xff]
        %v2047 = vld [vmem:[%s446 + $0x6c] sm:$0xf]
        %v2048 = vld [vmem:[%s446 + $0x70] sm:$0xff]
        %v2049 = vld [vmem:[%s446 + $0x78] sm:$0xff]
        %v2050 = vld [vmem:[%s446 + $0x80] sm:$0xff]
        %v2051 = vld [vmem:[%s446 + $0x88] sm:$0xf]
        %v2052 = vld [vmem:[%s446 + $0x8c] sm:$0xff]
        %v2053 = vld [vmem:[%s446 + $0x94] sm:$0xff]
        %v2054 = vld [vmem:[%s446 + $0x9c] sm:$0xff]
        %v2055 = vld [vmem:[%s446 + $0xa4] sm:$0xf]
        %v2080 = vunpack.c.l.b16 %v2032
        %v2081 = vunpack.c.h.b16 %v2032
        %v2082 = vunpack.c.l.b16 %v2033
        %v2083 = vunpack.c.h.b16 %v2033
        %v2084 = vunpack.c.l.b16 %v2034
        %v2085 = vunpack.c.h.b16 %v2034
        %v2086 = vunpack.c.l.b16 %v2035
        %v2087 = vunpack.c.l.b16 %v2036
        %v2088 = vunpack.c.h.b16 %v2036
        %v2089 = vunpack.c.l.b16 %v2037
        %v2090 = vunpack.c.h.b16 %v2037
        %v2091 = vunpack.c.l.b16 %v2038
        %v2092 = vunpack.c.h.b16 %v2038
        %v2093 = vunpack.c.l.b16 %v2039
        %v2094 = vunpack.c.l.b16 %v2040
        %v2095 = vunpack.c.h.b16 %v2040
        %v2096 = vunpack.c.l.b16 %v2041
        %v2097 = vunpack.c.h.b16 %v2041
        %v2098 = vunpack.c.l.b16 %v2042
        %v2099 = vunpack.c.h.b16 %v2042
        %v2100 = vunpack.c.l.b16 %v2043
        %v2101 = vunpack.c.l.b16 %v2044
        %v2102 = vunpack.c.h.b16 %v2044
        %v2103 = vunpack.c.l.b16 %v2045
        %v2104 = vunpack.c.h.b16 %v2045
        %v2105 = vunpack.c.l.b16 %v2046
        %v2106 = vunpack.c.h.b16 %v2046
        %v2107 = vunpack.c.l.b16 %v2047
        %v2108 = vunpack.c.l.b16 %v2048
        %v2109 = vunpack.c.h.b16 %v2048
        %v2110 = vunpack.c.l.b16 %v2049
        %v2111 = vunpack.c.h.b16 %v2049
        %v2112 = vunpack.c.l.b16 %v2050
        %v2113 = vunpack.c.h.b16 %v2050
        %v2114 = vunpack.c.l.b16 %v2051
        %v2115 = vunpack.c.l.b16 %v2052
        %v2116 = vunpack.c.h.b16 %v2052
        %v2117 = vunpack.c.l.b16 %v2053
        %v2118 = vunpack.c.h.b16 %v2053
        %v2119 = vunpack.c.l.b16 %v2054
        %v2120 = vunpack.c.h.b16 %v2054
        %v2121 = vunpack.c.l.b16 %v2055
        %v2122 = vpack.c.b16 %v2087, %v2080
        %v2123 = vpack.c.b16 %v2088, %v2081
        %v2124 = vpack.c.b16 %v2089, %v2082
        %v2125 = vpack.c.b16 %v2090, %v2083
        %v2126 = vpack.c.b16 %v2091, %v2084
        %v2127 = vpack.c.b16 %v2092, %v2085
        %v2128 = vpack.c.b16 %v2093, %v2086
        %v2129 = vpack.c.b16 %v2101, %v2094
        %v2130 = vpack.c.b16 %v2102, %v2095
        %v2131 = vpack.c.b16 %v2103, %v2096
        %v2132 = vpack.c.b16 %v2104, %v2097
        %v2133 = vpack.c.b16 %v2105, %v2098
        %v2134 = vpack.c.b16 %v2106, %v2099
        %v2135 = vpack.c.b16 %v2107, %v2100
        %v2136 = vpack.c.b16 %v2115, %v2108
        %v2137 = vpack.c.b16 %v2116, %v2109
        %v2138 = vpack.c.b16 %v2117, %v2110
        %v2139 = vpack.c.b16 %v2118, %v2111
        %v2140 = vpack.c.b16 %v2119, %v2112
        %v2141 = vpack.c.b16 %v2120, %v2113
        %v2142 = vpack.c.b16 %v2121, %v2114
        %v2162 = vsel %vm990, %v2128, 0
        %v2165 = vsel %vm990, %v2135, 0
        %v2168 = vsel %vm990, %v2142, 0
        %2170 = vmatprep.subr.bf16.mxu0 0
        %2171 = vmatpush1.bf16.msra.mxu0 %v890
        %2172 = vmatprep.subr.bf16.mxu0 0
        %2173 = vmatpush1.bf16.msra.mxu0 %v891
        %2174 = vmatprep.subr.bf16.mxu0 0
        %2175 = vmatpush1.bf16.msra.mxu0 %v892
        %2176 = vmatprep.subr.bf16.mxu0 0
        %2177 = vmatpush1.bf16.msra.mxu0 %v893
        %2178 = vmatprep.subr.bf16.mxu0 0
        %2179 = vmatpush1.bf16.msra.mxu0 %v894
        %2180 = vmatprep.subr.bf16.mxu0 0
        %2181 = vmatpush1.bf16.msra.mxu0 %v895
        %2182 = vmatprep.subr.bf16.mxu0 0
        %2183 = vmatpush1.bf16.msra.mxu0 %v896
        %2184 = vmatprep.subr.bf16.mxu0 0
        %2185 = vmatpush1.bf16.msra.mxu0 %v897
        %2186 = vmatprep.subr.bf16.mxu0 0
        %2187 = vmatpush1.bf16.msra.mxu0 %v898
        %2188 = vmatprep.subr.bf16.mxu0 0
        %2189 = vmatpush1.bf16.msra.mxu0 %v899
        %2190 = vmatprep.subr.bf16.mxu0 0
        %2191 = vmatpush1.bf16.msra.mxu0 %v900
        %2192 = vmatprep.subr.bf16.mxu0 0
        %2193 = vmatpush1.bf16.msra.mxu0 %v901
        %2194 = vmatprep.subr.bf16.mxu0 0
        %2195 = vmatpush1.bf16.msra.mxu0 %v902
        %2196 = vmatprep.subr.bf16.mxu0 0
        %2197 = vmatpush1.bf16.msra.mxu0 %v903
        %2198 = vmatprep.subr.bf16.mxu0 0
        %2199 = vmatpush1.bf16.msra.mxu0 %v904
        %2200 = vmatprep.subr.bf16.mxu0 0
        %2201 = vmatpush1.bf16.msra.mxu0 %v905
        %2202 = vmatprep.mubr.bf16.mxu0 %v2123
        %2203 = vmatmul.mubr.bf16.gmra.mrb[0].mxu0 %v2122
        %v2204 = vpop.f32.mrb[0].mxu0
        %v2205 = vadd.f32 0.0, %v2204
        %v2206 = vpop.f32.mrb[0].mxu0
        %v2207 = vpop.f32.mrb[0].mxu0
        %v2208 = vadd.f32 0.0, %v2207
        %v2209 = vpop.f32.mrb[0].mxu0
        %2210 = vmatprep.mubr.bf16.mxu0 %v2130
        %2211 = vmatmul.mubr.bf16.gmra.mrb[0].mxu0 %v2129
        %v2212 = vpop.f32.mrb[0].mxu0
        %v2213 = vadd.f32 0.0, %v2212
        %v2214 = vpop.f32.mrb[0].mxu0
        %v2215 = vpop.f32.mrb[0].mxu0
        %v2216 = vadd.f32 0.0, %v2215
        %v2217 = vpop.f32.mrb[0].mxu0
        %2218 = vmatprep.mubr.bf16.mxu0 %v2137
        %2219 = vmatmul.mubr.bf16.gmra.mrb[0].mxu0 %v2136
        %v2220 = vpop.f32.mrb[0].mxu0
        %v2221 = vadd.f32 0.0, %v2220
        %v2222 = vpop.f32.mrb[0].mxu0
        %v2223 = vpop.f32.mrb[0].mxu0
        %v2224 = vadd.f32 0.0, %v2223
        %v2225 = vpop.f32.mrb[0].mxu0
        %2226 = vdwg.mxu0
        %2227 = vmatprep.subr.bf16.mxu0 0
        %2228 = vmatpush1.bf16.msra.mxu0 %v906
        %2229 = vmatprep.subr.bf16.mxu0 0
        %2230 = vmatpush1.bf16.msra.mxu0 %v907
        %2231 = vmatprep.subr.bf16.mxu0 0
        %2232 = vmatpush1.bf16.msra.mxu0 %v908
        %2233 = vmatprep.subr.bf16.mxu0 0
        %2234 = vmatpush1.bf16.msra.mxu0 %v909
        %2235 = vmatprep.subr.bf16.mxu0 0
        %2236 = vmatpush1.bf16.msra.mxu0 %v910
        %2237 = vmatprep.subr.bf16.mxu0 0
        %2238 = vmatpush1.bf16.msra.mxu0 %v911
        %2239 = vmatprep.subr.bf16.mxu0 0
        %2240 = vmatpush1.bf16.msra.mxu0 %v912
        %2241 = vmatprep.subr.bf16.mxu0 0
        %2242 = vmatpush1.bf16.msra.mxu0 %v913
        %2243 = vmatprep.subr.bf16.mxu0 0
        %2244 = vmatpush1.bf16.msra.mxu0 %v914
        %2245 = vmatprep.subr.bf16.mxu0 0
        %2246 = vmatpush1.bf16.msra.mxu0 %v915
        %2247 = vmatprep.subr.bf16.mxu0 0
        %2248 = vmatpush1.bf16.msra.mxu0 %v916
        %2249 = vmatprep.subr.bf16.mxu0 0
        %2250 = vmatpush1.bf16.msra.mxu0 %v917
        %2251 = vmatprep.subr.bf16.mxu0 0
        %2252 = vmatpush1.bf16.msra.mxu0 %v918
        %2253 = vmatprep.subr.bf16.mxu0 0
        %2254 = vmatpush1.bf16.msra.mxu0 %v919
        %2255 = vmatprep.subr.bf16.mxu0 0
        %2256 = vmatpush1.bf16.msra.mxu0 %v920
        %2257 = vmatprep.subr.bf16.mxu0 0
        %2258 = vmatpush1.bf16.msra.mxu0 %v921
        %2259 = vmatprep.mubr.bf16.mxu0 %v2125
        %2260 = vmatmul.mubr.bf16.gmra.mrb[0].mxu0 %v2124
        %v2261 = vpop.f32.mrb[0].mxu0
        %v2262 = vadd.f32 %v2205, %v2261
        %v2263 = vpop.f32.mrb[0].mxu0
        %v2264 = vpop.f32.mrb[0].mxu0
        %v2265 = vadd.f32 %v2208, %v2264
        %v2266 = vpop.f32.mrb[0].mxu0
        %2267 = vmatprep.mubr.bf16.mxu0 %v2132
        %2268 = vmatmul.mubr.bf16.gmra.mrb[0].mxu0 %v2131
        %v2269 = vpop.f32.mrb[0].mxu0
        %v2270 = vadd.f32 %v2213, %v2269
        %v2271 = vpop.f32.mrb[0].mxu0
        %v2272 = vpop.f32.mrb[0].mxu0
        %v2273 = vadd.f32 %v2216, %v2272
        %v2274 = vpop.f32.mrb[0].mxu0
        %2275 = vmatprep.mubr.bf16.mxu0 %v2139
        %2276 = vmatmul.mubr.bf16.gmra.mrb[0].mxu0 %v2138
        %v2277 = vpop.f32.mrb[0].mxu0
        %v2278 = vadd.f32 %v2221, %v2277
        %v2279 = vpop.f32.mrb[0].mxu0
        %v2280 = vpop.f32.mrb[0].mxu0
        %v2281 = vadd.f32 %v2224, %v2280
        %v2282 = vpop.f32.mrb[0].mxu0
        %2283 = vdwg.mxu0
        %2284 = vmatprep.subr.bf16.mxu0 0
        %2285 = vmatpush1.bf16.msra.mxu0 %v922
        %2286 = vmatprep.subr.bf16.mxu0 0
        %2287 = vmatpush1.bf16.msra.mxu0 %v923
        %2288 = vmatprep.subr.bf16.mxu0 0
        %2289 = vmatpush1.bf16.msra.mxu0 %v924
        %2290 = vmatprep.subr.bf16.mxu0 0
        %2291 = vmatpush1.bf16.msra.mxu0 %v925
        %2292 = vmatprep.subr.bf16.mxu0 0
        %2293 = vmatpush1.bf16.msra.mxu0 %v926
        %2294 = vmatprep.subr.bf16.mxu0 0
        %2295 = vmatpush1.bf16.msra.mxu0 %v927
        %2296 = vmatprep.subr.bf16.mxu0 0
        %2297 = vmatpush1.bf16.msra.mxu0 %v928
        %2298 = vmatprep.subr.bf16.mxu0 0
        %2299 = vmatpush1.bf16.msra.mxu0 %v929
        %2300 = vmatprep.subr.bf16.mxu0 0
        %2301 = vmatpush1.bf16.msra.mxu0 %v930
        %2302 = vmatprep.subr.bf16.mxu0 0
        %2303 = vmatpush1.bf16.msra.mxu0 %v931
        %2304 = vmatprep.subr.bf16.mxu0 0
        %2305 = vmatpush1.bf16.msra.mxu0 %v932
        %2306 = vmatprep.subr.bf16.mxu0 0
        %2307 = vmatpush1.bf16.msra.mxu0 %v933
        %2308 = vmatprep.subr.bf16.mxu0 0
        %2309 = vmatpush1.bf16.msra.mxu0 %v934
        %2310 = vmatprep.subr.bf16.mxu0 0
        %2311 = vmatpush1.bf16.msra.mxu0 %v935
        %2312 = vmatprep.subr.bf16.mxu0 0
        %2313 = vmatpush1.bf16.msra.mxu0 %v936
        %2314 = vmatprep.subr.bf16.mxu0 0
        %2315 = vmatpush1.bf16.msra.mxu0 %v937
        %2316 = vmatprep.mubr.bf16.mxu0 %v2127
        %2317 = vmatmul.mubr.bf16.gmra.mrb[0].mxu0 %v2126
        %v2318 = vpop.f32.mrb[0].mxu0
        %v2319 = vadd.f32 %v2262, %v2318
        %v2320 = vpop.f32.mrb[0].mxu0
        %v2321 = vpop.f32.mrb[0].mxu0
        %v2322 = vadd.f32 %v2265, %v2321
        %v2323 = vpop.f32.mrb[0].mxu0
        %2324 = vmatprep.mubr.bf16.mxu0 %v2134
        %2325 = vmatmul.mubr.bf16.gmra.mrb[0].mxu0 %v2133
        %v2326 = vpop.f32.mrb[0].mxu0
        %v2327 = vadd.f32 %v2270, %v2326
        %v2328 = vpop.f32.mrb[0].mxu0
        %v2329 = vpop.f32.mrb[0].mxu0
        %v2330 = vadd.f32 %v2273, %v2329
        %v2331 = vpop.f32.mrb[0].mxu0
        %2332 = vmatprep.mubr.bf16.mxu0 %v2141
        %2333 = vmatmul.mubr.bf16.gmra.mrb[0].mxu0 %v2140
        %v2334 = vpop.f32.mrb[0].mxu0
        %v2335 = vadd.f32 %v2278, %v2334
        %v2336 = vpop.f32.mrb[0].mxu0
        %v2337 = vpop.f32.mrb[0].mxu0
        %v2338 = vadd.f32 %v2281, %v2337
        %v2339 = vpop.f32.mrb[0].mxu0
        %2340 = vdwg.mxu0
        %2341 = vmatprep.subr.bf16.mxu0 0
        %2342 = vmatpush1.bf16.msra.mxu0 %v938
        %2343 = vmatprep.subr.bf16.mxu0 0
        %2344 = vmatpush1.bf16.msra.mxu0 %v939
        %2345 = vmatprep.subr.bf16.mxu0 0
        %2346 = vmatpush1.bf16.msra.mxu0 0
        %2347 = vmatprep.subr.bf16.mxu0 0
        %2348 = vmatpush1.bf16.msra.mxu0 0
        %2349 = vmatprep.subr.bf16.mxu0 0
        %2350 = vmatpush1.bf16.msra.mxu0 0
        %2351 = vmatprep.subr.bf16.mxu0 0
        %2352 = vmatpush1.bf16.msra.mxu0 0
        %2353 = vmatprep.subr.bf16.mxu0 0
        %2354 = vmatpush1.bf16.msra.mxu0 0
        %2355 = vmatprep.subr.bf16.mxu0 0
        %2356 = vmatpush1.bf16.msra.mxu0 0
        %2357 = vmatprep.subr.bf16.mxu0 0
        %2358 = vmatpush1.bf16.msra.mxu0 0
        %2359 = vmatprep.subr.bf16.mxu0 0
        %2360 = vmatpush1.bf16.msra.mxu0 0
        %2361 = vmatprep.subr.bf16.mxu0 0
        %2362 = vmatpush1.bf16.msra.mxu0 0
        %2363 = vmatprep.subr.bf16.mxu0 0
        %2364 = vmatpush1.bf16.msra.mxu0 0
        %2365 = vmatprep.subr.bf16.mxu0 0
        %2366 = vmatpush1.bf16.msra.mxu0 0
        %2367 = vmatprep.subr.bf16.mxu0 0
        %2368 = vmatpush1.bf16.msra.mxu0 0
        %2369 = vmatprep.subr.bf16.mxu0 0
        %2370 = vmatpush1.bf16.msra.mxu0 0
        %2371 = vmatprep.subr.bf16.mxu0 0
        %2372 = vmatpush1.bf16.msra.mxu0 0
        %2373 = vmatprep.mubr.bf16.mxu0 0
        %2374 = vmatmul.mubr.bf16.gmra.mrb[0].mxu0 %v2162
        %v2375 = vpop.f32.mrb[0].mxu0
        %v2376 = vadd.f32 %v2319, %v2375
        %v2377 = vpop.f32.mrb[0].mxu0
        %v2378 = vpop.f32.mrb[0].mxu0
        %v2379 = vadd.f32 %v2322, %v2378
        %v2380 = vpop.f32.mrb[0].mxu0
        %2381 = vmatprep.mubr.bf16.mxu0 0
        %2382 = vmatmul.mubr.bf16.gmra.mrb[0].mxu0 %v2165
        %v2383 = vpop.f32.mrb[0].mxu0
        %v2384 = vadd.f32 %v2327, %v2383
        %v2385 = vpop.f32.mrb[0].mxu0
        %v2386 = vpop.f32.mrb[0].mxu0
        %v2387 = vadd.f32 %v2330, %v2386
        %v2388 = vpop.f32.mrb[0].mxu0
        %2389 = vmatprep.mubr.bf16.mxu0 0
        %2390 = vmatmul.mubr.bf16.gmra.mrb[0].mxu0 %v2168
        %v2391 = vpop.f32.mrb[0].mxu0
        %v2392 = vadd.f32 %v2335, %v2391
        %v2393 = vpop.f32.mrb[0].mxu0
        %v2394 = vpop.f32.mrb[0].mxu0
        %v2395 = vadd.f32 %v2338, %v2394
        %v2396 = vpop.f32.mrb[0].mxu0
        %2397 = vdwg.mxu0
        %v2398 = vmul.f32 %v2376, %v1232
        %v2399 = vmul.f32 %v2379, %v1232
        %v2400 = vmul.f32 %v2384, %v1232
        %v2401 = vmul.f32 %v2387, %v1232
        %v2402 = vmul.f32 %v2392, %v1232
        %v2403 = vmul.f32 %v2395, %v1232
        %v2404 = vadd.f32 %v2398, %v1244
        %v2405 = vadd.f32 %v2399, %v1244
        %v2406 = vadd.f32 %v2400, %v1244
        %v2407 = vadd.f32 %v2401, %v1244
        %v2408 = vadd.f32 %v2402, %v1244
        %v2409 = vadd.f32 %v2403, %v1244
        %v2410 = vmax.f32 %v2404, 0.0
        %v2411 = vmax.f32 %v2405, 0.0
        %v2412 = vmax.f32 %v2406, 0.0
        %v2413 = vmax.f32 %v2407, 0.0
        %v2414 = vmax.f32 %v2408, 0.0
        %v2415 = vmax.f32 %v2409, 0.0
        %v2416 = vmax.f32 %v2026, %v2410
        %v2417 = vmax.f32 %v2027, %v2411
        %v2418 = vmax.f32 %v2028, %v2412
        %v2419 = vmax.f32 %v2029, %v2413
        %v2420 = vmax.f32 %v2030, %v2414
        %v2421 = vmax.f32 %v2031, %v2415
        %v2422 = vmax.f32 %v1642, %v2416
        %v2423 = vmax.f32 %v1643, %v2417
        %v2424 = vmax.f32 %v1644, %v2418
        %v2425 = vmax.f32 %v1645, %v2419
        %v2426 = vmax.f32 %v1646, %v2420
        %v2427 = vmax.f32 %v1647, %v2421
        %v2428 = vpack.c.bf16 %v2423, %v2422
        %v2429 = vpack.c.bf16 %v2425, %v2424
        %v2430 = vpack.c.bf16 %v2427, %v2426
        %v2434 = vunpack.c.l.b16 %v2428
        %v2435 = vunpack.c.h.b16 %v2428
        %v2436 = vunpack.c.l.b16 %v2429
        %v2437 = vunpack.c.h.b16 %v2429
        %v2438 = vunpack.c.l.b16 %v2430
        %v2439 = vunpack.c.h.b16 %v2430
        %v2440 = vpack.c.b16 %v2434, %v2434
        %v2441 = vpack.c.b16 %v2435, %v2435
        %v2442 = vpack.c.b16 %v2436, %v2436
        %v2443 = vpack.c.b16 %v2437, %v2437
        %v2444 = vpack.c.b16 %v2438, %v2438
        %v2445 = vpack.c.b16 %v2439, %v2439
        %vm2452 = vcmask 519168
        %2453 = vst.msk [vmem:[%s384] sm:$0xf] %vm2452, %v2440
        %2454 = vst.msk [vmem:[%s384 + $0x4] sm:$0xf] %vm2452, %v2441
        %2455 = vst.msk [vmem:[%s384 + $0x8] sm:$0xf] %vm2452, %v2442
        %2456 = vst.msk [vmem:[%s384 + $0xc] sm:$0xf] %vm2452, %v2443
        %2457 = vst.msk [vmem:[%s384 + $0x10] sm:$0xf] %vm2452, %v2444
        %2458 = vst.msk [vmem:[%s384 + $0x14] sm:$0xf] %vm2452, %v2445
        %s2459 = sand.u32 %s193, 1
        %s2460 = sand.u32 %s193, 1
        %s2461 = smul.addr %s2460, 24
        %s2462 = scalar_lea.vmem [#allocation2], %s2461
        // Predicated region
        $region49: #{net3layers_forward.5} parent=47 // pred_check
          %p2463 = pneg %p203
        $region50: #{net3layers_forward.5} parent=47 // pred_check_branch
          %2465 = sbr.rel (%p2463) target = $region52
        $region51: #{net3layers_forward.5} parent=47 // pred_region
          %s2466 = smul.u32 6, %s18
          %s2467 = ssub.s32 9, %s2466
          %p2468 = scmp.lt.s32.totalorder %s2467, 6
          %s2469 = scalar_select %p2468, %s2467, 6
          %s2470 = smul.u32 64, %s2469
          %p2471 = scmp.ne.s32.totalorder 0, %s2470
          %s2472 = smul.addr %s2466, 4
          %s2473 = scalar_lea.vmem %s7, %s2472
          // Predicated region
          $region53: #{net3layers_forward.5} parent=51 // pred_check
            %p2474 = pneg %p2471
          $region54: #{net3layers_forward.5} parent=51 // pred_check_branch
            %2476 = sbr.rel (%p2474) target = $region56
          $region55: #{net3layers_forward.5} parent=51 // pred_region
            // Predicated region
            $region57: #{net3layers_forward.5} parent=55 // pred_check
              _
            $region58: #{net3layers_forward.5} parent=55 // pred_check_branch
              %2478 = sbr.rel target = $region60
            $region59: #{net3layers_forward.5} parent=55 // pred_region
              // Predicated region
              $region79: #{net3layers_forward.5} parent=59 // pred_check
                _
              $region80: #{net3layers_forward.5} parent=59 // pred_check_branch
                %2538 = sbr.rel (0) target = $region82
              $region81: #{net3layers_forward.5} parent=59 // pred_region
                %s2540 = sdiv.u32.pop %s2469, 6
                %s2541 = srem.u32.pop %s2469, 6
                // While loop
                $region83: #{net3layers_forward.5} parent=81 // loop_pre_header
                  _
                $region84: #{net3layers_forward.5} parent=81 // loop_header
                  %s2543 = sphi 0, %s2545
                  %p2544 = scmp.ge.s32.totalorder %s2543, %s2540
                  %s2548 = sphi 0, %s2565
                  %s2549 = sphi %s2462, %s2568
                  %s2550 = sphi %s2473, %s2569
                $region85: #{net3layers_forward.5} parent=81 // loop_header_branch
                  %2547 = sbr.rel (%p2544) target = $region89
                $region86: #{net3layers_forward.5} parent=81 // loop_body
                  %v2551 = vld [vmem:[%s2549] sm:$0xf]
                  %2552 = vst [vmem:[%s2550] sm:$0xf] %v2551
                  %v2553 = vld [vmem:[%s2549 + $0x4] sm:$0xf]
                  %2554 = vst [vmem:[%s2550 + $0x4] sm:$0xf] %v2553
                  %v2555 = vld [vmem:[%s2549 + $0x8] sm:$0xf]
                  %2556 = vst [vmem:[%s2550 + $0x8] sm:$0xf] %v2555
                  %v2557 = vld [vmem:[%s2549 + $0xc] sm:$0xf]
                  %2558 = vst [vmem:[%s2550 + $0xc] sm:$0xf] %v2557
                  %v2559 = vld [vmem:[%s2549 + $0x10] sm:$0xf]
                  %2560 = vst [vmem:[%s2550 + $0x10] sm:$0xf] %v2559
                  %v2561 = vld [vmem:[%s2549 + $0x14] sm:$0xf]
                  %2562 = vst [vmem:[%s2550 + $0x14] sm:$0xf] %v2561
                  %s2563 = sadd.s32 1, %s2548
                  %p2564 = scmp.ge.s32.totalorder %s2563, %s2540
                  %s2565 = scalar_select %p2564, 0, %s2563
                  %s2566 = smul.u32 %s2565, 24
                  %s2567 = smul.u32 %s2565, 24
                  %s2568 = scalar_lea.vmem %s2462, %s2566 [#allocation2]
                  %s2569 = scalar_lea.vmem %s2473, %s2567
                $region87: #{net3layers_forward.5} parent=81 // loop_footer
                  %s2545 = sadd.s32 %s2543, 1
                $region88: #{net3layers_forward.5} parent=81 // loop_footer_branch
                  %2542 = sbr.rel target = $region84
                $region89: #{net3layers_forward.5} parent=81 // loop_exit
                  _
                %s2570 = sdiv.u32.pop %s2469, 6
                %s2571 = srem.u32.pop %s2469, 6
                %s2572 = smul.u32 %s2570, 6
                %s2573 = smul.u32 4, %s2572
                %s2574 = scalar_lea.vmem %s2462, %s2573 [#allocation2]
                %s2575 = smul.u32 4, %s2572
                %s2576 = scalar_lea.vmem %s2473, %s2575
                // While loop
                $region90: #{net3layers_forward.5} parent=81 // loop_pre_header
                  _
                $region91: #{net3layers_forward.5} parent=81 // loop_header
                  %s2578 = sphi 0, %s2580
                  %p2579 = scmp.ge.s32.totalorder %s2578, %s2571
                  %s2583 = sphi 0, %s2590
                  %s2584 = sphi %s2574, %s2593
                  %s2585 = sphi %s2576, %s2594
                $region92: #{net3layers_forward.5} parent=81 // loop_header_branch
                  %2582 = sbr.rel (%p2579) target = $region96
                $region93: #{net3layers_forward.5} parent=81 // loop_body
                  %v2586 = vld [vmem:[%s2584] sm:$0xf]
                  %2587 = vst [vmem:[%s2585] sm:$0xf] %v2586
                  %s2588 = sadd.s32 1, %s2583
                  %p2589 = scmp.ge.s32.totalorder %s2588, %s2571
                  %s2590 = scalar_select %p2589, 0, %s2588
                  %s2591 = smul.u32 %s2590, 4
                  %s2592 = smul.u32 %s2590, 4
                  %s2593 = scalar_lea.vmem %s2574, %s2591 [#allocation2]
                  %s2594 = scalar_lea.vmem %s2576, %s2592
                $region94: #{net3layers_forward.5} parent=81 // loop_footer
                  %s2580 = sadd.s32 %s2578, 1
                $region95: #{net3layers_forward.5} parent=81 // loop_footer_branch
                  %2577 = sbr.rel target = $region91
                $region96: #{net3layers_forward.5} parent=81 // loop_exit
                  _
              $region82: #{net3layers_forward.5} parent=59 // pred_fallthru
                _
            $region60: #{net3layers_forward.5} parent=55 // pred_fallthru
              _
            // Predicated region
            $region61: #{net3layers_forward.5} parent=55 // pred_check
              _
            $region62: #{net3layers_forward.5} parent=55 // pred_check_branch
              %2480 = sbr.rel (0) target = $region64
            $region63: #{net3layers_forward.5} parent=55 // pred_region
              %s2482 = sdiv.u32.pop %s2469, 6
              %s2483 = srem.u32.pop %s2469, 6
              // While loop
              $region65: #{net3layers_forward.5} parent=63 // loop_pre_header
                _
              $region66: #{net3layers_forward.5} parent=63 // loop_header
                %s2485 = sphi 0, %s2487
                %p2486 = scmp.ge.s32.totalorder %s2485, %s2482
                %s2490 = sphi 0, %s2507
                %s2491 = sphi %s2462, %s2510
                %s2492 = sphi %s2473, %s2511
              $region67: #{net3layers_forward.5} parent=63 // loop_header_branch
                %2489 = sbr.rel (%p2486) target = $region71
              $region68: #{net3layers_forward.5} parent=63 // loop_body
                %v2493 = vld [vmem:[%s2491] sm:$0xf]
                %2494 = vst [vmem:[%s2492] sm:$0xf] %v2493
                %v2495 = vld [vmem:[%s2491 + $0x4] sm:$0xf]
                %2496 = vst [vmem:[%s2492 + $0x4] sm:$0xf] %v2495
                %v2497 = vld [vmem:[%s2491 + $0x8] sm:$0xf]
                %2498 = vst [vmem:[%s2492 + $0x8] sm:$0xf] %v2497
                %v2499 = vld [vmem:[%s2491 + $0xc] sm:$0xf]
                %2500 = vst [vmem:[%s2492 + $0xc] sm:$0xf] %v2499
                %v2501 = vld [vmem:[%s2491 + $0x10] sm:$0xf]
                %2502 = vst [vmem:[%s2492 + $0x10] sm:$0xf] %v2501
                %v2503 = vld [vmem:[%s2491 + $0x14] sm:$0xf]
                %2504 = vst [vmem:[%s2492 + $0x14] sm:$0xf] %v2503
                %s2505 = sadd.s32 1, %s2490
                %p2506 = scmp.ge.s32.totalorder %s2505, %s2482
                %s2507 = scalar_select %p2506, 0, %s2505
                %s2508 = smul.u32 %s2507, 24
                %s2509 = smul.u32 %s2507, 24
                %s2510 = scalar_lea.vmem %s2462, %s2508 [#allocation2]
                %s2511 = scalar_lea.vmem %s2473, %s2509
              $region69: #{net3layers_forward.5} parent=63 // loop_footer
                %s2487 = sadd.s32 %s2485, 1
              $region70: #{net3layers_forward.5} parent=63 // loop_footer_branch
                %2484 = sbr.rel target = $region66
              $region71: #{net3layers_forward.5} parent=63 // loop_exit
                _
              %s2512 = sdiv.u32.pop %s2469, 6
              %s2513 = srem.u32.pop %s2469, 6
              %s2514 = smul.u32 %s2512, 6
              %s2515 = smul.u32 4, %s2514
              %s2516 = scalar_lea.vmem %s2462, %s2515 [#allocation2]
              %s2517 = smul.u32 4, %s2514
              %s2518 = scalar_lea.vmem %s2473, %s2517
              // While loop
              $region72: #{net3layers_forward.5} parent=63 // loop_pre_header
                _
              $region73: #{net3layers_forward.5} parent=63 // loop_header
                %s2520 = sphi 0, %s2522
                %p2521 = scmp.ge.s32.totalorder %s2520, %s2513
                %s2525 = sphi 0, %s2532
                %s2526 = sphi %s2516, %s2535
                %s2527 = sphi %s2518, %s2536
              $region74: #{net3layers_forward.5} parent=63 // loop_header_branch
                %2524 = sbr.rel (%p2521) target = $region78
              $region75: #{net3layers_forward.5} parent=63 // loop_body
                %v2528 = vld [vmem:[%s2526] sm:$0xf]
                %2529 = vst [vmem:[%s2527] sm:$0xf] %v2528
                %s2530 = sadd.s32 1, %s2525
                %p2531 = scmp.ge.s32.totalorder %s2530, %s2513
                %s2532 = scalar_select %p2531, 0, %s2530
                %s2533 = smul.u32 %s2532, 4
                %s2534 = smul.u32 %s2532, 4
                %s2535 = scalar_lea.vmem %s2516, %s2533 [#allocation2]
                %s2536 = scalar_lea.vmem %s2518, %s2534
              $region76: #{net3layers_forward.5} parent=63 // loop_footer
                %s2522 = sadd.s32 %s2520, 1
              $region77: #{net3layers_forward.5} parent=63 // loop_footer_branch
                %2519 = sbr.rel target = $region73
              $region78: #{net3layers_forward.5} parent=63 // loop_exit
                _
            $region64: #{net3layers_forward.5} parent=55 // pred_fallthru
              _
          $region56: #{net3layers_forward.5} parent=51 // pred_fallthru
            _
          %2595 = vnop
        $region52: #{net3layers_forward.5} parent=47 // pred_fallthru
          _
      $region48: #{net3layers_forward.5} parent=5 // pred_fallthru
        _
      %p2596 = scmp.le.s32.totalorder 2, %s13
      // Predicated region
      $region97: #{net3layers_forward.5} parent=5 // pred_check
        %p2597 = pneg %p2596
      $region98: #{net3layers_forward.5} parent=5 // pred_check_branch
        %2599 = sbr.rel (%p2597) target = $region100
      $region99: #{net3layers_forward.5} parent=5 // pred_region
        %s2600 = ssub.s32 %s13, 2
        // Predicated region
        $region101: #{net3layers_forward.5} parent=99 // pred_check
          %p2601 = pneg %p209
        $region102: #{net3layers_forward.5} parent=99 // pred_check_branch
          %2603 = sbr.rel (%p2601) target = $region104
        $region103: #{net3layers_forward.5} parent=99 // pred_region
          %s2604 = sand.u32 %s194, 1
          %s2605 = sand.u32 %s194, 1
          %s2606 = smul.addr %s2605, 24
          %s2607 = scalar_lea.vmem [#allocation2], %s2606
        $region104: #{net3layers_forward.5} parent=99 // pred_fallthru
          _
      $region100: #{net3layers_forward.5} parent=5 // pred_fallthru
        _
    $region6: #{net3layers_forward.5} parent=1 // loop_footer
      %s17 = sadd.s32 1, %s13
    $region7: #{net3layers_forward.5} parent=1 // loop_footer_branch
      %12 = sbr.rel target = $region3
    $region8: #{net3layers_forward.5} parent=1 // loop_exit
      _

// kernel: net3layers_forward.7
$region0: #{net3layers_forward.7}
  #allocation0 [shape = 'u32[]', space=smem, size = 0x4, offset = 0x4, fixed_abs, tag = 'smem constant byte address 0x4 - core index']
  #allocation1 [shape = 'u32[144,128]{1,0:T(1,128)}', space=vmem, size = 0x12000, scoped, tag = 'internal scratch']
  %s0 = inlined_call_operand.vmem [shape: bf16[2,512], index: 0, kind: input, shape index: {}]
  %s1 = inlined_call_operand.vmem [shape: f32[128,10], index: 1, kind: input, shape index: {}]
  %s2 = inlined_call_operand.vmem [shape: f32[1,10], index: 2, kind: input, shape index: {}]
  %s3 = inlined_call_operand.hbm [shape: f32[2,10], index: 3, kind: output, shape index: {}]
  %s4 = sld [smem:[#allocation0]]
  $region22: #{net3layers_forward.7} parent=0
    _
  %s6 = ssub.s32 1, %s4
  %s7 = scalar_select 0, %s6, %s4
  $region1: #{net3layers_forward.7} parent=0
    #allocation2 [shape = 'u8[1024]{0}', space=vmem, size = 0x400, scoped, tag = 'output window, operand 0, single buffered']
    #allocation3 [shape = 's32[1]{0}', space=sflag, size = 0x4, scoped, tag = 'scoped memory for net3layers_forward.7']
    %8 = vsyncpa [#allocation3], 0
    // Predicated region
    $region2: #{net3layers_forward.7} parent=1 // pred_check
      _
    $region3: #{net3layers_forward.7} parent=1 // pred_check_branch
      %10 = sbr.rel (0) target = $region5
    $region4: #{net3layers_forward.7} parent=1 // pred_region
      _
    $region5: #{net3layers_forward.7} parent=1 // pred_fallthru
      _
    // Predicated region
    $region6: #{net3layers_forward.7} parent=1 // pred_check
      _
    $region7: #{net3layers_forward.7} parent=1 // pred_check_branch
      %12 = sbr.rel (0) target = $region9
    $region8: #{net3layers_forward.7} parent=1 // pred_region
      _
    $region9: #{net3layers_forward.7} parent=1 // pred_fallthru
      _
    // Predicated region
    $region10: #{net3layers_forward.7} parent=1 // pred_check
      _
    $region11: #{net3layers_forward.7} parent=1 // pred_check_branch
      %14 = sbr.rel (0) target = $region13
    $region12: #{net3layers_forward.7} parent=1 // pred_region
      _
    $region13: #{net3layers_forward.7} parent=1 // pred_fallthru
      _
    %v15 = vld [vmem:[%s0] sm:$0xf]
    %v16 = vunpack.c.l.bf16 %v15
    %v18 = vrot.slane %v16, 2
    %v20 = vadd.f32 %v16, %v18
    %v21 = vrot.slane %v16, 4
    %v23 = vadd.f32 %v20, %v21
    %v24 = vrot.slane %v16, 6
    %v26 = vadd.f32 %v23, %v24
    %v27 = vmul.f32 %v26, 0.25
    %v28 = vld [vmem:[%s1] sm:$0xff]
    %v29 = vld [vmem:[%s1 + $0x8] sm:$0xff]
    %v30 = vld [vmem:[%s1 + $0x10] sm:$0xff]
    %v31 = vld [vmem:[%s1 + $0x18] sm:$0xff]
    %v32 = vld [vmem:[%s1 + $0x20] sm:$0xff]
    %v33 = vld [vmem:[%s1 + $0x28] sm:$0xff]
    %v34 = vld [vmem:[%s1 + $0x30] sm:$0xff]
    %v35 = vld [vmem:[%s1 + $0x38] sm:$0xff]
    %v36 = vld [vmem:[%s1 + $0x40] sm:$0xff]
    %v37 = vld [vmem:[%s1 + $0x48] sm:$0xff]
    %v38 = vld [vmem:[%s1 + $0x50] sm:$0xff]
    %v39 = vld [vmem:[%s1 + $0x58] sm:$0xff]
    %v40 = vld [vmem:[%s1 + $0x60] sm:$0xff]
    %v41 = vld [vmem:[%s1 + $0x68] sm:$0xff]
    %v42 = vld [vmem:[%s1 + $0x70] sm:$0xff]
    %v43 = vld [vmem:[%s1 + $0x78] sm:$0xff]
    %v44 = vld [vmem:[%s2] sm:$0x1]
    %v46 = vlaneseq
    %v47 = vshrl.u32 %v46, 7
    %v48 = vsub.s32 0, %v47
    %v49 = vrot.slane %v44, %v48
    %51 = vmatprep.subr.mxu0 0.0
    %52 = vmatpush1.msra.mxu0 %v28
    %53 = vmatprep.subr.mxu0 0.0
    %54 = vmatpush1.msra.mxu0 %v29
    %55 = vmatprep.subr.mxu0 0.0
    %56 = vmatpush1.msra.mxu0 %v30
    %57 = vmatprep.subr.mxu0 0.0
    %58 = vmatpush1.msra.mxu0 %v31
    %59 = vmatprep.subr.mxu0 0.0
    %60 = vmatpush1.msra.mxu0 %v32
    %61 = vmatprep.subr.mxu0 0.0
    %62 = vmatpush1.msra.mxu0 %v33
    %63 = vmatprep.subr.mxu0 0.0
    %64 = vmatpush1.msra.mxu0 %v34
    %65 = vmatprep.subr.mxu0 0.0
    %66 = vmatpush1.msra.mxu0 %v35
    %67 = vmatprep.subr.mxu0 0.0
    %68 = vmatpush1.msra.mxu0 %v36
    %69 = vmatprep.subr.mxu0 0.0
    %70 = vmatpush1.msra.mxu0 %v37
    %71 = vmatprep.subr.mxu0 0.0
    %72 = vmatpush1.msra.mxu0 %v38
    %73 = vmatprep.subr.mxu0 0.0
    %74 = vmatpush1.msra.mxu0 %v39
    %75 = vmatprep.subr.mxu0 0.0
    %76 = vmatpush1.msra.mxu0 %v40
    %77 = vmatprep.subr.mxu0 0.0
    %78 = vmatpush1.msra.mxu0 %v41
    %79 = vmatprep.subr.mxu0 0.0
    %80 = vmatpush1.msra.mxu0 %v42
    %81 = vmatprep.subr.mxu0 0.0
    %82 = vmatpush1.msra.mxu0 %v43
    %83 = vmatprep.subr.mxu0 0.0
    %84 = vmatpush1.msra.mxu0 0.0
    %85 = vmatprep.subr.mxu0 0.0
    %86 = vmatpush1.msra.mxu0 0.0
    %87 = vmatprep.subr.mxu0 0.0
    %88 = vmatpush1.msra.mxu0 0.0
    %89 = vmatprep.subr.mxu0 0.0
    %90 = vmatpush1.msra.mxu0 0.0
    %91 = vmatprep.subr.mxu0 0.0
    %92 = vmatpush1.msra.mxu0 0.0
    %93 = vmatprep.subr.mxu0 0.0
    %94 = vmatpush1.msra.mxu0 0.0
    %95 = vmatprep.subr.mxu0 0.0
    %96 = vmatpush1.msra.mxu0 0.0
    %97 = vmatprep.subr.mxu0 0.0
    %98 = vmatpush1.msra.mxu0 0.0
    %99 = vmatprep.subr.mxu0 0.0
    %100 = vmatpush1.msra.mxu0 0.0
    %101 = vmatprep.subr.mxu0 0.0
    %102 = vmatpush1.msra.mxu0 0.0
    %103 = vmatprep.subr.mxu0 0.0
    %104 = vmatpush1.msra.mxu0 0.0
    %105 = vmatprep.subr.mxu0 0.0
    %106 = vmatpush1.msra.mxu0 0.0
    %107 = vmatprep.subr.mxu0 0.0
    %108 = vmatpush1.msra.mxu0 0.0
    %109 = vmatprep.subr.mxu0 0.0
    %110 = vmatpush1.msra.mxu0 0.0
    %111 = vmatprep.subr.mxu0 0.0
    %112 = vmatpush1.msra.mxu0 0.0
    %113 = vmatprep.subr.mxu0 0.0
    %114 = vmatpush1.msra.mxu0 0.0
    %115 = vmatprep.mubr.f32.mxu0 0.0
    %116 = vmatmul.mubr.f32.gmra.mrb[0].mxu0 %v27
    %v117 = vpop.f32.mrb[0].mxu0
    %v118 = vadd.f32 %v49, %v117
    %v119 = vpop.f32.mrb[0].mxu0
    %120 = vdwg.mxu0
    %vm121 = vcmask 74752
    %122 = vst.msk [vmem:[#allocation2] sm:$0x3] %vm121, %v118
    // Predicated region
    $region14: #{net3layers_forward.7} parent=1 // pred_check
      _
    $region15: #{net3layers_forward.7} parent=1 // pred_check_branch
      %124 = sbr.rel (0) target = $region17
    $region16: #{net3layers_forward.7} parent=1 // pred_region
      %s126 = ssub.s32 32, 32
      %127 = vsyncadd [#allocation3], %s126
      %s129 = sshll.u32 [#allocation2], 4
      %s130 = int_to_ptr.vmem [resolvable:$true] %s129
      %132 = dma.vmem_to_hbm [thread:$0]  %s130, 32, %s3, [#allocation3]
    $region17: #{net3layers_forward.7} parent=1 // pred_fallthru
      _
    // Predicated region
    $region18: #{net3layers_forward.7} parent=1 // pred_check
      _
    $region19: #{net3layers_forward.7} parent=1 // pred_check_branch
      %134 = sbr.rel (0) target = $region21
    $region20: #{net3layers_forward.7} parent=1 // pred_region
      %135 = dma.done [#allocation3], 32
    $region21: #{net3layers_forward.7} parent=1 // pred_fallthru
      _
    %136 = vsyncpa [#allocation3], 1

// kernel: net3layers_forward.6
$region0: #{net3layers_forward.6}
  #allocation0 [shape = 'u32[]', space=smem, size = 0x4, offset = 0x4, fixed_abs, tag = 'smem constant byte address 0x4 - core index']
  #allocation1 [shape = 'u32[144,128]{1,0:T(1,128)}', space=vmem, size = 0x12000, scoped, tag = 'internal scratch']
  %s0 = inlined_call_operand.vmem [shape: bf16[8,576], index: 0, kind: input, shape index: {}]
  %s1 = inlined_call_operand.vmem [shape: bf16[8,576], index: 1, kind: input, shape index: {}]
  %s2 = inlined_call_operand.vmem [shape: bf16[8,576], index: 2, kind: input, shape index: {}]
  %s3 = inlined_call_operand.vmem [shape: bf16[8,576], index: 3, kind: input, shape index: {}]
  %s4 = inlined_call_operand.vmem [shape: bf16[576,128], index: 4, kind: input, shape index: {}]
  %s5 = inlined_call_operand.vmem [shape: f32[1,128], index: 5, kind: input, shape index: {}]
  %s6 = inlined_call_operand.vmem [shape: f32[1,128], index: 6, kind: input, shape index: {}]
  %s7 = inlined_call_operand.vmem [shape: bf16[8,128], index: 7, kind: output, shape index: {}]
  %s8 = sld [smem:[#allocation0]]
  $region38: #{net3layers_forward.6} parent=0
    _
  %s10 = ssub.s32 1, %s8
  %s11 = scalar_select 0, %s10, %s8
  // Predicated region
  $region2: #{net3layers_forward.6} parent=0 // pred_check
    _
  $region3: #{net3layers_forward.6} parent=0 // pred_check_branch
    %13 = sbr.rel (0) target = $region5
  $region4: #{net3layers_forward.6} parent=0 // pred_region
    _
  $region5: #{net3layers_forward.6} parent=0 // pred_fallthru
    _
  // Predicated region
  $region6: #{net3layers_forward.6} parent=0 // pred_check
    _
  $region7: #{net3layers_forward.6} parent=0 // pred_check_branch
    %15 = sbr.rel (0) target = $region9
  $region8: #{net3layers_forward.6} parent=0 // pred_region
    _
  $region9: #{net3layers_forward.6} parent=0 // pred_fallthru
    _
  // Predicated region
  $region10: #{net3layers_forward.6} parent=0 // pred_check
    _
  $region11: #{net3layers_forward.6} parent=0 // pred_check_branch
    %17 = sbr.rel (0) target = $region13
  $region12: #{net3layers_forward.6} parent=0 // pred_region
    _
  $region13: #{net3layers_forward.6} parent=0 // pred_fallthru
    _
  // Predicated region
  $region14: #{net3layers_forward.6} parent=0 // pred_check
    _
  $region15: #{net3layers_forward.6} parent=0 // pred_check_branch
    %19 = sbr.rel (0) target = $region17
  $region16: #{net3layers_forward.6} parent=0 // pred_region
    _
  $region17: #{net3layers_forward.6} parent=0 // pred_fallthru
    _
  // Predicated region
  $region18: #{net3layers_forward.6} parent=0 // pred_check
    _
  $region19: #{net3layers_forward.6} parent=0 // pred_check_branch
    %21 = sbr.rel (0) target = $region21
  $region20: #{net3layers_forward.6} parent=0 // pred_region
    _
  $region21: #{net3layers_forward.6} parent=0 // pred_fallthru
    _
  // Predicated region
  $region22: #{net3layers_forward.6} parent=0 // pred_check
    _
  $region23: #{net3layers_forward.6} parent=0 // pred_check_branch
    %23 = sbr.rel (0) target = $region25
  $region24: #{net3layers_forward.6} parent=0 // pred_region
    _
  $region25: #{net3layers_forward.6} parent=0 // pred_fallthru
    _
  // Predicated region
  $region26: #{net3layers_forward.6} parent=0 // pred_check
    _
  $region27: #{net3layers_forward.6} parent=0 // pred_check_branch
    %25 = sbr.rel (0) target = $region29
  $region28: #{net3layers_forward.6} parent=0 // pred_region
    _
  $region29: #{net3layers_forward.6} parent=0 // pred_fallthru
    _
  %v27 = vld [vmem:[%s4] sm:$0xf]
  %v28 = vld [vmem:[%s4 + $0x4] sm:$0xf]
  %v29 = vld [vmem:[%s4 + $0x8] sm:$0xf]
  %v30 = vld [vmem:[%s4 + $0xc] sm:$0xf]
  %v31 = vld [vmem:[%s4 + $0x10] sm:$0xf]
  %v32 = vld [vmem:[%s4 + $0x14] sm:$0xf]
  %v33 = vld [vmem:[%s4 + $0x18] sm:$0xf]
  %v34 = vld [vmem:[%s4 + $0x1c] sm:$0xf]
  %v35 = vld [vmem:[%s4 + $0x20] sm:$0xf]
  %v36 = vld [vmem:[%s4 + $0x24] sm:$0xf]
  %v37 = vld [vmem:[%s4 + $0x28] sm:$0xf]
  %v38 = vld [vmem:[%s4 + $0x2c] sm:$0xf]
  %v39 = vld [vmem:[%s4 + $0x30] sm:$0xf]
  %v40 = vld [vmem:[%s4 + $0x34] sm:$0xf]
  %v41 = vld [vmem:[%s4 + $0x38] sm:$0xf]
  %v42 = vld [vmem:[%s4 + $0x3c] sm:$0xf]
  %v43 = vld [vmem:[%s4 + $0x40] sm:$0xf]
  %v44 = vld [vmem:[%s4 + $0x44] sm:$0xf]
  %v45 = vld [vmem:[%s4 + $0x48] sm:$0xf]
  %v46 = vld [vmem:[%s4 + $0x4c] sm:$0xf]
  %v47 = vld [vmem:[%s4 + $0x50] sm:$0xf]
  %v48 = vld [vmem:[%s4 + $0x54] sm:$0xf]
  %v49 = vld [vmem:[%s4 + $0x58] sm:$0xf]
  %v50 = vld [vmem:[%s4 + $0x5c] sm:$0xf]
  %v51 = vld [vmem:[%s4 + $0x60] sm:$0xf]
  %v52 = vld [vmem:[%s4 + $0x64] sm:$0xf]
  %v53 = vld [vmem:[%s4 + $0x68] sm:$0xf]
  %v54 = vld [vmem:[%s4 + $0x6c] sm:$0xf]
  %v55 = vld [vmem:[%s4 + $0x70] sm:$0xf]
  %v56 = vld [vmem:[%s4 + $0x74] sm:$0xf]
  %v57 = vld [vmem:[%s4 + $0x78] sm:$0xf]
  %v58 = vld [vmem:[%s4 + $0x7c] sm:$0xf]
  %v59 = vld [vmem:[%s4 + $0x80] sm:$0xf]
  %v60 = vld [vmem:[%s4 + $0x84] sm:$0xf]
  %v61 = vld [vmem:[%s4 + $0x88] sm:$0xf]
  %v62 = vld [vmem:[%s4 + $0x8c] sm:$0xf]
  %v63 = vld [vmem:[%s4 + $0x90] sm:$0xf]
  %v64 = vld [vmem:[%s4 + $0x94] sm:$0xf]
  %v65 = vld [vmem:[%s4 + $0x98] sm:$0xf]
  %v66 = vld [vmem:[%s4 + $0x9c] sm:$0xf]
  %v67 = vld [vmem:[%s4 + $0xa0] sm:$0xf]
  %v68 = vld [vmem:[%s4 + $0xa4] sm:$0xf]
  %v69 = vld [vmem:[%s4 + $0xa8] sm:$0xf]
  %v70 = vld [vmem:[%s4 + $0xac] sm:$0xf]
  %v71 = vld [vmem:[%s4 + $0xb0] sm:$0xf]
  %v72 = vld [vmem:[%s4 + $0xb4] sm:$0xf]
  %v73 = vld [vmem:[%s4 + $0xb8] sm:$0xf]
  %v74 = vld [vmem:[%s4 + $0xbc] sm:$0xf]
  %v75 = vld [vmem:[%s4 + $0xc0] sm:$0xf]
  %v76 = vld [vmem:[%s4 + $0xc4] sm:$0xf]
  %v77 = vld [vmem:[%s4 + $0xc8] sm:$0xf]
  %v78 = vld [vmem:[%s4 + $0xcc] sm:$0xf]
  %v79 = vld [vmem:[%s4 + $0xd0] sm:$0xf]
  %v80 = vld [vmem:[%s4 + $0xd4] sm:$0xf]
  %v81 = vld [vmem:[%s4 + $0xd8] sm:$0xf]
  %v82 = vld [vmem:[%s4 + $0xdc] sm:$0xf]
  %v83 = vld [vmem:[%s4 + $0xe0] sm:$0xf]
  %v84 = vld [vmem:[%s4 + $0xe4] sm:$0xf]
  %v85 = vld [vmem:[%s4 + $0xe8] sm:$0xf]
  %v86 = vld [vmem:[%s4 + $0xec] sm:$0xf]
  %v87 = vld [vmem:[%s4 + $0xf0] sm:$0xf]
  %v88 = vld [vmem:[%s4 + $0xf4] sm:$0xf]
  %v89 = vld [vmem:[%s4 + $0xf8] sm:$0xf]
  %v90 = vld [vmem:[%s4 + $0xfc] sm:$0xf]
  %v91 = vld [vmem:[%s4 + $0x100] sm:$0xf]
  %v92 = vld [vmem:[%s4 + $0x104] sm:$0xf]
  %v93 = vld [vmem:[%s4 + $0x108] sm:$0xf]
  %v94 = vld [vmem:[%s4 + $0x10c] sm:$0xf]
  %v95 = vld [vmem:[%s4 + $0x110] sm:$0xf]
  %v96 = vld [vmem:[%s4 + $0x114] sm:$0xf]
  %v97 = vld [vmem:[%s4 + $0x118] sm:$0xf]
  %v98 = vld [vmem:[%s4 + $0x11c] sm:$0xf]
  %v99 = vld [vmem:[%s5] sm:$0x1]
  %v100 = vld [vmem:[%s6] sm:$0x1]
  %v101 = vld [vmem:[%s0] sm:$0xff]
  %v102 = vld [vmem:[%s0 + $0x8] sm:$0xff]
  %v103 = vld [vmem:[%s0 + $0x10] sm:$0xf]
  %v107 = vunpack.c.l.b16 %v101
  %v108 = vunpack.c.h.b16 %v101
  %v109 = vunpack.c.l.b16 %v102
  %v110 = vunpack.c.h.b16 %v102
  %v111 = vunpack.c.l.b16 %v103
  %v112 = vpack.c.b16 %v107, %v107
  %v113 = vpack.c.b16 %v108, %v108
  %v114 = vpack.c.b16 %v109, %v109
  %v115 = vpack.c.b16 %v110, %v110
  %v116 = vpack.c.b16 %v111, %v111
  %v193 = vunpack.c.l.b16 %v27
  %v194 = vunpack.c.l.b16 %v28
  %v195 = vunpack.c.l.b16 %v29
  %v196 = vunpack.c.l.b16 %v30
  %v197 = vunpack.c.l.b16 %v31
  %v198 = vunpack.c.l.b16 %v32
  %v199 = vunpack.c.l.b16 %v33
  %v200 = vunpack.c.l.b16 %v34
  %v201 = vunpack.c.l.b16 %v35
  %v202 = vunpack.c.l.b16 %v36
  %v203 = vunpack.c.l.b16 %v37
  %v204 = vunpack.c.l.b16 %v38
  %v205 = vunpack.c.l.b16 %v39
  %v206 = vunpack.c.l.b16 %v40
  %v207 = vunpack.c.l.b16 %v41
  %v208 = vunpack.c.l.b16 %v42
  %v209 = vunpack.c.l.b16 %v43
  %v210 = vunpack.c.l.b16 %v44
  %v211 = vunpack.c.l.b16 %v45
  %v212 = vunpack.c.l.b16 %v46
  %v213 = vunpack.c.l.b16 %v47
  %v214 = vunpack.c.l.b16 %v48
  %v215 = vunpack.c.l.b16 %v49
  %v216 = vunpack.c.l.b16 %v50
  %v217 = vunpack.c.l.b16 %v51
  %v218 = vunpack.c.l.b16 %v52
  %v219 = vunpack.c.l.b16 %v53
  %v220 = vunpack.c.l.b16 %v54
  %v221 = vunpack.c.l.b16 %v55
  %v222 = vunpack.c.l.b16 %v56
  %v223 = vunpack.c.l.b16 %v57
  %v224 = vunpack.c.l.b16 %v58
  %v225 = vunpack.c.l.b16 %v59
  %v226 = vunpack.c.l.b16 %v60
  %v227 = vunpack.c.l.b16 %v61
  %v228 = vunpack.c.l.b16 %v62
  %v229 = vunpack.c.l.b16 %v63
  %v230 = vunpack.c.l.b16 %v64
  %v231 = vunpack.c.l.b16 %v65
  %v232 = vunpack.c.l.b16 %v66
  %v233 = vunpack.c.l.b16 %v67
  %v234 = vunpack.c.l.b16 %v68
  %v235 = vunpack.c.l.b16 %v69
  %v236 = vunpack.c.l.b16 %v70
  %v237 = vunpack.c.l.b16 %v71
  %v238 = vunpack.c.l.b16 %v72
  %v239 = vunpack.c.l.b16 %v73
  %v240 = vunpack.c.l.b16 %v74
  %v241 = vunpack.c.l.b16 %v75
  %v242 = vunpack.c.l.b16 %v76
  %v243 = vunpack.c.l.b16 %v77
  %v244 = vunpack.c.l.b16 %v78
  %v245 = vunpack.c.l.b16 %v79
  %v246 = vunpack.c.l.b16 %v80
  %v247 = vunpack.c.l.b16 %v81
  %v248 = vunpack.c.l.b16 %v82
  %v249 = vunpack.c.l.b16 %v83
  %v250 = vunpack.c.l.b16 %v84
  %v251 = vunpack.c.l.b16 %v85
  %v252 = vunpack.c.l.b16 %v86
  %v253 = vunpack.c.l.b16 %v87
  %v254 = vunpack.c.l.b16 %v88
  %v255 = vunpack.c.l.b16 %v89
  %v256 = vunpack.c.l.b16 %v90
  %v257 = vunpack.c.l.b16 %v91
  %v258 = vunpack.c.l.b16 %v92
  %v259 = vunpack.c.l.b16 %v93
  %v260 = vunpack.c.l.b16 %v94
  %v261 = vunpack.c.l.b16 %v95
  %v262 = vunpack.c.l.b16 %v96
  %v263 = vunpack.c.l.b16 %v97
  %v264 = vunpack.c.l.b16 %v98
  %v265 = vpack.c.b16 %v194, %v193
  %v266 = vpack.c.b16 %v196, %v195
  %v267 = vpack.c.b16 %v198, %v197
  %v268 = vpack.c.b16 %v200, %v199
  %v269 = vpack.c.b16 %v202, %v201
  %v270 = vpack.c.b16 %v204, %v203
  %v271 = vpack.c.b16 %v206, %v205
  %v272 = vpack.c.b16 %v208, %v207
  %v273 = vpack.c.b16 %v210, %v209
  %v274 = vpack.c.b16 %v212, %v211
  %v275 = vpack.c.b16 %v214, %v213
  %v276 = vpack.c.b16 %v216, %v215
  %v277 = vpack.c.b16 %v218, %v217
  %v278 = vpack.c.b16 %v220, %v219
  %v279 = vpack.c.b16 %v222, %v221
  %v280 = vpack.c.b16 %v224, %v223
  %v281 = vpack.c.b16 %v226, %v225
  %v282 = vpack.c.b16 %v228, %v227
  %v283 = vpack.c.b16 %v230, %v229
  %v284 = vpack.c.b16 %v232, %v231
  %v285 = vpack.c.b16 %v234, %v233
  %v286 = vpack.c.b16 %v236, %v235
  %v287 = vpack.c.b16 %v238, %v237
  %v288 = vpack.c.b16 %v240, %v239
  %v289 = vpack.c.b16 %v242, %v241
  %v290 = vpack.c.b16 %v244, %v243
  %v291 = vpack.c.b16 %v246, %v245
  %v292 = vpack.c.b16 %v248, %v247
  %v293 = vpack.c.b16 %v250, %v249
  %v294 = vpack.c.b16 %v252, %v251
  %v295 = vpack.c.b16 %v254, %v253
  %v296 = vpack.c.b16 %v256, %v255
  %v297 = vpack.c.b16 %v258, %v257
  %v298 = vpack.c.b16 %v260, %v259
  %v299 = vpack.c.b16 %v262, %v261
  %v300 = vpack.c.b16 %v264, %v263
  %vm337 = vcmask 523264
  %v339 = vsel %vm337, %v116, 0
  %341 = vmatprep.subr.bf16.mxu0 0
  %342 = vmatpush1.bf16.msra.mxu0 %v265
  %343 = vmatprep.subr.bf16.mxu0 0
  %344 = vmatpush1.bf16.msra.mxu0 %v266
  %345 = vmatprep.subr.bf16.mxu0 0
  %346 = vmatpush1.bf16.msra.mxu0 %v267
  %347 = vmatprep.subr.bf16.mxu0 0
  %348 = vmatpush1.bf16.msra.mxu0 %v268
  %349 = vmatprep.subr.bf16.mxu0 0
  %350 = vmatpush1.bf16.msra.mxu0 %v269
  %351 = vmatprep.subr.bf16.mxu0 0
  %352 = vmatpush1.bf16.msra.mxu0 %v270
  %353 = vmatprep.subr.bf16.mxu0 0
  %354 = vmatpush1.bf16.msra.mxu0 %v271
  %355 = vmatprep.subr.bf16.mxu0 0
  %356 = vmatpush1.bf16.msra.mxu0 %v272
  %357 = vmatprep.subr.bf16.mxu0 0
  %358 = vmatpush1.bf16.msra.mxu0 %v273
  %359 = vmatprep.subr.bf16.mxu0 0
  %360 = vmatpush1.bf16.msra.mxu0 %v274
  %361 = vmatprep.subr.bf16.mxu0 0
  %362 = vmatpush1.bf16.msra.mxu0 %v275
  %363 = vmatprep.subr.bf16.mxu0 0
  %364 = vmatpush1.bf16.msra.mxu0 %v276
  %365 = vmatprep.subr.bf16.mxu0 0
  %366 = vmatpush1.bf16.msra.mxu0 %v277
  %367 = vmatprep.subr.bf16.mxu0 0
  %368 = vmatpush1.bf16.msra.mxu0 %v278
  %369 = vmatprep.subr.bf16.mxu0 0
  %370 = vmatpush1.bf16.msra.mxu0 %v279
  %371 = vmatprep.subr.bf16.mxu0 0
  %372 = vmatpush1.bf16.msra.mxu0 %v280
  %373 = vmatprep.mubr.bf16.mxu0 %v113
  %374 = vmatmul.mubr.bf16.gmra.mrb[0].mxu0 %v112
  %v375 = vpop.f32.mrb[0].mxu0
  %v376 = vadd.f32 0.0, %v375
  %v377 = vpop.f32.mrb[0].mxu0
  %v378 = vpop.f32.mrb[0].mxu0
  %v379 = vpop.f32.mrb[0].mxu0
  %380 = vdwg.mxu0
  %381 = vmatprep.subr.bf16.mxu0 0
  %382 = vmatpush1.bf16.msra.mxu0 %v281
  %383 = vmatprep.subr.bf16.mxu0 0
  %384 = vmatpush1.bf16.msra.mxu0 %v282
  %385 = vmatprep.subr.bf16.mxu0 0
  %386 = vmatpush1.bf16.msra.mxu0 %v283
  %387 = vmatprep.subr.bf16.mxu0 0
  %388 = vmatpush1.bf16.msra.mxu0 %v284
  %389 = vmatprep.subr.bf16.mxu0 0
  %390 = vmatpush1.bf16.msra.mxu0 %v285
  %391 = vmatprep.subr.bf16.mxu0 0
  %392 = vmatpush1.bf16.msra.mxu0 %v286
  %393 = vmatprep.subr.bf16.mxu0 0
  %394 = vmatpush1.bf16.msra.mxu0 %v287
  %395 = vmatprep.subr.bf16.mxu0 0
  %396 = vmatpush1.bf16.msra.mxu0 %v288
  %397 = vmatprep.subr.bf16.mxu0 0
  %398 = vmatpush1.bf16.msra.mxu0 %v289
  %399 = vmatprep.subr.bf16.mxu0 0
  %400 = vmatpush1.bf16.msra.mxu0 %v290
  %401 = vmatprep.subr.bf16.mxu0 0
  %402 = vmatpush1.bf16.msra.mxu0 %v291
  %403 = vmatprep.subr.bf16.mxu0 0
  %404 = vmatpush1.bf16.msra.mxu0 %v292
  %405 = vmatprep.subr.bf16.mxu0 0
  %406 = vmatpush1.bf16.msra.mxu0 %v293
  %407 = vmatprep.subr.bf16.mxu0 0
  %408 = vmatpush1.bf16.msra.mxu0 %v294
  %409 = vmatprep.subr.bf16.mxu0 0
  %410 = vmatpush1.bf16.msra.mxu0 %v295
  %411 = vmatprep.subr.bf16.mxu0 0
  %412 = vmatpush1.bf16.msra.mxu0 %v296
  %413 = vmatprep.mubr.bf16.mxu0 %v115
  %414 = vmatmul.mubr.bf16.gmra.mrb[0].mxu0 %v114
  %v415 = vpop.f32.mrb[0].mxu0
  %v416 = vadd.f32 %v376, %v415
  %v417 = vpop.f32.mrb[0].mxu0
  %v418 = vpop.f32.mrb[0].mxu0
  %v419 = vpop.f32.mrb[0].mxu0
  %420 = vdwg.mxu0
  %421 = vmatprep.subr.bf16.mxu0 0
  %422 = vmatpush1.bf16.msra.mxu0 %v297
  %423 = vmatprep.subr.bf16.mxu0 0
  %424 = vmatpush1.bf16.msra.mxu0 %v298
  %425 = vmatprep.subr.bf16.mxu0 0
  %426 = vmatpush1.bf16.msra.mxu0 %v299
  %427 = vmatprep.subr.bf16.mxu0 0
  %428 = vmatpush1.bf16.msra.mxu0 %v300
  %429 = vmatprep.subr.bf16.mxu0 0
  %430 = vmatpush1.bf16.msra.mxu0 0
  %431 = vmatprep.subr.bf16.mxu0 0
  %432 = vmatpush1.bf16.msra.mxu0 0
  %433 = vmatprep.subr.bf16.mxu0 0
  %434 = vmatpush1.bf16.msra.mxu0 0
  %435 = vmatprep.subr.bf16.mxu0 0
  %436 = vmatpush1.bf16.msra.mxu0 0
  %437 = vmatprep.subr.bf16.mxu0 0
  %438 = vmatpush1.bf16.msra.mxu0 0
  %439 = vmatprep.subr.bf16.mxu0 0
  %440 = vmatpush1.bf16.msra.mxu0 0
  %441 = vmatprep.subr.bf16.mxu0 0
  %442 = vmatpush1.bf16.msra.mxu0 0
  %443 = vmatprep.subr.bf16.mxu0 0
  %444 = vmatpush1.bf16.msra.mxu0 0
  %445 = vmatprep.subr.bf16.mxu0 0
  %446 = vmatpush1.bf16.msra.mxu0 0
  %447 = vmatprep.subr.bf16.mxu0 0
  %448 = vmatpush1.bf16.msra.mxu0 0
  %449 = vmatprep.subr.bf16.mxu0 0
  %450 = vmatpush1.bf16.msra.mxu0 0
  %451 = vmatprep.subr.bf16.mxu0 0
  %452 = vmatpush1.bf16.msra.mxu0 0
  %453 = vmatprep.mubr.bf16.mxu0 0
  %454 = vmatmul.mubr.bf16.gmra.mrb[0].mxu0 %v339
  %v455 = vpop.f32.mrb[0].mxu0
  %v456 = vadd.f32 %v416, %v455
  %v457 = vpop.f32.mrb[0].mxu0
  %v458 = vpop.f32.mrb[0].mxu0
  %v459 = vpop.f32.mrb[0].mxu0
  %460 = vdwg.mxu0
  %v462 = vlaneseq
  %v463 = vshrl.u32 %v462, 7
  %v464 = vsub.s32 0, %v463
  %v465 = vrot.slane %v99, %v464
  %v467 = vmul.f32 %v456, %v465
  %v469 = vlaneseq
  %v470 = vshrl.u32 %v469, 7
  %v471 = vsub.s32 0, %v470
  %v472 = vrot.slane %v100, %v471
  %v474 = vadd.f32 %v467, %v472
  %v475 = vmax.f32 %v474, 0.0
  %v476 = vld [vmem:[%s1] sm:$0xff]
  %v477 = vld [vmem:[%s1 + $0x8] sm:$0xff]
  %v478 = vld [vmem:[%s1 + $0x10] sm:$0xf]
  %v482 = vunpack.c.l.b16 %v476
  %v483 = vunpack.c.h.b16 %v476
  %v484 = vunpack.c.l.b16 %v477
  %v485 = vunpack.c.h.b16 %v477
  %v486 = vunpack.c.l.b16 %v478
  %v487 = vpack.c.b16 %v482, %v482
  %v488 = vpack.c.b16 %v483, %v483
  %v489 = vpack.c.b16 %v484, %v484
  %v490 = vpack.c.b16 %v485, %v485
  %v491 = vpack.c.b16 %v486, %v486
  %v497 = vsel %vm337, %v491, 0
  %499 = vmatprep.subr.bf16.mxu0 0
  %500 = vmatpush1.bf16.msra.mxu0 %v265
  %501 = vmatprep.subr.bf16.mxu0 0
  %502 = vmatpush1.bf16.msra.mxu0 %v266
  %503 = vmatprep.subr.bf16.mxu0 0
  %504 = vmatpush1.bf16.msra.mxu0 %v267
  %505 = vmatprep.subr.bf16.mxu0 0
  %506 = vmatpush1.bf16.msra.mxu0 %v268
  %507 = vmatprep.subr.bf16.mxu0 0
  %508 = vmatpush1.bf16.msra.mxu0 %v269
  %509 = vmatprep.subr.bf16.mxu0 0
  %510 = vmatpush1.bf16.msra.mxu0 %v270
  %511 = vmatprep.subr.bf16.mxu0 0
  %512 = vmatpush1.bf16.msra.mxu0 %v271
  %513 = vmatprep.subr.bf16.mxu0 0
  %514 = vmatpush1.bf16.msra.mxu0 %v272
  %515 = vmatprep.subr.bf16.mxu0 0
  %516 = vmatpush1.bf16.msra.mxu0 %v273
  %517 = vmatprep.subr.bf16.mxu0 0
  %518 = vmatpush1.bf16.msra.mxu0 %v274
  %519 = vmatprep.subr.bf16.mxu0 0
  %520 = vmatpush1.bf16.msra.mxu0 %v275
  %521 = vmatprep.subr.bf16.mxu0 0
  %522 = vmatpush1.bf16.msra.mxu0 %v276
  %523 = vmatprep.subr.bf16.mxu0 0
  %524 = vmatpush1.bf16.msra.mxu0 %v277
  %525 = vmatprep.subr.bf16.mxu0 0
  %526 = vmatpush1.bf16.msra.mxu0 %v278
  %527 = vmatprep.subr.bf16.mxu0 0
  %528 = vmatpush1.bf16.msra.mxu0 %v279
  %529 = vmatprep.subr.bf16.mxu0 0
  %530 = vmatpush1.bf16.msra.mxu0 %v280
  %531 = vmatprep.mubr.bf16.mxu0 %v488
  %532 = vmatmul.mubr.bf16.gmra.mrb[0].mxu0 %v487
  %v533 = vpop.f32.mrb[0].mxu0
  %v534 = vadd.f32 0.0, %v533
  %v535 = vpop.f32.mrb[0].mxu0
  %v536 = vpop.f32.mrb[0].mxu0
  %v537 = vpop.f32.mrb[0].mxu0
  %538 = vdwg.mxu0
  %539 = vmatprep.subr.bf16.mxu0 0
  %540 = vmatpush1.bf16.msra.mxu0 %v281
  %541 = vmatprep.subr.bf16.mxu0 0
  %542 = vmatpush1.bf16.msra.mxu0 %v282
  %543 = vmatprep.subr.bf16.mxu0 0
  %544 = vmatpush1.bf16.msra.mxu0 %v283
  %545 = vmatprep.subr.bf16.mxu0 0
  %546 = vmatpush1.bf16.msra.mxu0 %v284
  %547 = vmatprep.subr.bf16.mxu0 0
  %548 = vmatpush1.bf16.msra.mxu0 %v285
  %549 = vmatprep.subr.bf16.mxu0 0
  %550 = vmatpush1.bf16.msra.mxu0 %v286
  %551 = vmatprep.subr.bf16.mxu0 0
  %552 = vmatpush1.bf16.msra.mxu0 %v287
  %553 = vmatprep.subr.bf16.mxu0 0
  %554 = vmatpush1.bf16.msra.mxu0 %v288
  %555 = vmatprep.subr.bf16.mxu0 0
  %556 = vmatpush1.bf16.msra.mxu0 %v289
  %557 = vmatprep.subr.bf16.mxu0 0
  %558 = vmatpush1.bf16.msra.mxu0 %v290
  %559 = vmatprep.subr.bf16.mxu0 0
  %560 = vmatpush1.bf16.msra.mxu0 %v291
  %561 = vmatprep.subr.bf16.mxu0 0
  %562 = vmatpush1.bf16.msra.mxu0 %v292
  %563 = vmatprep.subr.bf16.mxu0 0
  %564 = vmatpush1.bf16.msra.mxu0 %v293
  %565 = vmatprep.subr.bf16.mxu0 0
  %566 = vmatpush1.bf16.msra.mxu0 %v294
  %567 = vmatprep.subr.bf16.mxu0 0
  %568 = vmatpush1.bf16.msra.mxu0 %v295
  %569 = vmatprep.subr.bf16.mxu0 0
  %570 = vmatpush1.bf16.msra.mxu0 %v296
  %571 = vmatprep.mubr.bf16.mxu0 %v490
  %572 = vmatmul.mubr.bf16.gmra.mrb[0].mxu0 %v489
  %v573 = vpop.f32.mrb[0].mxu0
  %v574 = vadd.f32 %v534, %v573
  %v575 = vpop.f32.mrb[0].mxu0
  %v576 = vpop.f32.mrb[0].mxu0
  %v577 = vpop.f32.mrb[0].mxu0
  %578 = vdwg.mxu0
  %579 = vmatprep.subr.bf16.mxu0 0
  %580 = vmatpush1.bf16.msra.mxu0 %v297
  %581 = vmatprep.subr.bf16.mxu0 0
  %582 = vmatpush1.bf16.msra.mxu0 %v298
  %583 = vmatprep.subr.bf16.mxu0 0
  %584 = vmatpush1.bf16.msra.mxu0 %v299
  %585 = vmatprep.subr.bf16.mxu0 0
  %586 = vmatpush1.bf16.msra.mxu0 %v300
  %587 = vmatprep.subr.bf16.mxu0 0
  %588 = vmatpush1.bf16.msra.mxu0 0
  %589 = vmatprep.subr.bf16.mxu0 0
  %590 = vmatpush1.bf16.msra.mxu0 0
  %591 = vmatprep.subr.bf16.mxu0 0
  %592 = vmatpush1.bf16.msra.mxu0 0
  %593 = vmatprep.subr.bf16.mxu0 0
  %594 = vmatpush1.bf16.msra.mxu0 0
  %595 = vmatprep.subr.bf16.mxu0 0
  %596 = vmatpush1.bf16.msra.mxu0 0
  %597 = vmatprep.subr.bf16.mxu0 0
  %598 = vmatpush1.bf16.msra.mxu0 0
  %599 = vmatprep.subr.bf16.mxu0 0
  %600 = vmatpush1.bf16.msra.mxu0 0
  %601 = vmatprep.subr.bf16.mxu0 0
  %602 = vmatpush1.bf16.msra.mxu0 0
  %603 = vmatprep.subr.bf16.mxu0 0
  %604 = vmatpush1.bf16.msra.mxu0 0
  %605 = vmatprep.subr.bf16.mxu0 0
  %606 = vmatpush1.bf16.msra.mxu0 0
  %607 = vmatprep.subr.bf16.mxu0 0
  %608 = vmatpush1.bf16.msra.mxu0 0
  %609 = vmatprep.subr.bf16.mxu0 0
  %610 = vmatpush1.bf16.msra.mxu0 0
  %611 = vmatprep.mubr.bf16.mxu0 0
  %612 = vmatmul.mubr.bf16.gmra.mrb[0].mxu0 %v497
  %v613 = vpop.f32.mrb[0].mxu0
  %v614 = vadd.f32 %v574, %v613
  %v615 = vpop.f32.mrb[0].mxu0
  %v616 = vpop.f32.mrb[0].mxu0
  %v617 = vpop.f32.mrb[0].mxu0
  %618 = vdwg.mxu0
  %v619 = vmul.f32 %v614, %v465
  %v620 = vadd.f32 %v619, %v472
  %v621 = vmax.f32 %v620, 0.0
  %v622 = vmax.f32 %v475, %v621
  %v623 = vld [vmem:[%s2] sm:$0xff]
  %v624 = vld [vmem:[%s2 + $0x8] sm:$0xff]
  %v625 = vld [vmem:[%s2 + $0x10] sm:$0xf]
  %v629 = vunpack.c.l.b16 %v623
  %v630 = vunpack.c.h.b16 %v623
  %v631 = vunpack.c.l.b16 %v624
  %v632 = vunpack.c.h.b16 %v624
  %v633 = vunpack.c.l.b16 %v625
  %v634 = vpack.c.b16 %v629, %v629
  %v635 = vpack.c.b16 %v630, %v630
  %v636 = vpack.c.b16 %v631, %v631
  %v637 = vpack.c.b16 %v632, %v632
  %v638 = vpack.c.b16 %v633, %v633
  %v644 = vsel %vm337, %v638, 0
  %646 = vmatprep.subr.bf16.mxu0 0
  %647 = vmatpush1.bf16.msra.mxu0 %v265
  %648 = vmatprep.subr.bf16.mxu0 0
  %649 = vmatpush1.bf16.msra.mxu0 %v266
  %650 = vmatprep.subr.bf16.mxu0 0
  %651 = vmatpush1.bf16.msra.mxu0 %v267
  %652 = vmatprep.subr.bf16.mxu0 0
  %653 = vmatpush1.bf16.msra.mxu0 %v268
  %654 = vmatprep.subr.bf16.mxu0 0
  %655 = vmatpush1.bf16.msra.mxu0 %v269
  %656 = vmatprep.subr.bf16.mxu0 0
  %657 = vmatpush1.bf16.msra.mxu0 %v270
  %658 = vmatprep.subr.bf16.mxu0 0
  %659 = vmatpush1.bf16.msra.mxu0 %v271
  %660 = vmatprep.subr.bf16.mxu0 0
  %661 = vmatpush1.bf16.msra.mxu0 %v272
  %662 = vmatprep.subr.bf16.mxu0 0
  %663 = vmatpush1.bf16.msra.mxu0 %v273
  %664 = vmatprep.subr.bf16.mxu0 0
  %665 = vmatpush1.bf16.msra.mxu0 %v274
  %666 = vmatprep.subr.bf16.mxu0 0
  %667 = vmatpush1.bf16.msra.mxu0 %v275
  %668 = vmatprep.subr.bf16.mxu0 0
  %669 = vmatpush1.bf16.msra.mxu0 %v276
  %670 = vmatprep.subr.bf16.mxu0 0
  %671 = vmatpush1.bf16.msra.mxu0 %v277
  %672 = vmatprep.subr.bf16.mxu0 0
  %673 = vmatpush1.bf16.msra.mxu0 %v278
  %674 = vmatprep.subr.bf16.mxu0 0
  %675 = vmatpush1.bf16.msra.mxu0 %v279
  %676 = vmatprep.subr.bf16.mxu0 0
  %677 = vmatpush1.bf16.msra.mxu0 %v280
  %678 = vmatprep.mubr.bf16.mxu0 %v635
  %679 = vmatmul.mubr.bf16.gmra.mrb[0].mxu0 %v634
  %v680 = vpop.f32.mrb[0].mxu0
  %v681 = vadd.f32 0.0, %v680
  %v682 = vpop.f32.mrb[0].mxu0
  %v683 = vpop.f32.mrb[0].mxu0
  %v684 = vpop.f32.mrb[0].mxu0
  %685 = vdwg.mxu0
  %686 = vmatprep.subr.bf16.mxu0 0
  %687 = vmatpush1.bf16.msra.mxu0 %v281
  %688 = vmatprep.subr.bf16.mxu0 0
  %689 = vmatpush1.bf16.msra.mxu0 %v282
  %690 = vmatprep.subr.bf16.mxu0 0
  %691 = vmatpush1.bf16.msra.mxu0 %v283
  %692 = vmatprep.subr.bf16.mxu0 0
  %693 = vmatpush1.bf16.msra.mxu0 %v284
  %694 = vmatprep.subr.bf16.mxu0 0
  %695 = vmatpush1.bf16.msra.mxu0 %v285
  %696 = vmatprep.subr.bf16.mxu0 0
  %697 = vmatpush1.bf16.msra.mxu0 %v286
  %698 = vmatprep.subr.bf16.mxu0 0
  %699 = vmatpush1.bf16.msra.mxu0 %v287
  %700 = vmatprep.subr.bf16.mxu0 0
  %701 = vmatpush1.bf16.msra.mxu0 %v288
  %702 = vmatprep.subr.bf16.mxu0 0
  %703 = vmatpush1.bf16.msra.mxu0 %v289
  %704 = vmatprep.subr.bf16.mxu0 0
  %705 = vmatpush1.bf16.msra.mxu0 %v290
  %706 = vmatprep.subr.bf16.mxu0 0
  %707 = vmatpush1.bf16.msra.mxu0 %v291
  %708 = vmatprep.subr.bf16.mxu0 0
  %709 = vmatpush1.bf16.msra.mxu0 %v292
  %710 = vmatprep.subr.bf16.mxu0 0
  %711 = vmatpush1.bf16.msra.mxu0 %v293
  %712 = vmatprep.subr.bf16.mxu0 0
  %713 = vmatpush1.bf16.msra.mxu0 %v294
  %714 = vmatprep.subr.bf16.mxu0 0
  %715 = vmatpush1.bf16.msra.mxu0 %v295
  %716 = vmatprep.subr.bf16.mxu0 0
  %717 = vmatpush1.bf16.msra.mxu0 %v296
  %718 = vmatprep.mubr.bf16.mxu0 %v637
  %719 = vmatmul.mubr.bf16.gmra.mrb[0].mxu0 %v636
  %v720 = vpop.f32.mrb[0].mxu0
  %v721 = vadd.f32 %v681, %v720
  %v722 = vpop.f32.mrb[0].mxu0
  %v723 = vpop.f32.mrb[0].mxu0
  %v724 = vpop.f32.mrb[0].mxu0
  %725 = vdwg.mxu0
  %726 = vmatprep.subr.bf16.mxu0 0
  %727 = vmatpush1.bf16.msra.mxu0 %v297
  %728 = vmatprep.subr.bf16.mxu0 0
  %729 = vmatpush1.bf16.msra.mxu0 %v298
  %730 = vmatprep.subr.bf16.mxu0 0
  %731 = vmatpush1.bf16.msra.mxu0 %v299
  %732 = vmatprep.subr.bf16.mxu0 0
  %733 = vmatpush1.bf16.msra.mxu0 %v300
  %734 = vmatprep.subr.bf16.mxu0 0
  %735 = vmatpush1.bf16.msra.mxu0 0
  %736 = vmatprep.subr.bf16.mxu0 0
  %737 = vmatpush1.bf16.msra.mxu0 0
  %738 = vmatprep.subr.bf16.mxu0 0
  %739 = vmatpush1.bf16.msra.mxu0 0
  %740 = vmatprep.subr.bf16.mxu0 0
  %741 = vmatpush1.bf16.msra.mxu0 0
  %742 = vmatprep.subr.bf16.mxu0 0
  %743 = vmatpush1.bf16.msra.mxu0 0
  %744 = vmatprep.subr.bf16.mxu0 0
  %745 = vmatpush1.bf16.msra.mxu0 0
  %746 = vmatprep.subr.bf16.mxu0 0
  %747 = vmatpush1.bf16.msra.mxu0 0
  %748 = vmatprep.subr.bf16.mxu0 0
  %749 = vmatpush1.bf16.msra.mxu0 0
  %750 = vmatprep.subr.bf16.mxu0 0
  %751 = vmatpush1.bf16.msra.mxu0 0
  %752 = vmatprep.subr.bf16.mxu0 0
  %753 = vmatpush1.bf16.msra.mxu0 0
  %754 = vmatprep.subr.bf16.mxu0 0
  %755 = vmatpush1.bf16.msra.mxu0 0
  %756 = vmatprep.subr.bf16.mxu0 0
  %757 = vmatpush1.bf16.msra.mxu0 0
  %758 = vmatprep.mubr.bf16.mxu0 0
  %759 = vmatmul.mubr.bf16.gmra.mrb[0].mxu0 %v644
  %v760 = vpop.f32.mrb[0].mxu0
  %v761 = vadd.f32 %v721, %v760
  %v762 = vpop.f32.mrb[0].mxu0
  %v763 = vpop.f32.mrb[0].mxu0
  %v764 = vpop.f32.mrb[0].mxu0
  %765 = vdwg.mxu0
  %v766 = vmul.f32 %v761, %v465
  %v767 = vadd.f32 %v766, %v472
  %v768 = vmax.f32 %v767, 0.0
  %v769 = vld [vmem:[%s3] sm:$0xff]
  %v770 = vld [vmem:[%s3 + $0x8] sm:$0xff]
  %v771 = vld [vmem:[%s3 + $0x10] sm:$0xf]
  %v775 = vunpack.c.l.b16 %v769
  %v776 = vunpack.c.h.b16 %v769
  %v777 = vunpack.c.l.b16 %v770
  %v778 = vunpack.c.h.b16 %v770
  %v779 = vunpack.c.l.b16 %v771
  %v780 = vpack.c.b16 %v775, %v775
  %v781 = vpack.c.b16 %v776, %v776
  %v782 = vpack.c.b16 %v777, %v777
  %v783 = vpack.c.b16 %v778, %v778
  %v784 = vpack.c.b16 %v779, %v779
  %v790 = vsel %vm337, %v784, 0
  %792 = vmatprep.subr.bf16.mxu0 0
  %793 = vmatpush1.bf16.msra.mxu0 %v265
  %794 = vmatprep.subr.bf16.mxu0 0
  %795 = vmatpush1.bf16.msra.mxu0 %v266
  %796 = vmatprep.subr.bf16.mxu0 0
  %797 = vmatpush1.bf16.msra.mxu0 %v267
  %798 = vmatprep.subr.bf16.mxu0 0
  %799 = vmatpush1.bf16.msra.mxu0 %v268
  %800 = vmatprep.subr.bf16.mxu0 0
  %801 = vmatpush1.bf16.msra.mxu0 %v269
  %802 = vmatprep.subr.bf16.mxu0 0
  %803 = vmatpush1.bf16.msra.mxu0 %v270
  %804 = vmatprep.subr.bf16.mxu0 0
  %805 = vmatpush1.bf16.msra.mxu0 %v271
  %806 = vmatprep.subr.bf16.mxu0 0
  %807 = vmatpush1.bf16.msra.mxu0 %v272
  %808 = vmatprep.subr.bf16.mxu0 0
  %809 = vmatpush1.bf16.msra.mxu0 %v273
  %810 = vmatprep.subr.bf16.mxu0 0
  %811 = vmatpush1.bf16.msra.mxu0 %v274
  %812 = vmatprep.subr.bf16.mxu0 0
  %813 = vmatpush1.bf16.msra.mxu0 %v275
  %814 = vmatprep.subr.bf16.mxu0 0
  %815 = vmatpush1.bf16.msra.mxu0 %v276
  %816 = vmatprep.subr.bf16.mxu0 0
  %817 = vmatpush1.bf16.msra.mxu0 %v277
  %818 = vmatprep.subr.bf16.mxu0 0
  %819 = vmatpush1.bf16.msra.mxu0 %v278
  %820 = vmatprep.subr.bf16.mxu0 0
  %821 = vmatpush1.bf16.msra.mxu0 %v279
  %822 = vmatprep.subr.bf16.mxu0 0
  %823 = vmatpush1.bf16.msra.mxu0 %v280
  %824 = vmatprep.mubr.bf16.mxu0 %v781
  %825 = vmatmul.mubr.bf16.gmra.mrb[0].mxu0 %v780
  %v826 = vpop.f32.mrb[0].mxu0
  %v827 = vadd.f32 0.0, %v826
  %v828 = vpop.f32.mrb[0].mxu0
  %v829 = vpop.f32.mrb[0].mxu0
  %v830 = vpop.f32.mrb[0].mxu0
  %831 = vdwg.mxu0
  %832 = vmatprep.subr.bf16.mxu0 0
  %833 = vmatpush1.bf16.msra.mxu0 %v281
  %834 = vmatprep.subr.bf16.mxu0 0
  %835 = vmatpush1.bf16.msra.mxu0 %v282
  %836 = vmatprep.subr.bf16.mxu0 0
  %837 = vmatpush1.bf16.msra.mxu0 %v283
  %838 = vmatprep.subr.bf16.mxu0 0
  %839 = vmatpush1.bf16.msra.mxu0 %v284
  %840 = vmatprep.subr.bf16.mxu0 0
  %841 = vmatpush1.bf16.msra.mxu0 %v285
  %842 = vmatprep.subr.bf16.mxu0 0
  %843 = vmatpush1.bf16.msra.mxu0 %v286
  %844 = vmatprep.subr.bf16.mxu0 0
  %845 = vmatpush1.bf16.msra.mxu0 %v287
  %846 = vmatprep.subr.bf16.mxu0 0
  %847 = vmatpush1.bf16.msra.mxu0 %v288
  %848 = vmatprep.subr.bf16.mxu0 0
  %849 = vmatpush1.bf16.msra.mxu0 %v289
  %850 = vmatprep.subr.bf16.mxu0 0
  %851 = vmatpush1.bf16.msra.mxu0 %v290
  %852 = vmatprep.subr.bf16.mxu0 0
  %853 = vmatpush1.bf16.msra.mxu0 %v291
  %854 = vmatprep.subr.bf16.mxu0 0
  %855 = vmatpush1.bf16.msra.mxu0 %v292
  %856 = vmatprep.subr.bf16.mxu0 0
  %857 = vmatpush1.bf16.msra.mxu0 %v293
  %858 = vmatprep.subr.bf16.mxu0 0
  %859 = vmatpush1.bf16.msra.mxu0 %v294
  %860 = vmatprep.subr.bf16.mxu0 0
  %861 = vmatpush1.bf16.msra.mxu0 %v295
  %862 = vmatprep.subr.bf16.mxu0 0
  %863 = vmatpush1.bf16.msra.mxu0 %v296
  %864 = vmatprep.mubr.bf16.mxu0 %v783
  %865 = vmatmul.mubr.bf16.gmra.mrb[0].mxu0 %v782
  %v866 = vpop.f32.mrb[0].mxu0
  %v867 = vadd.f32 %v827, %v866
  %v868 = vpop.f32.mrb[0].mxu0
  %v869 = vpop.f32.mrb[0].mxu0
  %v870 = vpop.f32.mrb[0].mxu0
  %871 = vdwg.mxu0
  %872 = vmatprep.subr.bf16.mxu0 0
  %873 = vmatpush1.bf16.msra.mxu0 %v297
  %874 = vmatprep.subr.bf16.mxu0 0
  %875 = vmatpush1.bf16.msra.mxu0 %v298
  %876 = vmatprep.subr.bf16.mxu0 0
  %877 = vmatpush1.bf16.msra.mxu0 %v299
  %878 = vmatprep.subr.bf16.mxu0 0
  %879 = vmatpush1.bf16.msra.mxu0 %v300
  %880 = vmatprep.subr.bf16.mxu0 0
  %881 = vmatpush1.bf16.msra.mxu0 0
  %882 = vmatprep.subr.bf16.mxu0 0
  %883 = vmatpush1.bf16.msra.mxu0 0
  %884 = vmatprep.subr.bf16.mxu0 0
  %885 = vmatpush1.bf16.msra.mxu0 0
  %886 = vmatprep.subr.bf16.mxu0 0
  %887 = vmatpush1.bf16.msra.mxu0 0
  %888 = vmatprep.subr.bf16.mxu0 0
  %889 = vmatpush1.bf16.msra.mxu0 0
  %890 = vmatprep.subr.bf16.mxu0 0
  %891 = vmatpush1.bf16.msra.mxu0 0
  %892 = vmatprep.subr.bf16.mxu0 0
  %893 = vmatpush1.bf16.msra.mxu0 0
  %894 = vmatprep.subr.bf16.mxu0 0
  %895 = vmatpush1.bf16.msra.mxu0 0
  %896 = vmatprep.subr.bf16.mxu0 0
  %897 = vmatpush1.bf16.msra.mxu0 0
  %898 = vmatprep.subr.bf16.mxu0 0
  %899 = vmatpush1.bf16.msra.mxu0 0
  %900 = vmatprep.subr.bf16.mxu0 0
  %901 = vmatpush1.bf16.msra.mxu0 0
  %902 = vmatprep.subr.bf16.mxu0 0
  %903 = vmatpush1.bf16.msra.mxu0 0
  %904 = vmatprep.mubr.bf16.mxu0 0
  %905 = vmatmul.mubr.bf16.gmra.mrb[0].mxu0 %v790
  %v906 = vpop.f32.mrb[0].mxu0
  %v907 = vadd.f32 %v867, %v906
  %v908 = vpop.f32.mrb[0].mxu0
  %v909 = vpop.f32.mrb[0].mxu0
  %v910 = vpop.f32.mrb[0].mxu0
  %911 = vdwg.mxu0
  %v912 = vmul.f32 %v907, %v465
  %v913 = vadd.f32 %v912, %v472
  %v914 = vmax.f32 %v913, 0.0
  %v915 = vmax.f32 %v768, %v914
  %v916 = vmax.f32 %v622, %v915
  %v917 = vpack.c.bf16 %v916, %v916
  %918 = vst [vmem:[%s7] sm:$0xf] %v917
  // Predicated region
  $region30: #{net3layers_forward.6} parent=0 // pred_check
    _
  $region31: #{net3layers_forward.6} parent=0 // pred_check_branch
    %920 = sbr.rel (0) target = $region33
  $region32: #{net3layers_forward.6} parent=0 // pred_region
    _
  $region33: #{net3layers_forward.6} parent=0 // pred_fallthru
    _
  // Predicated region
  $region34: #{net3layers_forward.6} parent=0 // pred_check
    _
  $region35: #{net3layers_forward.6} parent=0 // pred_check_branch
    %922 = sbr.rel (0) target = $region37
  $region36: #{net3layers_forward.6} parent=0 // pred_region
    _
  $region37: #{net3layers_forward.6} parent=0 // pred_fallthru
    _

</llo_original>
